<compile_context>
chip_gen: v6e
topology: v6e:2x2x1
jax: 0.10.0
libtpu: 0.0.40
codegen_flags: <defaults>
</compile_context>

<pallas_src>
import functools

import jax
import jax.numpy as jnp
from jax import lax
from jax.experimental import pallas as pl
from jax.experimental.pallas import tpu as pltpu


def _round_up(x, m):
    return (x + m - 1) // m * m


def _lstm_kernel(num_layers, hidden, c4, seq_len, chunk, unroll,
                 x_ref, *refs):
    """LSTM stack + fc head for one (batch-tile, time-chunk) grid cell.

    refs = [w_ih_0, w_hh_0, b_0, ..., w_ih_{L-1}, w_hh_{L-1}, b_{L-1},
            w_fc, b_fc, out_ref, (seq_scratch if L>1), pre_scratch, h, c]
    """
    H = hidden
    n_param = 3 * num_layers + 2
    param_refs = refs[:n_param]
    out_ref = refs[n_param]
    scratch = refs[n_param + 1:]
    if num_layers > 1:
        seq_ref, pre_ref, h_ref, c_ref = scratch
    else:
        pre_ref, h_ref, c_ref = scratch
        seq_ref = None

    Tc, Bt = x_ref.shape[0], x_ref.shape[1]
    t_chunk = pl.program_id(1)
    needs_mask = (seq_len % chunk) != 0          # static Python bool

    # h0 = c0 = zeros at the start of each batch tile's time sequence,
    # matching torch.zeros(...) in forward().
    @pl.when(t_chunk == 0)
    def _():
        h_ref[...] = jnp.zeros_like(h_ref)
        c_ref[...] = jnp.zeros_like(c_ref)

    for layer in range(num_layers):              # static, unrolled over layers
        w_ih_ref = param_refs[3 * layer]          # (I or H, c4)  bf16
        w_hh_ref = param_refs[3 * layer + 1]      # (H, c4)       bf16
        b_ref = param_refs[3 * layer + 2]         # (1, c4)       f32 (b_ih+b_hh)

        # ---- Bulk input projection: one MXU matmul for all Tc steps ----
        if layer == 0:
            inp = x_ref[...].astype(jnp.bfloat16).reshape(Tc * Bt,
                                                          x_ref.shape[2])
        else:
            inp = seq_ref[...].reshape(Tc * Bt, H)   # previous layer's h_t (bf16)
        pre = jnp.dot(inp, w_ih_ref[...],
                      preferred_element_type=jnp.float32) + b_ref[...]
        pre_ref[...] = pre.reshape(Tc, Bt, c4).astype(jnp.bfloat16)

        # Only layers feeding another layer need to keep their h sequence.
        write_seq = layer + 1 < num_layers
        w_hh = w_hh_ref[...]                      # hoisted loop-invariant load

        def step(t, carry, layer=layer, w_hh=w_hh, write_seq=write_seq):
            h_prev = h_ref[layer]                               # (Bt, H) f32
            gates = pre_ref[t].astype(jnp.float32) + jnp.dot(
                h_prev.astype(jnp.bfloat16), w_hh,
                preferred_element_type=jnp.float32)             # (Bt, c4) f32

            # Packed gates: gate k at columns [k*H, (k+1)*H].
            i_g = jax.nn.sigmoid(gates[:, 0 * H:1 * H])
            f_g = jax.nn.sigmoid(gates[:, 1 * H:2 * H])
            g_g = jnp.tanh(gates[:, 2 * H:3 * H])
            o_g = jax.nn.sigmoid(gates[:, 3 * H:4 * H])

            c_new = f_g * c_ref[layer] + i_g * g_g
            h_new = o_g * jnp.tanh(c_new)

            def commit():
                c_ref[layer] = c_new
                h_ref[layer] = h_new
                if write_seq:
                    # seq_ref was fully consumed by the bulk projection above,
                    # so overwriting in place is safe.
                    seq_ref[t] = h_new.astype(jnp.bfloat16)

            if needs_mask:
                # Padded tail of the last time chunk must not advance state.
                pl.when(t_chunk * chunk + t < seq_len)(commit)
            else:
                commit()
            return carry

        lax.fori_loop(0, Tc, step, 0, unroll=unroll)

    # out[:, -1, :] of the top layer == final h of the last layer -> fc head.
    @pl.when(t_chunk == pl.num_programs(1) - 1)
    def _():
        w_fc = param_refs[3 * num_layers][...]          # (H, Op) bf16
        b_fc = param_refs[3 * num_layers + 1][...]      # (1, Op) f32
        out_ref[...] = (jnp.dot(h_ref[num_layers - 1].astype(jnp.bfloat16),
                                w_fc, preferred_element_type=jnp.float32)
                        + b_fc)


def lstm_forecaster_forward(x, params, *, hidden_size, num_layers,
                            time_chunk=None, unroll=8):
    """x: (B, T, input_size) float32 (PyTorch batch_first layout)."""
    B, T, input_size = x.shape
    H = hidden_size
    w_fc, b_fc = params["fc"]
    O = w_fc.shape[0]

    C4 = _round_up(4 * H, 128)        # packed gates, lane-padded total width
    Ip = _round_up(input_size, 128)   # lane-aligned input features
    Op = _round_up(O, 128)            # lane-dense output store

    # ---- Chip-aware batch tiling -------------------------------------------
    try:
        kind = jax.devices()[0].device_kind.lower()
    except Exception:                                   # pragma: no cover
        kind = ""
    two_tc = "v7" in kind                               # 2 TensorCores / chip
    small_mxu = any(v in kind for v in ("v2", "v3", "v4", "v5"))
    max_bt = 128 if small_mxu else 256                  # 256-wide MXU on v6e/v7x
    min_tiles = 2 if (two_tc and B >= 16) else 1        # keep both v7x TCs busy
    n_btiles = max(pl.cdiv(B, max_bt), min_tiles)
    Bt = _round_up(pl.cdiv(B, n_btiles), 8)             # sublane-aligned tile
    n_btiles = pl.cdiv(B, Bt)                           # minimize last-tile pad
    Bp = n_btiles * Bt

    # ---- Time chunking so VMEM stays bounded (v7x: 64 MiB physical) --------
    if time_chunk is None:
        per_step = Bt * (C4 * 2 + H * 2 + 2 * Ip * 4)   # pre + seq + 2x x-buf
        budget = 24 * 1024 * 1024
        time_chunk = max(1, budget // max(per_step, 1))
    Tc = max(1, min(time_chunk, T))
    n_tchunks = pl.cdiv(T, Tc)
    Tp = n_tchunks * Tc

    # Time-major, zero-padded x (kept f32 in HBM; cast to bf16 in-kernel).
    x_tm = jnp.transpose(x, (1, 0, 2)).astype(jnp.float32)          # (T, B, I)
    x_tm = jnp.pad(x_tm, ((0, Tp - T), (0, Bp - B), (0, Ip - input_size)))

    def pack_w(w_t, rows_pad):
        """(rows, 4H) -> (rows_pad, C4) bf16, gates packed contiguously."""
        rows, cols = w_t.shape
        return jnp.pad(w_t.astype(jnp.float32),
                       ((0, rows_pad - rows), (0, C4 - cols))
                       ).astype(jnp.bfloat16)

    def pack_b(b):
        return jnp.pad(b.astype(jnp.float32), (0, C4 - 4 * H)).reshape(1, C4)

    flat_inputs = [x_tm]
    in_specs = [pl.BlockSpec((Tc, Bt, Ip), lambda b, t: (t, b, 0))]
    for l in range(num_layers):
        w_ih, w_hh, b_ih, b_hh = params[f"layer{l}"]
        rows_pad = Ip if l == 0 else H
        flat_inputs += [
            pack_w(jnp.asarray(w_ih).T, rows_pad),
            pack_w(jnp.asarray(w_hh).T, H),
            pack_b(jnp.asarray(b_ih) + jnp.asarray(b_hh)),
        ]
        # TODO(synk): single-buffer these constant-index weight blocks
        # (pl.Buffered(1)) once verified on the target jax version; left
        # double-buffered here for compile safety.
        in_specs += [
            pl.BlockSpec((rows_pad, C4), lambda b, t: (0, 0)),
            pl.BlockSpec((H, C4), lambda b, t: (0, 0)),
            pl.BlockSpec((1, C4), lambda b, t: (0, 0)),
        ]

    w_fc_p = jnp.pad(jnp.asarray(w_fc, jnp.float32).T,
                     ((0, 0), (0, Op - O))).astype(jnp.bfloat16)     # (H, Op)
    b_fc_p = jnp.pad(jnp.asarray(b_fc, jnp.float32), (0, Op - O)).reshape(1, Op)
    flat_inputs += [w_fc_p, b_fc_p]
    in_specs += [pl.BlockSpec((H, Op), lambda b, t: (0, 0)),
                 pl.BlockSpec((1, Op), lambda b, t: (0, 0))]

    scratch_shapes = []
    if num_layers > 1:
        scratch_shapes.append(pltpu.VMEM((Tc, Bt, H), jnp.bfloat16))  # h seq
    scratch_shapes += [
        pltpu.VMEM((Tc, Bt, C4), jnp.bfloat16),            # gate pre-activations
        pltpu.VMEM((num_layers, Bt, H), jnp.float32),      # per-layer h state
        pltpu.VMEM((num_layers, Bt, H), jnp.float32),      # per-layer c state
    ]

    # ---- VMEM limit computed from the actual footprint ---------------------
    def nbytes(a):
        return int(a.size) * a.dtype.itemsize
    in_bytes = 2 * (Tc * Bt * Ip * 4)                       # double-buffered x
    in_bytes += 2 * sum(nbytes(a) for a in flat_inputs[1:])  # weights/biases
    out_bytes = 2 * Bt * Op * 4
    scr_bytes = (Tc * Bt * C4 * 2
                 + (Tc * Bt * H * 2 if num_layers > 1 else 0)
                 + 2 * num_layers * Bt * H * 4)
    cap = (56 if two_tc else 100) * 1024 * 1024
    vmem_limit = int(min(cap, max(32 * 1024 * 1024,
                                  1.5 * (in_bytes + out_bytes + scr_bytes)
                                  + 4 * 1024 * 1024)))

    kernel = functools.partial(_lstm_kernel, num_layers, H, C4, T, Tc,
                               max(1, min(unroll, Tc)))
    out_padded = pl.pallas_call(
        kernel,
        out_shape=jax.ShapeDtypeStruct((Bp, Op), jnp.float32),
        grid=(n_btiles, n_tchunks),
        in_specs=in_specs,
        out_specs=pl.BlockSpec((Bt, Op), lambda b, t: (b, 0)),
        scratch_shapes=scratch_shapes,
        compiler_params=pltpu.CompilerParams(
            dimension_semantics=("parallel", "arbitrary"),
            vmem_limit_bytes=vmem_limit),
    )(*flat_inputs)
    return out_padded[:B, :O]


def init_params(key, input_size, hidden_size, num_layers, output_size):
    """PyTorch-style U(-1/sqrt(H), 1/sqrt(H)) init, deterministic."""
    params = {}
    bound = 1.0 / (hidden_size ** 0.5)
    for l in range(num_layers):
        in_sz = input_size if l == 0 else hidden_size
        key, k1, k2, k3, k4 = jax.random.split(key, 5)
        params[f"layer{l}"] = (
            jax.random.uniform(k1, (4 * hidden_size, in_sz), jnp.float32,
                               -bound, bound),      # w_ih (PyTorch shape)
            jax.random.uniform(k2, (4 * hidden_size, hidden_size), jnp.float32,
                               -bound, bound),      # w_hh
            jax.random.uniform(k3, (4 * hidden_size,), jnp.float32,
                               -bound, bound),      # b_ih
            jax.random.uniform(k4, (4 * hidden_size,), jnp.float32,
                               -bound, bound),      # b_hh
        )
    key, k1, k2 = jax.random.split(key, 3)
    params["fc"] = (
        jax.random.uniform(k1, (output_size, hidden_size), jnp.float32,
                           -bound, bound),
        jax.random.uniform(k2, (output_size,), jnp.float32, -bound, bound),
    )
    return params


def reference_forward(x, params, *, hidden_size, num_layers):
    """Pure-JAX reference replicating nn.LSTM (batch_first) + Linear."""
    B, T, _ = x.shape
    H = hidden_size
    layer_in = x.astype(jnp.float32)
    h = None
    for l in range(num_layers):
        w_ih, w_hh, b_ih, b_hh = params[f"layer{l}"]
        h = jnp.zeros((B, H), jnp.float32)
        c = jnp.zeros((B, H), jnp.float32)
        outs = []
        for t in range(T):
            gates = (jnp.dot(layer_in[:, t, :], w_ih.T,
                             precision=lax.Precision.HIGHEST)
                     + jnp.dot(h, w_hh.T, precision=lax.Precision.HIGHEST)
                     + b_ih + b_hh)
            i = jax.nn.sigmoid(gates[:, 0 * H:1 * H])
            f = jax.nn.sigmoid(gates[:, 1 * H:2 * H])
            g = jnp.tanh(gates[:, 2 * H:3 * H])
            o = jax.nn.sigmoid(gates[:, 3 * H:4 * H])
            c = f * c + i * g
            h = o * jnp.tanh(c)
            outs.append(h)
        layer_in = jnp.stack(outs, axis=1)
    w_fc, b_fc = params["fc"]
    return jnp.dot(h, w_fc.T, precision=lax.Precision.HIGHEST) + b_fc


if __name__ == "__main__":
    B, T = 2, 8
    input_size, hidden_size, num_layers, output_size = 8, 32, 2, 1

    key = jax.random.PRNGKey(0)
    key, xk, pk = jax.random.split(key, 3)
    x = jax.random.normal(xk, (B, T, input_size), jnp.float32)
    params = init_params(pk, input_size, hidden_size, num_layers, output_size)

    out = lstm_forecaster_forward(
        x, params, hidden_size=hidden_size, num_layers=num_layers)
    out = jax.block_until_ready(out)

    ref = reference_forward(
        x, params, hidden_size=hidden_size, num_layers=num_layers)
    assert out.shape == (B, output_size)
    # bf16 single-pass MXU path vs f32 HIGHEST reference -> ~1e-3 agreement.
    assert jnp.allclose(out, ref, atol=1e-2, rtol=1e-2), (out, ref)
    print("KERNEL_OK")
</pallas_src>

<mosaic_0001>
module attributes {stable_mosaic.version = 11 : i64} {
  func.func @_lstm_kernel(%arg0: i32, %arg1: i32, %arg2: memref<8x8x128xf32, #tpu.memory_space<vmem>>, %arg3: memref<128x128xbf16, #tpu.memory_space<vmem>>, %arg4: memref<32x128xbf16, #tpu.memory_space<vmem>>, %arg5: memref<1x128xf32, #tpu.memory_space<vmem>>, %arg6: memref<32x128xbf16, #tpu.memory_space<vmem>>, %arg7: memref<32x128xbf16, #tpu.memory_space<vmem>>, %arg8: memref<1x128xf32, #tpu.memory_space<vmem>>, %arg9: memref<32x128xbf16, #tpu.memory_space<vmem>>, %arg10: memref<1x128xf32, #tpu.memory_space<vmem>>, %arg11: memref<8x128xf32, #tpu.memory_space<vmem>>, %arg12: memref<8x8x32xbf16, #tpu.memory_space<vmem>>, %arg13: memref<8x8x128xbf16, #tpu.memory_space<vmem>>, %arg14: memref<2x8x32xf32, #tpu.memory_space<vmem>>, %arg15: memref<2x8x32xf32, #tpu.memory_space<vmem>>) attributes {dimension_semantics = [#tpu.dimension_semantics<parallel>, #tpu.dimension_semantics<arbitrary>], iteration_bounds = array<i64: 1, 1>, scalar_prefetch = 0 : i64, scratch_operands = 4 : i64, tpu.core_type = #tpu.core_type<tc>, window_params = [{transform_indices = @transform_0, window_bounds = array<i64: 8, 8, 128>}, {pipeline_mode = #tpu.pipeline_mode<synchronous>, transform_indices = @transform_1, window_bounds = array<i64: 128, 128>}, {pipeline_mode = #tpu.pipeline_mode<synchronous>, transform_indices = @transform_2, window_bounds = array<i64: 32, 128>}, {pipeline_mode = #tpu.pipeline_mode<synchronous>, transform_indices = @transform_3, window_bounds = array<i64: 1, 128>}, {pipeline_mode = #tpu.pipeline_mode<synchronous>, transform_indices = @transform_4, window_bounds = array<i64: 32, 128>}, {pipeline_mode = #tpu.pipeline_mode<synchronous>, transform_indices = @transform_5, window_bounds = array<i64: 32, 128>}, {pipeline_mode = #tpu.pipeline_mode<synchronous>, transform_indices = @transform_6, window_bounds = array<i64: 1, 128>}, {pipeline_mode = #tpu.pipeline_mode<synchronous>, transform_indices = @transform_7, window_bounds = array<i64: 32, 128>}, {pipeline_mode = #tpu.pipeline_mode<synchronous>, transform_indices = @transform_8, window_bounds = array<i64: 1, 128>}, {transform_indices = @transform_9, window_bounds = array<i64: 8, 128>}]} {
    %c0_i32 = arith.constant 0 : i32
    %0 = arith.cmpi eq, %arg1, %c0_i32 : i32
    %1 = arith.extui %0 : i1 to i32
    %c0_i32_0 = arith.constant 0 : i32
    %2 = arith.cmpi ne, %1, %c0_i32_0 : i32
    scf.if %2 {
      %cst_340 = arith.constant 0.000000e+00 : f32
      %741 = vector.broadcast %cst_340 : f32 to vector<2x8x32xf32>
      %c0_341 = arith.constant 0 : index
      %c0_342 = arith.constant 0 : index
      %c0_343 = arith.constant 0 : index
      %742 = vector.load %arg14[%c0_341, %c0_342, %c0_343] : memref<2x8x32xf32, #tpu.memory_space<vmem>>, vector<2x8x32xf32>
      tpu.vector_store %arg14[%c0_341, %c0_342, %c0_343], %741 {strides = array<i32>} : memref<2x8x32xf32, #tpu.memory_space<vmem>>, vector<2x8x32xf32>,
      %cst_344 = arith.constant 0.000000e+00 : f32
      %743 = vector.broadcast %cst_344 : f32 to vector<2x8x32xf32>
      %c0_345 = arith.constant 0 : index
      %c0_346 = arith.constant 0 : index
      %c0_347 = arith.constant 0 : index
      %744 = vector.load %arg15[%c0_345, %c0_346, %c0_347] : memref<2x8x32xf32, #tpu.memory_space<vmem>>, vector<2x8x32xf32>
      tpu.vector_store %arg15[%c0_345, %c0_346, %c0_347], %743 {strides = array<i32>} : memref<2x8x32xf32, #tpu.memory_space<vmem>>, vector<2x8x32xf32>,
    } else {
    }
    %c0 = arith.constant 0 : index
    %c0_1 = arith.constant 0 : index
    %c0_2 = arith.constant 0 : index
    %3 = vector.load %arg2[%c0, %c0_1, %c0_2] : memref<8x8x128xf32, #tpu.memory_space<vmem>>, vector<8x8x128xf32>
    %4 = arith.truncf %3 : vector<8x8x128xf32> to vector<8x8x128xbf16>
    %5 = vector.shape_cast %4 : vector<8x8x128xbf16> to vector<64x128xbf16>
    %c0_3 = arith.constant 0 : index
    %c0_4 = arith.constant 0 : index
    %6 = vector.load %arg3[%c0_3, %c0_4] : memref<128x128xbf16, #tpu.memory_space<vmem>>, vector<128x128xbf16>
    %cst = arith.constant dense<0.000000e+00> : vector<64x128xf32>
    %7 = tpu.matmul %5, %6, %cst {dimension_numbers = #tpu.dot_dimension_numbers<[1], [0], [0], [1], [0, 0, 1, 1], [], []>} : vector<64x128xbf16>, vector<128x128xbf16>, vector<64x128xf32> -> vector<64x128xf32>
    %c0_5 = arith.constant 0 : index
    %c0_6 = arith.constant 0 : index
    %8 = vector.load %arg5[%c0_5, %c0_6] : memref<1x128xf32, #tpu.memory_space<vmem>>, vector<1x128xf32>
    %9 = vector.broadcast %8 : vector<1x128xf32> to vector<64x128xf32>
    %10 = arith.addf %7, %9 : vector<64x128xf32>
    %11 = vector.shape_cast %10 : vector<64x128xf32> to vector<8x8x128xf32>
    %12 = arith.truncf %11 : vector<8x8x128xf32> to vector<8x8x128xbf16>
    %c0_7 = arith.constant 0 : index
    %c0_8 = arith.constant 0 : index
    %c0_9 = arith.constant 0 : index
    %13 = vector.load %arg13[%c0_7, %c0_8, %c0_9] : memref<8x8x128xbf16, #tpu.memory_space<vmem>>, vector<8x8x128xbf16>
    tpu.vector_store %arg13[%c0_7, %c0_8, %c0_9], %12 {strides = array<i32>} : memref<8x8x128xbf16, #tpu.memory_space<vmem>>, vector<8x8x128xbf16>,
    %c0_10 = arith.constant 0 : index
    %c0_11 = arith.constant 0 : index
    %14 = vector.load %arg4[%c0_10, %c0_11] : memref<32x128xbf16, #tpu.memory_space<vmem>>, vector<32x128xbf16>
    %c0_i32_12 = arith.constant 0 : i32
    %c0_13 = arith.constant 0 : index
    %c0_14 = arith.constant 0 : index
    %c0_15 = arith.constant 0 : index
    %15 = vector.load %arg14[%c0_13, %c0_14, %c0_15] : memref<2x8x32xf32, #tpu.memory_space<vmem>>, vector<1x8x32xf32>
    %16 = vector.shape_cast %15 : vector<1x8x32xf32> to vector<8x32xf32>
    %17 = arith.index_cast %c0_i32_12 : i32 to index
    %c0_16 = arith.constant 0 : index
    %c0_17 = arith.constant 0 : index
    %18 = vector.load %arg13[%17, %c0_16, %c0_17] : memref<8x8x128xbf16, #tpu.memory_space<vmem>>, vector<1x8x128xbf16>
    %19 = vector.shape_cast %18 : vector<1x8x128xbf16> to vector<8x128xbf16>
    %20 = arith.extf %19 : vector<8x128xbf16> to vector<8x128xf32>
    %21 = arith.truncf %16 : vector<8x32xf32> to vector<8x32xbf16>
    %cst_18 = arith.constant dense<0.000000e+00> : vector<8x128xf32>
    %22 = tpu.matmul %21, %14, %cst_18 {dimension_numbers = #tpu.dot_dimension_numbers<[1], [0], [0], [1], [0, 0, 1, 1], [], []>} : vector<8x32xbf16>, vector<32x128xbf16>, vector<8x128xf32> -> vector<8x128xf32>
    %23 = arith.addf %20, %22 : vector<8x128xf32>
    %24 = vector.extract_strided_slice %23 {offsets = [0, 0], sizes = [8, 32], strides = [1, 1]} : vector<8x128xf32> to vector<8x32xf32>
    %25 = arith.negf %24 : vector<8x32xf32>
    %26 = math.exp %25 : vector<8x32xf32>
    %cst_19 = arith.constant 1.000000e+00 : f32
    %27 = vector.broadcast %cst_19 : f32 to vector<8x32xf32>
    %28 = arith.addf %27, %26 : vector<8x32xf32>
    %29 = arith.divf %27, %28 : vector<8x32xf32>
    %30 = vector.extract_strided_slice %23 {offsets = [0, 32], sizes = [8, 32], strides = [1, 1]} : vector<8x128xf32> to vector<8x32xf32>
    %31 = arith.negf %30 : vector<8x32xf32>
    %32 = math.exp %31 : vector<8x32xf32>
    %cst_20 = arith.constant 1.000000e+00 : f32
    %33 = vector.broadcast %cst_20 : f32 to vector<8x32xf32>
    %34 = arith.addf %33, %32 : vector<8x32xf32>
    %35 = arith.divf %33, %34 : vector<8x32xf32>
    %36 = vector.extract_strided_slice %23 {offsets = [0, 64], sizes = [8, 32], strides = [1, 1]} : vector<8x128xf32> to vector<8x32xf32>
    %37 = math.tanh %36 : vector<8x32xf32>
    %38 = vector.extract_strided_slice %23 {offsets = [0, 96], sizes = [8, 32], strides = [1, 1]} : vector<8x128xf32> to vector<8x32xf32>
    %39 = arith.negf %38 : vector<8x32xf32>
    %40 = math.exp %39 : vector<8x32xf32>
    %cst_21 = arith.constant 1.000000e+00 : f32
    %41 = vector.broadcast %cst_21 : f32 to vector<8x32xf32>
    %42 = arith.addf %41, %40 : vector<8x32xf32>
    %43 = arith.divf %41, %42 : vector<8x32xf32>
    %c0_22 = arith.constant 0 : index
    %c0_23 = arith.constant 0 : index
    %c0_24 = arith.constant 0 : index
    %44 = vector.load %arg15[%c0_22, %c0_23, %c0_24] : memref<2x8x32xf32, #tpu.memory_space<vmem>>, vector<1x8x32xf32>
    %45 = vector.shape_cast %44 : vector<1x8x32xf32> to vector<8x32xf32>
    %46 = arith.mulf %35, %45 : vector<8x32xf32>
    %47 = arith.mulf %29, %37 : vector<8x32xf32>
    %48 = arith.addf %46, %47 : vector<8x32xf32>
    %49 = math.tanh %48 : vector<8x32xf32>
    %50 = arith.mulf %43, %49 : vector<8x32xf32>
    %c0_25 = arith.constant 0 : index
    %c0_26 = arith.constant 0 : index
    %c0_27 = arith.constant 0 : index
    %51 = vector.load %arg15[%c0_25, %c0_26, %c0_27] : memref<2x8x32xf32, #tpu.memory_space<vmem>>, vector<1x8x32xf32>
    %52 = vector.shape_cast %51 : vector<1x8x32xf32> to vector<8x32xf32>
    %53 = vector.shape_cast %48 : vector<8x32xf32> to vector<1x8x32xf32>
    tpu.vector_store %arg15[%c0_25, %c0_26, %c0_27], %53 {strides = array<i32>} : memref<2x8x32xf32, #tpu.memory_space<vmem>>, vector<1x8x32xf32>,
    %c0_28 = arith.constant 0 : index
    %c0_29 = arith.constant 0 : index
    %c0_30 = arith.constant 0 : index
    %54 = vector.load %arg14[%c0_28, %c0_29, %c0_30] : memref<2x8x32xf32, #tpu.memory_space<vmem>>, vector<1x8x32xf32>
    %55 = vector.shape_cast %54 : vector<1x8x32xf32> to vector<8x32xf32>
    %56 = vector.shape_cast %50 : vector<8x32xf32> to vector<1x8x32xf32>
    tpu.vector_store %arg14[%c0_28, %c0_29, %c0_30], %56 {strides = array<i32>} : memref<2x8x32xf32, #tpu.memory_space<vmem>>, vector<1x8x32xf32>,
    %57 = arith.truncf %50 : vector<8x32xf32> to vector<8x32xbf16>
    %58 = arith.index_cast %c0_i32_12 : i32 to index
    %c0_31 = arith.constant 0 : index
    %c0_32 = arith.constant 0 : index
    %59 = vector.load %arg12[%58, %c0_31, %c0_32] : memref<8x8x32xbf16, #tpu.memory_space<vmem>>, vector<1x8x32xbf16>
    %60 = vector.shape_cast %59 : vector<1x8x32xbf16> to vector<8x32xbf16>
    %61 = vector.shape_cast %57 : vector<8x32xbf16> to vector<1x8x32xbf16>
    tpu.vector_store %arg12[%58, %c0_31, %c0_32], %61 {strides = array<i32>} : memref<8x8x32xbf16, #tpu.memory_space<vmem>>, vector<1x8x32xbf16>,
    %c1_i32 = arith.constant 1 : i32
    %c0_33 = arith.constant 0 : index
    %c0_34 = arith.constant 0 : index
    %c0_35 = arith.constant 0 : index
    %62 = vector.load %arg14[%c0_33, %c0_34, %c0_35] : memref<2x8x32xf32, #tpu.memory_space<vmem>>, vector<1x8x32xf32>
    %63 = vector.shape_cast %62 : vector<1x8x32xf32> to vector<8x32xf32>
    %64 = arith.index_cast %c1_i32 : i32 to index
    %c0_36 = arith.constant 0 : index
    %c0_37 = arith.constant 0 : index
    %65 = vector.load %arg13[%64, %c0_36, %c0_37] : memref<8x8x128xbf16, #tpu.memory_space<vmem>>, vector<1x8x128xbf16>
    %66 = vector.shape_cast %65 : vector<1x8x128xbf16> to vector<8x128xbf16>
    %67 = arith.extf %66 : vector<8x128xbf16> to vector<8x128xf32>
    %68 = arith.truncf %63 : vector<8x32xf32> to vector<8x32xbf16>
    %cst_38 = arith.constant dense<0.000000e+00> : vector<8x128xf32>
    %69 = tpu.matmul %68, %14, %cst_38 {dimension_numbers = #tpu.dot_dimension_numbers<[1], [0], [0], [1], [0, 0, 1, 1], [], []>} : vector<8x32xbf16>, vector<32x128xbf16>, vector<8x128xf32> -> vector<8x128xf32>
    %70 = arith.addf %67, %69 : vector<8x128xf32>
    %71 = vector.extract_strided_slice %70 {offsets = [0, 0], sizes = [8, 32], strides = [1, 1]} : vector<8x128xf32> to vector<8x32xf32>
    %72 = arith.negf %71 : vector<8x32xf32>
    %73 = math.exp %72 : vector<8x32xf32>
    %cst_39 = arith.constant 1.000000e+00 : f32
    %74 = vector.broadcast %cst_39 : f32 to vector<8x32xf32>
    %75 = arith.addf %74, %73 : vector<8x32xf32>
    %76 = arith.divf %74, %75 : vector<8x32xf32>
    %77 = vector.extract_strided_slice %70 {offsets = [0, 32], sizes = [8, 32], strides = [1, 1]} : vector<8x128xf32> to vector<8x32xf32>
    %78 = arith.negf %77 : vector<8x32xf32>
    %79 = math.exp %78 : vector<8x32xf32>
    %cst_40 = arith.constant 1.000000e+00 : f32
    %80 = vector.broadcast %cst_40 : f32 to vector<8x32xf32>
    %81 = arith.addf %80, %79 : vector<8x32xf32>
    %82 = arith.divf %80, %81 : vector<8x32xf32>
    %83 = vector.extract_strided_slice %70 {offsets = [0, 64], sizes = [8, 32], strides = [1, 1]} : vector<8x128xf32> to vector<8x32xf32>
    %84 = math.tanh %83 : vector<8x32xf32>
    %85 = vector.extract_strided_slice %70 {offsets = [0, 96], sizes = [8, 32], strides = [1, 1]} : vector<8x128xf32> to vector<8x32xf32>
    %86 = arith.negf %85 : vector<8x32xf32>
    %87 = math.exp %86 : vector<8x32xf32>
    %cst_41 = arith.constant 1.000000e+00 : f32
    %88 = vector.broadcast %cst_41 : f32 to vector<8x32xf32>
    %89 = arith.addf %88, %87 : vector<8x32xf32>
    %90 = arith.divf %88, %89 : vector<8x32xf32>
    %c0_42 = arith.constant 0 : index
    %c0_43 = arith.constant 0 : index
    %c0_44 = arith.constant 0 : index
    %91 = vector.load %arg15[%c0_42, %c0_43, %c0_44] : memref<2x8x32xf32, #tpu.memory_space<vmem>>, vector<1x8x32xf32>
    %92 = vector.shape_cast %91 : vector<1x8x32xf32> to vector<8x32xf32>
    %93 = arith.mulf %82, %92 : vector<8x32xf32>
    %94 = arith.mulf %76, %84 : vector<8x32xf32>
    %95 = arith.addf %93, %94 : vector<8x32xf32>
    %96 = math.tanh %95 : vector<8x32xf32>
    %97 = arith.mulf %90, %96 : vector<8x32xf32>
    %c0_45 = arith.constant 0 : index
    %c0_46 = arith.constant 0 : index
    %c0_47 = arith.constant 0 : index
    %98 = vector.load %arg15[%c0_45, %c0_46, %c0_47] : memref<2x8x32xf32, #tpu.memory_space<vmem>>, vector<1x8x32xf32>
    %99 = vector.shape_cast %98 : vector<1x8x32xf32> to vector<8x32xf32>
    %100 = vector.shape_cast %95 : vector<8x32xf32> to vector<1x8x32xf32>
    tpu.vector_store %arg15[%c0_45, %c0_46, %c0_47], %100 {strides = array<i32>} : memref<2x8x32xf32, #tpu.memory_space<vmem>>, vector<1x8x32xf32>,
    %c0_48 = arith.constant 0 : index
    %c0_49 = arith.constant 0 : index
    %c0_50 = arith.constant 0 : index
    %101 = vector.load %arg14[%c0_48, %c0_49, %c0_50] : memref<2x8x32xf32, #tpu.memory_space<vmem>>, vector<1x8x32xf32>
    %102 = vector.shape_cast %101 : vector<1x8x32xf32> to vector<8x32xf32>
    %103 = vector.shape_cast %97 : vector<8x32xf32> to vector<1x8x32xf32>
    tpu.vector_store %arg14[%c0_48, %c0_49, %c0_50], %103 {strides = array<i32>} : memref<2x8x32xf32, #tpu.memory_space<vmem>>, vector<1x8x32xf32>,
    %104 = arith.truncf %97 : vector<8x32xf32> to vector<8x32xbf16>
    %105 = arith.index_cast %c1_i32 : i32 to index
    %c0_51 = arith.constant 0 : index
    %c0_52 = arith.constant 0 : index
    %106 = vector.load %arg12[%105, %c0_51, %c0_52] : memref<8x8x32xbf16, #tpu.memory_space<vmem>>, vector<1x8x32xbf16>
    %107 = vector.shape_cast %106 : vector<1x8x32xbf16> to vector<8x32xbf16>
    %108 = vector.shape_cast %104 : vector<8x32xbf16> to vector<1x8x32xbf16>
    tpu.vector_store %arg12[%105, %c0_51, %c0_52], %108 {strides = array<i32>} : memref<8x8x32xbf16, #tpu.memory_space<vmem>>, vector<1x8x32xbf16>,
    %c2_i32 = arith.constant 2 : i32
    %c0_53 = arith.constant 0 : index
    %c0_54 = arith.constant 0 : index
    %c0_55 = arith.constant 0 : index
    %109 = vector.load %arg14[%c0_53, %c0_54, %c0_55] : memref<2x8x32xf32, #tpu.memory_space<vmem>>, vector<1x8x32xf32>
    %110 = vector.shape_cast %109 : vector<1x8x32xf32> to vector<8x32xf32>
    %111 = arith.index_cast %c2_i32 : i32 to index
    %c0_56 = arith.constant 0 : index
    %c0_57 = arith.constant 0 : index
    %112 = vector.load %arg13[%111, %c0_56, %c0_57] : memref<8x8x128xbf16, #tpu.memory_space<vmem>>, vector<1x8x128xbf16>
    %113 = vector.shape_cast %112 : vector<1x8x128xbf16> to vector<8x128xbf16>
    %114 = arith.extf %113 : vector<8x128xbf16> to vector<8x128xf32>
    %115 = arith.truncf %110 : vector<8x32xf32> to vector<8x32xbf16>
    %cst_58 = arith.constant dense<0.000000e+00> : vector<8x128xf32>
    %116 = tpu.matmul %115, %14, %cst_58 {dimension_numbers = #tpu.dot_dimension_numbers<[1], [0], [0], [1], [0, 0, 1, 1], [], []>} : vector<8x32xbf16>, vector<32x128xbf16>, vector<8x128xf32> -> vector<8x128xf32>
    %117 = arith.addf %114, %116 : vector<8x128xf32>
    %118 = vector.extract_strided_slice %117 {offsets = [0, 0], sizes = [8, 32], strides = [1, 1]} : vector<8x128xf32> to vector<8x32xf32>
    %119 = arith.negf %118 : vector<8x32xf32>
    %120 = math.exp %119 : vector<8x32xf32>
    %cst_59 = arith.constant 1.000000e+00 : f32
    %121 = vector.broadcast %cst_59 : f32 to vector<8x32xf32>
    %122 = arith.addf %121, %120 : vector<8x32xf32>
    %123 = arith.divf %121, %122 : vector<8x32xf32>
    %124 = vector.extract_strided_slice %117 {offsets = [0, 32], sizes = [8, 32], strides = [1, 1]} : vector<8x128xf32> to vector<8x32xf32>
    %125 = arith.negf %124 : vector<8x32xf32>
    %126 = math.exp %125 : vector<8x32xf32>
    %cst_60 = arith.constant 1.000000e+00 : f32
    %127 = vector.broadcast %cst_60 : f32 to vector<8x32xf32>
    %128 = arith.addf %127, %126 : vector<8x32xf32>
    %129 = arith.divf %127, %128 : vector<8x32xf32>
    %130 = vector.extract_strided_slice %117 {offsets = [0, 64], sizes = [8, 32], strides = [1, 1]} : vector<8x128xf32> to vector<8x32xf32>
    %131 = math.tanh %130 : vector<8x32xf32>
    %132 = vector.extract_strided_slice %117 {offsets = [0, 96], sizes = [8, 32], strides = [1, 1]} : vector<8x128xf32> to vector<8x32xf32>
    %133 = arith.negf %132 : vector<8x32xf32>
    %134 = math.exp %133 : vector<8x32xf32>
    %cst_61 = arith.constant 1.000000e+00 : f32
    %135 = vector.broadcast %cst_61 : f32 to vector<8x32xf32>
    %136 = arith.addf %135, %134 : vector<8x32xf32>
    %137 = arith.divf %135, %136 : vector<8x32xf32>
    %c0_62 = arith.constant 0 : index
    %c0_63 = arith.constant 0 : index
    %c0_64 = arith.constant 0 : index
    %138 = vector.load %arg15[%c0_62, %c0_63, %c0_64] : memref<2x8x32xf32, #tpu.memory_space<vmem>>, vector<1x8x32xf32>
    %139 = vector.shape_cast %138 : vector<1x8x32xf32> to vector<8x32xf32>
    %140 = arith.mulf %129, %139 : vector<8x32xf32>
    %141 = arith.mulf %123, %131 : vector<8x32xf32>
    %142 = arith.addf %140, %141 : vector<8x32xf32>
    %143 = math.tanh %142 : vector<8x32xf32>
    %144 = arith.mulf %137, %143 : vector<8x32xf32>
    %c0_65 = arith.constant 0 : index
    %c0_66 = arith.constant 0 : index
    %c0_67 = arith.constant 0 : index
    %145 = vector.load %arg15[%c0_65, %c0_66, %c0_67] : memref<2x8x32xf32, #tpu.memory_space<vmem>>, vector<1x8x32xf32>
    %146 = vector.shape_cast %145 : vector<1x8x32xf32> to vector<8x32xf32>
    %147 = vector.shape_cast %142 : vector<8x32xf32> to vector<1x8x32xf32>
    tpu.vector_store %arg15[%c0_65, %c0_66, %c0_67], %147 {strides = array<i32>} : memref<2x8x32xf32, #tpu.memory_space<vmem>>, vector<1x8x32xf32>,
    %c0_68 = arith.constant 0 : index
    %c0_69 = arith.constant 0 : index
    %c0_70 = arith.constant 0 : index
    %148 = vector.load %arg14[%c0_68, %c0_69, %c0_70] : memref<2x8x32xf32, #tpu.memory_space<vmem>>, vector<1x8x32xf32>
    %149 = vector.shape_cast %148 : vector<1x8x32xf32> to vector<8x32xf32>
    %150 = vector.shape_cast %144 : vector<8x32xf32> to vector<1x8x32xf32>
    tpu.vector_store %arg14[%c0_68, %c0_69, %c0_70], %150 {strides = array<i32>} : memref<2x8x32xf32, #tpu.memory_space<vmem>>, vector<1x8x32xf32>,
    %151 = arith.truncf %144 : vector<8x32xf32> to vector<8x32xbf16>
    %152 = arith.index_cast %c2_i32 : i32 to index
    %c0_71 = arith.constant 0 : index
    %c0_72 = arith.constant 0 : index
    %153 = vector.load %arg12[%152, %c0_71, %c0_72] : memref<8x8x32xbf16, #tpu.memory_space<vmem>>, vector<1x8x32xbf16>
    %154 = vector.shape_cast %153 : vector<1x8x32xbf16> to vector<8x32xbf16>
    %155 = vector.shape_cast %151 : vector<8x32xbf16> to vector<1x8x32xbf16>
    tpu.vector_store %arg12[%152, %c0_71, %c0_72], %155 {strides = array<i32>} : memref<8x8x32xbf16, #tpu.memory_space<vmem>>, vector<1x8x32xbf16>,
    %c3_i32 = arith.constant 3 : i32
    %c0_73 = arith.constant 0 : index
    %c0_74 = arith.constant 0 : index
    %c0_75 = arith.constant 0 : index
    %156 = vector.load %arg14[%c0_73, %c0_74, %c0_75] : memref<2x8x32xf32, #tpu.memory_space<vmem>>, vector<1x8x32xf32>
    %157 = vector.shape_cast %156 : vector<1x8x32xf32> to vector<8x32xf32>
    %158 = arith.index_cast %c3_i32 : i32 to index
    %c0_76 = arith.constant 0 : index
    %c0_77 = arith.constant 0 : index
    %159 = vector.load %arg13[%158, %c0_76, %c0_77] : memref<8x8x128xbf16, #tpu.memory_space<vmem>>, vector<1x8x128xbf16>
    %160 = vector.shape_cast %159 : vector<1x8x128xbf16> to vector<8x128xbf16>
    %161 = arith.extf %160 : vector<8x128xbf16> to vector<8x128xf32>
    %162 = arith.truncf %157 : vector<8x32xf32> to vector<8x32xbf16>
    %cst_78 = arith.constant dense<0.000000e+00> : vector<8x128xf32>
    %163 = tpu.matmul %162, %14, %cst_78 {dimension_numbers = #tpu.dot_dimension_numbers<[1], [0], [0], [1], [0, 0, 1, 1], [], []>} : vector<8x32xbf16>, vector<32x128xbf16>, vector<8x128xf32> -> vector<8x128xf32>
    %164 = arith.addf %161, %163 : vector<8x128xf32>
    %165 = vector.extract_strided_slice %164 {offsets = [0, 0], sizes = [8, 32], strides = [1, 1]} : vector<8x128xf32> to vector<8x32xf32>
    %166 = arith.negf %165 : vector<8x32xf32>
    %167 = math.exp %166 : vector<8x32xf32>
    %cst_79 = arith.constant 1.000000e+00 : f32
    %168 = vector.broadcast %cst_79 : f32 to vector<8x32xf32>
    %169 = arith.addf %168, %167 : vector<8x32xf32>
    %170 = arith.divf %168, %169 : vector<8x32xf32>
    %171 = vector.extract_strided_slice %164 {offsets = [0, 32], sizes = [8, 32], strides = [1, 1]} : vector<8x128xf32> to vector<8x32xf32>
    %172 = arith.negf %171 : vector<8x32xf32>
    %173 = math.exp %172 : vector<8x32xf32>
    %cst_80 = arith.constant 1.000000e+00 : f32
    %174 = vector.broadcast %cst_80 : f32 to vector<8x32xf32>
    %175 = arith.addf %174, %173 : vector<8x32xf32>
    %176 = arith.divf %174, %175 : vector<8x32xf32>
    %177 = vector.extract_strided_slice %164 {offsets = [0, 64], sizes = [8, 32], strides = [1, 1]} : vector<8x128xf32> to vector<8x32xf32>
    %178 = math.tanh %177 : vector<8x32xf32>
    %179 = vector.extract_strided_slice %164 {offsets = [0, 96], sizes = [8, 32], strides = [1, 1]} : vector<8x128xf32> to vector<8x32xf32>
    %180 = arith.negf %179 : vector<8x32xf32>
    %181 = math.exp %180 : vector<8x32xf32>
    %cst_81 = arith.constant 1.000000e+00 : f32
    %182 = vector.broadcast %cst_81 : f32 to vector<8x32xf32>
    %183 = arith.addf %182, %181 : vector<8x32xf32>
    %184 = arith.divf %182, %183 : vector<8x32xf32>
    %c0_82 = arith.constant 0 : index
    %c0_83 = arith.constant 0 : index
    %c0_84 = arith.constant 0 : index
    %185 = vector.load %arg15[%c0_82, %c0_83, %c0_84] : memref<2x8x32xf32, #tpu.memory_space<vmem>>, vector<1x8x32xf32>
    %186 = vector.shape_cast %185 : vector<1x8x32xf32> to vector<8x32xf32>
    %187 = arith.mulf %176, %186 : vector<8x32xf32>
    %188 = arith.mulf %170, %178 : vector<8x32xf32>
    %189 = arith.addf %187, %188 : vector<8x32xf32>
    %190 = math.tanh %189 : vector<8x32xf32>
    %191 = arith.mulf %184, %190 : vector<8x32xf32>
    %c0_85 = arith.constant 0 : index
    %c0_86 = arith.constant 0 : index
    %c0_87 = arith.constant 0 : index
    %192 = vector.load %arg15[%c0_85, %c0_86, %c0_87] : memref<2x8x32xf32, #tpu.memory_space<vmem>>, vector<1x8x32xf32>
    %193 = vector.shape_cast %192 : vector<1x8x32xf32> to vector<8x32xf32>
    %194 = vector.shape_cast %189 : vector<8x32xf32> to vector<1x8x32xf32>
    tpu.vector_store %arg15[%c0_85, %c0_86, %c0_87], %194 {strides = array<i32>} : memref<2x8x32xf32, #tpu.memory_space<vmem>>, vector<1x8x32xf32>,
    %c0_88 = arith.constant 0 : index
    %c0_89 = arith.constant 0 : index
    %c0_90 = arith.constant 0 : index
    %195 = vector.load %arg14[%c0_88, %c0_89, %c0_90] : memref<2x8x32xf32, #tpu.memory_space<vmem>>, vector<1x8x32xf32>
    %196 = vector.shape_cast %195 : vector<1x8x32xf32> to vector<8x32xf32>
    %197 = vector.shape_cast %191 : vector<8x32xf32> to vector<1x8x32xf32>
    tpu.vector_store %arg14[%c0_88, %c0_89, %c0_90], %197 {strides = array<i32>} : memref<2x8x32xf32, #tpu.memory_space<vmem>>, vector<1x8x32xf32>,
    %198 = arith.truncf %191 : vector<8x32xf32> to vector<8x32xbf16>
    %199 = arith.index_cast %c3_i32 : i32 to index
    %c0_91 = arith.constant 0 : index
    %c0_92 = arith.constant 0 : index
    %200 = vector.load %arg12[%199, %c0_91, %c0_92] : memref<8x8x32xbf16, #tpu.memory_space<vmem>>, vector<1x8x32xbf16>
    %201 = vector.shape_cast %200 : vector<1x8x32xbf16> to vector<8x32xbf16>
    %202 = vector.shape_cast %198 : vector<8x32xbf16> to vector<1x8x32xbf16>
    tpu.vector_store %arg12[%199, %c0_91, %c0_92], %202 {strides = array<i32>} : memref<8x8x32xbf16, #tpu.memory_space<vmem>>, vector<1x8x32xbf16>,
    %c4_i32 = arith.constant 4 : i32
    %c0_93 = arith.constant 0 : index
    %c0_94 = arith.constant 0 : index
    %c0_95 = arith.constant 0 : index
    %203 = vector.load %arg14[%c0_93, %c0_94, %c0_95] : memref<2x8x32xf32, #tpu.memory_space<vmem>>, vector<1x8x32xf32>
    %204 = vector.shape_cast %203 : vector<1x8x32xf32> to vector<8x32xf32>
    %205 = arith.index_cast %c4_i32 : i32 to index
    %c0_96 = arith.constant 0 : index
    %c0_97 = arith.constant 0 : index
    %206 = vector.load %arg13[%205, %c0_96, %c0_97] : memref<8x8x128xbf16, #tpu.memory_space<vmem>>, vector<1x8x128xbf16>
    %207 = vector.shape_cast %206 : vector<1x8x128xbf16> to vector<8x128xbf16>
    %208 = arith.extf %207 : vector<8x128xbf16> to vector<8x128xf32>
    %209 = arith.truncf %204 : vector<8x32xf32> to vector<8x32xbf16>
    %cst_98 = arith.constant dense<0.000000e+00> : vector<8x128xf32>
    %210 = tpu.matmul %209, %14, %cst_98 {dimension_numbers = #tpu.dot_dimension_numbers<[1], [0], [0], [1], [0, 0, 1, 1], [], []>} : vector<8x32xbf16>, vector<32x128xbf16>, vector<8x128xf32> -> vector<8x128xf32>
    %211 = arith.addf %208, %210 : vector<8x128xf32>
    %212 = vector.extract_strided_slice %211 {offsets = [0, 0], sizes = [8, 32], strides = [1, 1]} : vector<8x128xf32> to vector<8x32xf32>
    %213 = arith.negf %212 : vector<8x32xf32>
    %214 = math.exp %213 : vector<8x32xf32>
    %cst_99 = arith.constant 1.000000e+00 : f32
    %215 = vector.broadcast %cst_99 : f32 to vector<8x32xf32>
    %216 = arith.addf %215, %214 : vector<8x32xf32>
    %217 = arith.divf %215, %216 : vector<8x32xf32>
    %218 = vector.extract_strided_slice %211 {offsets = [0, 32], sizes = [8, 32], strides = [1, 1]} : vector<8x128xf32> to vector<8x32xf32>
    %219 = arith.negf %218 : vector<8x32xf32>
    %220 = math.exp %219 : vector<8x32xf32>
    %cst_100 = arith.constant 1.000000e+00 : f32
    %221 = vector.broadcast %cst_100 : f32 to vector<8x32xf32>
    %222 = arith.addf %221, %220 : vector<8x32xf32>
    %223 = arith.divf %221, %222 : vector<8x32xf32>
    %224 = vector.extract_strided_slice %211 {offsets = [0, 64], sizes = [8, 32], strides = [1, 1]} : vector<8x128xf32> to vector<8x32xf32>
    %225 = math.tanh %224 : vector<8x32xf32>
    %226 = vector.extract_strided_slice %211 {offsets = [0, 96], sizes = [8, 32], strides = [1, 1]} : vector<8x128xf32> to vector<8x32xf32>
    %227 = arith.negf %226 : vector<8x32xf32>
    %228 = math.exp %227 : vector<8x32xf32>
    %cst_101 = arith.constant 1.000000e+00 : f32
    %229 = vector.broadcast %cst_101 : f32 to vector<8x32xf32>
    %230 = arith.addf %229, %228 : vector<8x32xf32>
    %231 = arith.divf %229, %230 : vector<8x32xf32>
    %c0_102 = arith.constant 0 : index
    %c0_103 = arith.constant 0 : index
    %c0_104 = arith.constant 0 : index
    %232 = vector.load %arg15[%c0_102, %c0_103, %c0_104] : memref<2x8x32xf32, #tpu.memory_space<vmem>>, vector<1x8x32xf32>
    %233 = vector.shape_cast %232 : vector<1x8x32xf32> to vector<8x32xf32>
    %234 = arith.mulf %223, %233 : vector<8x32xf32>
    %235 = arith.mulf %217, %225 : vector<8x32xf32>
    %236 = arith.addf %234, %235 : vector<8x32xf32>
    %237 = math.tanh %236 : vector<8x32xf32>
    %238 = arith.mulf %231, %237 : vector<8x32xf32>
    %c0_105 = arith.constant 0 : index
    %c0_106 = arith.constant 0 : index
    %c0_107 = arith.constant 0 : index
    %239 = vector.load %arg15[%c0_105, %c0_106, %c0_107] : memref<2x8x32xf32, #tpu.memory_space<vmem>>, vector<1x8x32xf32>
    %240 = vector.shape_cast %239 : vector<1x8x32xf32> to vector<8x32xf32>
    %241 = vector.shape_cast %236 : vector<8x32xf32> to vector<1x8x32xf32>
    tpu.vector_store %arg15[%c0_105, %c0_106, %c0_107], %241 {strides = array<i32>} : memref<2x8x32xf32, #tpu.memory_space<vmem>>, vector<1x8x32xf32>,
    %c0_108 = arith.constant 0 : index
    %c0_109 = arith.constant 0 : index
    %c0_110 = arith.constant 0 : index
    %242 = vector.load %arg14[%c0_108, %c0_109, %c0_110] : memref<2x8x32xf32, #tpu.memory_space<vmem>>, vector<1x8x32xf32>
    %243 = vector.shape_cast %242 : vector<1x8x32xf32> to vector<8x32xf32>
    %244 = vector.shape_cast %238 : vector<8x32xf32> to vector<1x8x32xf32>
    tpu.vector_store %arg14[%c0_108, %c0_109, %c0_110], %244 {strides = array<i32>} : memref<2x8x32xf32, #tpu.memory_space<vmem>>, vector<1x8x32xf32>,
    %245 = arith.truncf %238 : vector<8x32xf32> to vector<8x32xbf16>
    %246 = arith.index_cast %c4_i32 : i32 to index
    %c0_111 = arith.constant 0 : index
    %c0_112 = arith.constant 0 : index
    %247 = vector.load %arg12[%246, %c0_111, %c0_112] : memref<8x8x32xbf16, #tpu.memory_space<vmem>>, vector<1x8x32xbf16>
    %248 = vector.shape_cast %247 : vector<1x8x32xbf16> to vector<8x32xbf16>
    %249 = vector.shape_cast %245 : vector<8x32xbf16> to vector<1x8x32xbf16>
    tpu.vector_store %arg12[%246, %c0_111, %c0_112], %249 {strides = array<i32>} : memref<8x8x32xbf16, #tpu.memory_space<vmem>>, vector<1x8x32xbf16>,
    %c5_i32 = arith.constant 5 : i32
    %c0_113 = arith.constant 0 : index
    %c0_114 = arith.constant 0 : index
    %c0_115 = arith.constant 0 : index
    %250 = vector.load %arg14[%c0_113, %c0_114, %c0_115] : memref<2x8x32xf32, #tpu.memory_space<vmem>>, vector<1x8x32xf32>
    %251 = vector.shape_cast %250 : vector<1x8x32xf32> to vector<8x32xf32>
    %252 = arith.index_cast %c5_i32 : i32 to index
    %c0_116 = arith.constant 0 : index
    %c0_117 = arith.constant 0 : index
    %253 = vector.load %arg13[%252, %c0_116, %c0_117] : memref<8x8x128xbf16, #tpu.memory_space<vmem>>, vector<1x8x128xbf16>
    %254 = vector.shape_cast %253 : vector<1x8x128xbf16> to vector<8x128xbf16>
    %255 = arith.extf %254 : vector<8x128xbf16> to vector<8x128xf32>
    %256 = arith.truncf %251 : vector<8x32xf32> to vector<8x32xbf16>
    %cst_118 = arith.constant dense<0.000000e+00> : vector<8x128xf32>
    %257 = tpu.matmul %256, %14, %cst_118 {dimension_numbers = #tpu.dot_dimension_numbers<[1], [0], [0], [1], [0, 0, 1, 1], [], []>} : vector<8x32xbf16>, vector<32x128xbf16>, vector<8x128xf32> -> vector<8x128xf32>
    %258 = arith.addf %255, %257 : vector<8x128xf32>
    %259 = vector.extract_strided_slice %258 {offsets = [0, 0], sizes = [8, 32], strides = [1, 1]} : vector<8x128xf32> to vector<8x32xf32>
    %260 = arith.negf %259 : vector<8x32xf32>
    %261 = math.exp %260 : vector<8x32xf32>
    %cst_119 = arith.constant 1.000000e+00 : f32
    %262 = vector.broadcast %cst_119 : f32 to vector<8x32xf32>
    %263 = arith.addf %262, %261 : vector<8x32xf32>
    %264 = arith.divf %262, %263 : vector<8x32xf32>
    %265 = vector.extract_strided_slice %258 {offsets = [0, 32], sizes = [8, 32], strides = [1, 1]} : vector<8x128xf32> to vector<8x32xf32>
    %266 = arith.negf %265 : vector<8x32xf32>
    %267 = math.exp %266 : vector<8x32xf32>
    %cst_120 = arith.constant 1.000000e+00 : f32
    %268 = vector.broadcast %cst_120 : f32 to vector<8x32xf32>
    %269 = arith.addf %268, %267 : vector<8x32xf32>
    %270 = arith.divf %268, %269 : vector<8x32xf32>
    %271 = vector.extract_strided_slice %258 {offsets = [0, 64], sizes = [8, 32], strides = [1, 1]} : vector<8x128xf32> to vector<8x32xf32>
    %272 = math.tanh %271 : vector<8x32xf32>
    %273 = vector.extract_strided_slice %258 {offsets = [0, 96], sizes = [8, 32], strides = [1, 1]} : vector<8x128xf32> to vector<8x32xf32>
    %274 = arith.negf %273 : vector<8x32xf32>
    %275 = math.exp %274 : vector<8x32xf32>
    %cst_121 = arith.constant 1.000000e+00 : f32
    %276 = vector.broadcast %cst_121 : f32 to vector<8x32xf32>
    %277 = arith.addf %276, %275 : vector<8x32xf32>
    %278 = arith.divf %276, %277 : vector<8x32xf32>
    %c0_122 = arith.constant 0 : index
    %c0_123 = arith.constant 0 : index
    %c0_124 = arith.constant 0 : index
    %279 = vector.load %arg15[%c0_122, %c0_123, %c0_124] : memref<2x8x32xf32, #tpu.memory_space<vmem>>, vector<1x8x32xf32>
    %280 = vector.shape_cast %279 : vector<1x8x32xf32> to vector<8x32xf32>
    %281 = arith.mulf %270, %280 : vector<8x32xf32>
    %282 = arith.mulf %264, %272 : vector<8x32xf32>
    %283 = arith.addf %281, %282 : vector<8x32xf32>
    %284 = math.tanh %283 : vector<8x32xf32>
    %285 = arith.mulf %278, %284 : vector<8x32xf32>
    %c0_125 = arith.constant 0 : index
    %c0_126 = arith.constant 0 : index
    %c0_127 = arith.constant 0 : index
    %286 = vector.load %arg15[%c0_125, %c0_126, %c0_127] : memref<2x8x32xf32, #tpu.memory_space<vmem>>, vector<1x8x32xf32>
    %287 = vector.shape_cast %286 : vector<1x8x32xf32> to vector<8x32xf32>
    %288 = vector.shape_cast %283 : vector<8x32xf32> to vector<1x8x32xf32>
    tpu.vector_store %arg15[%c0_125, %c0_126, %c0_127], %288 {strides = array<i32>} : memref<2x8x32xf32, #tpu.memory_space<vmem>>, vector<1x8x32xf32>,
    %c0_128 = arith.constant 0 : index
    %c0_129 = arith.constant 0 : index
    %c0_130 = arith.constant 0 : index
    %289 = vector.load %arg14[%c0_128, %c0_129, %c0_130] : memref<2x8x32xf32, #tpu.memory_space<vmem>>, vector<1x8x32xf32>
    %290 = vector.shape_cast %289 : vector<1x8x32xf32> to vector<8x32xf32>
    %291 = vector.shape_cast %285 : vector<8x32xf32> to vector<1x8x32xf32>
    tpu.vector_store %arg14[%c0_128, %c0_129, %c0_130], %291 {strides = array<i32>} : memref<2x8x32xf32, #tpu.memory_space<vmem>>, vector<1x8x32xf32>,
    %292 = arith.truncf %285 : vector<8x32xf32> to vector<8x32xbf16>
    %293 = arith.index_cast %c5_i32 : i32 to index
    %c0_131 = arith.constant 0 : index
    %c0_132 = arith.constant 0 : index
    %294 = vector.load %arg12[%293, %c0_131, %c0_132] : memref<8x8x32xbf16, #tpu.memory_space<vmem>>, vector<1x8x32xbf16>
    %295 = vector.shape_cast %294 : vector<1x8x32xbf16> to vector<8x32xbf16>
    %296 = vector.shape_cast %292 : vector<8x32xbf16> to vector<1x8x32xbf16>
    tpu.vector_store %arg12[%293, %c0_131, %c0_132], %296 {strides = array<i32>} : memref<8x8x32xbf16, #tpu.memory_space<vmem>>, vector<1x8x32xbf16>,
    %c6_i32 = arith.constant 6 : i32
    %c0_133 = arith.constant 0 : index
    %c0_134 = arith.constant 0 : index
    %c0_135 = arith.constant 0 : index
    %297 = vector.load %arg14[%c0_133, %c0_134, %c0_135] : memref<2x8x32xf32, #tpu.memory_space<vmem>>, vector<1x8x32xf32>
    %298 = vector.shape_cast %297 : vector<1x8x32xf32> to vector<8x32xf32>
    %299 = arith.index_cast %c6_i32 : i32 to index
    %c0_136 = arith.constant 0 : index
    %c0_137 = arith.constant 0 : index
    %300 = vector.load %arg13[%299, %c0_136, %c0_137] : memref<8x8x128xbf16, #tpu.memory_space<vmem>>, vector<1x8x128xbf16>
    %301 = vector.shape_cast %300 : vector<1x8x128xbf16> to vector<8x128xbf16>
    %302 = arith.extf %301 : vector<8x128xbf16> to vector<8x128xf32>
    %303 = arith.truncf %298 : vector<8x32xf32> to vector<8x32xbf16>
    %cst_138 = arith.constant dense<0.000000e+00> : vector<8x128xf32>
    %304 = tpu.matmul %303, %14, %cst_138 {dimension_numbers = #tpu.dot_dimension_numbers<[1], [0], [0], [1], [0, 0, 1, 1], [], []>} : vector<8x32xbf16>, vector<32x128xbf16>, vector<8x128xf32> -> vector<8x128xf32>
    %305 = arith.addf %302, %304 : vector<8x128xf32>
    %306 = vector.extract_strided_slice %305 {offsets = [0, 0], sizes = [8, 32], strides = [1, 1]} : vector<8x128xf32> to vector<8x32xf32>
    %307 = arith.negf %306 : vector<8x32xf32>
    %308 = math.exp %307 : vector<8x32xf32>
    %cst_139 = arith.constant 1.000000e+00 : f32
    %309 = vector.broadcast %cst_139 : f32 to vector<8x32xf32>
    %310 = arith.addf %309, %308 : vector<8x32xf32>
    %311 = arith.divf %309, %310 : vector<8x32xf32>
    %312 = vector.extract_strided_slice %305 {offsets = [0, 32], sizes = [8, 32], strides = [1, 1]} : vector<8x128xf32> to vector<8x32xf32>
    %313 = arith.negf %312 : vector<8x32xf32>
    %314 = math.exp %313 : vector<8x32xf32>
    %cst_140 = arith.constant 1.000000e+00 : f32
    %315 = vector.broadcast %cst_140 : f32 to vector<8x32xf32>
    %316 = arith.addf %315, %314 : vector<8x32xf32>
    %317 = arith.divf %315, %316 : vector<8x32xf32>
    %318 = vector.extract_strided_slice %305 {offsets = [0, 64], sizes = [8, 32], strides = [1, 1]} : vector<8x128xf32> to vector<8x32xf32>
    %319 = math.tanh %318 : vector<8x32xf32>
    %320 = vector.extract_strided_slice %305 {offsets = [0, 96], sizes = [8, 32], strides = [1, 1]} : vector<8x128xf32> to vector<8x32xf32>
    %321 = arith.negf %320 : vector<8x32xf32>
    %322 = math.exp %321 : vector<8x32xf32>
    %cst_141 = arith.constant 1.000000e+00 : f32
    %323 = vector.broadcast %cst_141 : f32 to vector<8x32xf32>
    %324 = arith.addf %323, %322 : vector<8x32xf32>
    %325 = arith.divf %323, %324 : vector<8x32xf32>
    %c0_142 = arith.constant 0 : index
    %c0_143 = arith.constant 0 : index
    %c0_144 = arith.constant 0 : index
    %326 = vector.load %arg15[%c0_142, %c0_143, %c0_144] : memref<2x8x32xf32, #tpu.memory_space<vmem>>, vector<1x8x32xf32>
    %327 = vector.shape_cast %326 : vector<1x8x32xf32> to vector<8x32xf32>
    %328 = arith.mulf %317, %327 : vector<8x32xf32>
    %329 = arith.mulf %311, %319 : vector<8x32xf32>
    %330 = arith.addf %328, %329 : vector<8x32xf32>
    %331 = math.tanh %330 : vector<8x32xf32>
    %332 = arith.mulf %325, %331 : vector<8x32xf32>
    %c0_145 = arith.constant 0 : index
    %c0_146 = arith.constant 0 : index
    %c0_147 = arith.constant 0 : index
    %333 = vector.load %arg15[%c0_145, %c0_146, %c0_147] : memref<2x8x32xf32, #tpu.memory_space<vmem>>, vector<1x8x32xf32>
    %334 = vector.shape_cast %333 : vector<1x8x32xf32> to vector<8x32xf32>
    %335 = vector.shape_cast %330 : vector<8x32xf32> to vector<1x8x32xf32>
    tpu.vector_store %arg15[%c0_145, %c0_146, %c0_147], %335 {strides = array<i32>} : memref<2x8x32xf32, #tpu.memory_space<vmem>>, vector<1x8x32xf32>,
    %c0_148 = arith.constant 0 : index
    %c0_149 = arith.constant 0 : index
    %c0_150 = arith.constant 0 : index
    %336 = vector.load %arg14[%c0_148, %c0_149, %c0_150] : memref<2x8x32xf32, #tpu.memory_space<vmem>>, vector<1x8x32xf32>
    %337 = vector.shape_cast %336 : vector<1x8x32xf32> to vector<8x32xf32>
    %338 = vector.shape_cast %332 : vector<8x32xf32> to vector<1x8x32xf32>
    tpu.vector_store %arg14[%c0_148, %c0_149, %c0_150], %338 {strides = array<i32>} : memref<2x8x32xf32, #tpu.memory_space<vmem>>, vector<1x8x32xf32>,
    %339 = arith.truncf %332 : vector<8x32xf32> to vector<8x32xbf16>
    %340 = arith.index_cast %c6_i32 : i32 to index
    %c0_151 = arith.constant 0 : index
    %c0_152 = arith.constant 0 : index
    %341 = vector.load %arg12[%340, %c0_151, %c0_152] : memref<8x8x32xbf16, #tpu.memory_space<vmem>>, vector<1x8x32xbf16>
    %342 = vector.shape_cast %341 : vector<1x8x32xbf16> to vector<8x32xbf16>
    %343 = vector.shape_cast %339 : vector<8x32xbf16> to vector<1x8x32xbf16>
    tpu.vector_store %arg12[%340, %c0_151, %c0_152], %343 {strides = array<i32>} : memref<8x8x32xbf16, #tpu.memory_space<vmem>>, vector<1x8x32xbf16>,
    %c7_i32 = arith.constant 7 : i32
    %c0_153 = arith.constant 0 : index
    %c0_154 = arith.constant 0 : index
    %c0_155 = arith.constant 0 : index
    %344 = vector.load %arg14[%c0_153, %c0_154, %c0_155] : memref<2x8x32xf32, #tpu.memory_space<vmem>>, vector<1x8x32xf32>
    %345 = vector.shape_cast %344 : vector<1x8x32xf32> to vector<8x32xf32>
    %346 = arith.index_cast %c7_i32 : i32 to index
    %c0_156 = arith.constant 0 : index
    %c0_157 = arith.constant 0 : index
    %347 = vector.load %arg13[%346, %c0_156, %c0_157] : memref<8x8x128xbf16, #tpu.memory_space<vmem>>, vector<1x8x128xbf16>
    %348 = vector.shape_cast %347 : vector<1x8x128xbf16> to vector<8x128xbf16>
    %349 = arith.extf %348 : vector<8x128xbf16> to vector<8x128xf32>
    %350 = arith.truncf %345 : vector<8x32xf32> to vector<8x32xbf16>
    %cst_158 = arith.constant dense<0.000000e+00> : vector<8x128xf32>
    %351 = tpu.matmul %350, %14, %cst_158 {dimension_numbers = #tpu.dot_dimension_numbers<[1], [0], [0], [1], [0, 0, 1, 1], [], []>} : vector<8x32xbf16>, vector<32x128xbf16>, vector<8x128xf32> -> vector<8x128xf32>
    %352 = arith.addf %349, %351 : vector<8x128xf32>
    %353 = vector.extract_strided_slice %352 {offsets = [0, 0], sizes = [8, 32], strides = [1, 1]} : vector<8x128xf32> to vector<8x32xf32>
    %354 = arith.negf %353 : vector<8x32xf32>
    %355 = math.exp %354 : vector<8x32xf32>
    %cst_159 = arith.constant 1.000000e+00 : f32
    %356 = vector.broadcast %cst_159 : f32 to vector<8x32xf32>
    %357 = arith.addf %356, %355 : vector<8x32xf32>
    %358 = arith.divf %356, %357 : vector<8x32xf32>
    %359 = vector.extract_strided_slice %352 {offsets = [0, 32], sizes = [8, 32], strides = [1, 1]} : vector<8x128xf32> to vector<8x32xf32>
    %360 = arith.negf %359 : vector<8x32xf32>
    %361 = math.exp %360 : vector<8x32xf32>
    %cst_160 = arith.constant 1.000000e+00 : f32
    %362 = vector.broadcast %cst_160 : f32 to vector<8x32xf32>
    %363 = arith.addf %362, %361 : vector<8x32xf32>
    %364 = arith.divf %362, %363 : vector<8x32xf32>
    %365 = vector.extract_strided_slice %352 {offsets = [0, 64], sizes = [8, 32], strides = [1, 1]} : vector<8x128xf32> to vector<8x32xf32>
    %366 = math.tanh %365 : vector<8x32xf32>
    %367 = vector.extract_strided_slice %352 {offsets = [0, 96], sizes = [8, 32], strides = [1, 1]} : vector<8x128xf32> to vector<8x32xf32>
    %368 = arith.negf %367 : vector<8x32xf32>
    %369 = math.exp %368 : vector<8x32xf32>
    %cst_161 = arith.constant 1.000000e+00 : f32
    %370 = vector.broadcast %cst_161 : f32 to vector<8x32xf32>
    %371 = arith.addf %370, %369 : vector<8x32xf32>
    %372 = arith.divf %370, %371 : vector<8x32xf32>
    %c0_162 = arith.constant 0 : index
    %c0_163 = arith.constant 0 : index
    %c0_164 = arith.constant 0 : index
    %373 = vector.load %arg15[%c0_162, %c0_163, %c0_164] : memref<2x8x32xf32, #tpu.memory_space<vmem>>, vector<1x8x32xf32>
    %374 = vector.shape_cast %373 : vector<1x8x32xf32> to vector<8x32xf32>
    %375 = arith.mulf %364, %374 : vector<8x32xf32>
    %376 = arith.mulf %358, %366 : vector<8x32xf32>
    %377 = arith.addf %375, %376 : vector<8x32xf32>
    %378 = math.tanh %377 : vector<8x32xf32>
    %379 = arith.mulf %372, %378 : vector<8x32xf32>
    %c0_165 = arith.constant 0 : index
    %c0_166 = arith.constant 0 : index
    %c0_167 = arith.constant 0 : index
    %380 = vector.load %arg15[%c0_165, %c0_166, %c0_167] : memref<2x8x32xf32, #tpu.memory_space<vmem>>, vector<1x8x32xf32>
    %381 = vector.shape_cast %380 : vector<1x8x32xf32> to vector<8x32xf32>
    %382 = vector.shape_cast %377 : vector<8x32xf32> to vector<1x8x32xf32>
    tpu.vector_store %arg15[%c0_165, %c0_166, %c0_167], %382 {strides = array<i32>} : memref<2x8x32xf32, #tpu.memory_space<vmem>>, vector<1x8x32xf32>,
    %c0_168 = arith.constant 0 : index
    %c0_169 = arith.constant 0 : index
    %c0_170 = arith.constant 0 : index
    %383 = vector.load %arg14[%c0_168, %c0_169, %c0_170] : memref<2x8x32xf32, #tpu.memory_space<vmem>>, vector<1x8x32xf32>
    %384 = vector.shape_cast %383 : vector<1x8x32xf32> to vector<8x32xf32>
    %385 = vector.shape_cast %379 : vector<8x32xf32> to vector<1x8x32xf32>
    tpu.vector_store %arg14[%c0_168, %c0_169, %c0_170], %385 {strides = array<i32>} : memref<2x8x32xf32, #tpu.memory_space<vmem>>, vector<1x8x32xf32>,
    %386 = arith.truncf %379 : vector<8x32xf32> to vector<8x32xbf16>
    %387 = arith.index_cast %c7_i32 : i32 to index
    %c0_171 = arith.constant 0 : index
    %c0_172 = arith.constant 0 : index
    %388 = vector.load %arg12[%387, %c0_171, %c0_172] : memref<8x8x32xbf16, #tpu.memory_space<vmem>>, vector<1x8x32xbf16>
    %389 = vector.shape_cast %388 : vector<1x8x32xbf16> to vector<8x32xbf16>
    %390 = vector.shape_cast %386 : vector<8x32xbf16> to vector<1x8x32xbf16>
    tpu.vector_store %arg12[%387, %c0_171, %c0_172], %390 {strides = array<i32>} : memref<8x8x32xbf16, #tpu.memory_space<vmem>>, vector<1x8x32xbf16>,
    %c8_i32 = arith.constant 8 : i32
    %c0_173 = arith.constant 0 : index
    %c0_174 = arith.constant 0 : index
    %c0_175 = arith.constant 0 : index
    %391 = vector.load %arg12[%c0_173, %c0_174, %c0_175] : memref<8x8x32xbf16, #tpu.memory_space<vmem>>, vector<8x8x32xbf16>
    %392 = vector.shape_cast %391 : vector<8x8x32xbf16> to vector<64x32xbf16>
    %c0_176 = arith.constant 0 : index
    %c0_177 = arith.constant 0 : index
    %393 = vector.load %arg6[%c0_176, %c0_177] : memref<32x128xbf16, #tpu.memory_space<vmem>>, vector<32x128xbf16>
    %cst_178 = arith.constant dense<0.000000e+00> : vector<64x128xf32>
    %394 = tpu.matmul %392, %393, %cst_178 {dimension_numbers = #tpu.dot_dimension_numbers<[1], [0], [0], [1], [0, 0, 1, 1], [], []>} : vector<64x32xbf16>, vector<32x128xbf16>, vector<64x128xf32> -> vector<64x128xf32>
    %c0_179 = arith.constant 0 : index
    %c0_180 = arith.constant 0 : index
    %395 = vector.load %arg8[%c0_179, %c0_180] : memref<1x128xf32, #tpu.memory_space<vmem>>, vector<1x128xf32>
    %396 = vector.broadcast %395 : vector<1x128xf32> to vector<64x128xf32>
    %397 = arith.addf %394, %396 : vector<64x128xf32>
    %398 = vector.shape_cast %397 : vector<64x128xf32> to vector<8x8x128xf32>
    %399 = arith.truncf %398 : vector<8x8x128xf32> to vector<8x8x128xbf16>
    %c0_181 = arith.constant 0 : index
    %c0_182 = arith.constant 0 : index
    %c0_183 = arith.constant 0 : index
    %400 = vector.load %arg13[%c0_181, %c0_182, %c0_183] : memref<8x8x128xbf16, #tpu.memory_space<vmem>>, vector<8x8x128xbf16>
    tpu.vector_store %arg13[%c0_181, %c0_182, %c0_183], %399 {strides = array<i32>} : memref<8x8x128xbf16, #tpu.memory_space<vmem>>, vector<8x8x128xbf16>,
    %c0_184 = arith.constant 0 : index
    %c0_185 = arith.constant 0 : index
    %401 = vector.load %arg7[%c0_184, %c0_185] : memref<32x128xbf16, #tpu.memory_space<vmem>>, vector<32x128xbf16>
    %c0_i32_186 = arith.constant 0 : i32
    %c1 = arith.constant 1 : index
    %c0_187 = arith.constant 0 : index
    %c0_188 = arith.constant 0 : index
    %402 = vector.load %arg14[%c1, %c0_187, %c0_188] : memref<2x8x32xf32, #tpu.memory_space<vmem>>, vector<1x8x32xf32>
    %403 = vector.shape_cast %402 : vector<1x8x32xf32> to vector<8x32xf32>
    %404 = arith.index_cast %c0_i32_186 : i32 to index
    %c0_189 = arith.constant 0 : index
    %c0_190 = arith.constant 0 : index
    %405 = vector.load %arg13[%404, %c0_189, %c0_190] : memref<8x8x128xbf16, #tpu.memory_space<vmem>>, vector<1x8x128xbf16>
    %406 = vector.shape_cast %405 : vector<1x8x128xbf16> to vector<8x128xbf16>
    %407 = arith.extf %406 : vector<8x128xbf16> to vector<8x128xf32>
    %408 = arith.truncf %403 : vector<8x32xf32> to vector<8x32xbf16>
    %cst_191 = arith.constant dense<0.000000e+00> : vector<8x128xf32>
    %409 = tpu.matmul %408, %401, %cst_191 {dimension_numbers = #tpu.dot_dimension_numbers<[1], [0], [0], [1], [0, 0, 1, 1], [], []>} : vector<8x32xbf16>, vector<32x128xbf16>, vector<8x128xf32> -> vector<8x128xf32>
    %410 = arith.addf %407, %409 : vector<8x128xf32>
    %411 = vector.extract_strided_slice %410 {offsets = [0, 0], sizes = [8, 32], strides = [1, 1]} : vector<8x128xf32> to vector<8x32xf32>
    %412 = arith.negf %411 : vector<8x32xf32>
    %413 = math.exp %412 : vector<8x32xf32>
    %cst_192 = arith.constant 1.000000e+00 : f32
    %414 = vector.broadcast %cst_192 : f32 to vector<8x32xf32>
    %415 = arith.addf %414, %413 : vector<8x32xf32>
    %416 = arith.divf %414, %415 : vector<8x32xf32>
    %417 = vector.extract_strided_slice %410 {offsets = [0, 32], sizes = [8, 32], strides = [1, 1]} : vector<8x128xf32> to vector<8x32xf32>
    %418 = arith.negf %417 : vector<8x32xf32>
    %419 = math.exp %418 : vector<8x32xf32>
    %cst_193 = arith.constant 1.000000e+00 : f32
    %420 = vector.broadcast %cst_193 : f32 to vector<8x32xf32>
    %421 = arith.addf %420, %419 : vector<8x32xf32>
    %422 = arith.divf %420, %421 : vector<8x32xf32>
    %423 = vector.extract_strided_slice %410 {offsets = [0, 64], sizes = [8, 32], strides = [1, 1]} : vector<8x128xf32> to vector<8x32xf32>
    %424 = math.tanh %423 : vector<8x32xf32>
    %425 = vector.extract_strided_slice %410 {offsets = [0, 96], sizes = [8, 32], strides = [1, 1]} : vector<8x128xf32> to vector<8x32xf32>
    %426 = arith.negf %425 : vector<8x32xf32>
    %427 = math.exp %426 : vector<8x32xf32>
    %cst_194 = arith.constant 1.000000e+00 : f32
    %428 = vector.broadcast %cst_194 : f32 to vector<8x32xf32>
    %429 = arith.addf %428, %427 : vector<8x32xf32>
    %430 = arith.divf %428, %429 : vector<8x32xf32>
    %c1_195 = arith.constant 1 : index
    %c0_196 = arith.constant 0 : index
    %c0_197 = arith.constant 0 : index
    %431 = vector.load %arg15[%c1_195, %c0_196, %c0_197] : memref<2x8x32xf32, #tpu.memory_space<vmem>>, vector<1x8x32xf32>
    %432 = vector.shape_cast %431 : vector<1x8x32xf32> to vector<8x32xf32>
    %433 = arith.mulf %422, %432 : vector<8x32xf32>
    %434 = arith.mulf %416, %424 : vector<8x32xf32>
    %435 = arith.addf %433, %434 : vector<8x32xf32>
    %436 = math.tanh %435 : vector<8x32xf32>
    %437 = arith.mulf %430, %436 : vector<8x32xf32>
    %c1_198 = arith.constant 1 : index
    %c0_199 = arith.constant 0 : index
    %c0_200 = arith.constant 0 : index
    %438 = vector.load %arg15[%c1_198, %c0_199, %c0_200] : memref<2x8x32xf32, #tpu.memory_space<vmem>>, vector<1x8x32xf32>
    %439 = vector.shape_cast %438 : vector<1x8x32xf32> to vector<8x32xf32>
    %440 = vector.shape_cast %435 : vector<8x32xf32> to vector<1x8x32xf32>
    tpu.vector_store %arg15[%c1_198, %c0_199, %c0_200], %440 {strides = array<i32>} : memref<2x8x32xf32, #tpu.memory_space<vmem>>, vector<1x8x32xf32>,
    %c1_201 = arith.constant 1 : index
    %c0_202 = arith.constant 0 : index
    %c0_203 = arith.constant 0 : index
    %441 = vector.load %arg14[%c1_201, %c0_202, %c0_203] : memref<2x8x32xf32, #tpu.memory_space<vmem>>, vector<1x8x32xf32>
    %442 = vector.shape_cast %441 : vector<1x8x32xf32> to vector<8x32xf32>
    %443 = vector.shape_cast %437 : vector<8x32xf32> to vector<1x8x32xf32>
    tpu.vector_store %arg14[%c1_201, %c0_202, %c0_203], %443 {strides = array<i32>} : memref<2x8x32xf32, #tpu.memory_space<vmem>>, vector<1x8x32xf32>,
    %c1_i32_204 = arith.constant 1 : i32
    %c1_205 = arith.constant 1 : index
    %c0_206 = arith.constant 0 : index
    %c0_207 = arith.constant 0 : index
    %444 = vector.load %arg14[%c1_205, %c0_206, %c0_207] : memref<2x8x32xf32, #tpu.memory_space<vmem>>, vector<1x8x32xf32>
    %445 = vector.shape_cast %444 : vector<1x8x32xf32> to vector<8x32xf32>
    %446 = arith.index_cast %c1_i32_204 : i32 to index
    %c0_208 = arith.constant 0 : index
    %c0_209 = arith.constant 0 : index
    %447 = vector.load %arg13[%446, %c0_208, %c0_209] : memref<8x8x128xbf16, #tpu.memory_space<vmem>>, vector<1x8x128xbf16>
    %448 = vector.shape_cast %447 : vector<1x8x128xbf16> to vector<8x128xbf16>
    %449 = arith.extf %448 : vector<8x128xbf16> to vector<8x128xf32>
    %450 = arith.truncf %445 : vector<8x32xf32> to vector<8x32xbf16>
    %cst_210 = arith.constant dense<0.000000e+00> : vector<8x128xf32>
    %451 = tpu.matmul %450, %401, %cst_210 {dimension_numbers = #tpu.dot_dimension_numbers<[1], [0], [0], [1], [0, 0, 1, 1], [], []>} : vector<8x32xbf16>, vector<32x128xbf16>, vector<8x128xf32> -> vector<8x128xf32>
    %452 = arith.addf %449, %451 : vector<8x128xf32>
    %453 = vector.extract_strided_slice %452 {offsets = [0, 0], sizes = [8, 32], strides = [1, 1]} : vector<8x128xf32> to vector<8x32xf32>
    %454 = arith.negf %453 : vector<8x32xf32>
    %455 = math.exp %454 : vector<8x32xf32>
    %cst_211 = arith.constant 1.000000e+00 : f32
    %456 = vector.broadcast %cst_211 : f32 to vector<8x32xf32>
    %457 = arith.addf %456, %455 : vector<8x32xf32>
    %458 = arith.divf %456, %457 : vector<8x32xf32>
    %459 = vector.extract_strided_slice %452 {offsets = [0, 32], sizes = [8, 32], strides = [1, 1]} : vector<8x128xf32> to vector<8x32xf32>
    %460 = arith.negf %459 : vector<8x32xf32>
    %461 = math.exp %460 : vector<8x32xf32>
    %cst_212 = arith.constant 1.000000e+00 : f32
    %462 = vector.broadcast %cst_212 : f32 to vector<8x32xf32>
    %463 = arith.addf %462, %461 : vector<8x32xf32>
    %464 = arith.divf %462, %463 : vector<8x32xf32>
    %465 = vector.extract_strided_slice %452 {offsets = [0, 64], sizes = [8, 32], strides = [1, 1]} : vector<8x128xf32> to vector<8x32xf32>
    %466 = math.tanh %465 : vector<8x32xf32>
    %467 = vector.extract_strided_slice %452 {offsets = [0, 96], sizes = [8, 32], strides = [1, 1]} : vector<8x128xf32> to vector<8x32xf32>
    %468 = arith.negf %467 : vector<8x32xf32>
    %469 = math.exp %468 : vector<8x32xf32>
    %cst_213 = arith.constant 1.000000e+00 : f32
    %470 = vector.broadcast %cst_213 : f32 to vector<8x32xf32>
    %471 = arith.addf %470, %469 : vector<8x32xf32>
    %472 = arith.divf %470, %471 : vector<8x32xf32>
    %c1_214 = arith.constant 1 : index
    %c0_215 = arith.constant 0 : index
    %c0_216 = arith.constant 0 : index
    %473 = vector.load %arg15[%c1_214, %c0_215, %c0_216] : memref<2x8x32xf32, #tpu.memory_space<vmem>>, vector<1x8x32xf32>
    %474 = vector.shape_cast %473 : vector<1x8x32xf32> to vector<8x32xf32>
    %475 = arith.mulf %464, %474 : vector<8x32xf32>
    %476 = arith.mulf %458, %466 : vector<8x32xf32>
    %477 = arith.addf %475, %476 : vector<8x32xf32>
    %478 = math.tanh %477 : vector<8x32xf32>
    %479 = arith.mulf %472, %478 : vector<8x32xf32>
    %c1_217 = arith.constant 1 : index
    %c0_218 = arith.constant 0 : index
    %c0_219 = arith.constant 0 : index
    %480 = vector.load %arg15[%c1_217, %c0_218, %c0_219] : memref<2x8x32xf32, #tpu.memory_space<vmem>>, vector<1x8x32xf32>
    %481 = vector.shape_cast %480 : vector<1x8x32xf32> to vector<8x32xf32>
    %482 = vector.shape_cast %477 : vector<8x32xf32> to vector<1x8x32xf32>
    tpu.vector_store %arg15[%c1_217, %c0_218, %c0_219], %482 {strides = array<i32>} : memref<2x8x32xf32, #tpu.memory_space<vmem>>, vector<1x8x32xf32>,
    %c1_220 = arith.constant 1 : index
    %c0_221 = arith.constant 0 : index
    %c0_222 = arith.constant 0 : index
    %483 = vector.load %arg14[%c1_220, %c0_221, %c0_222] : memref<2x8x32xf32, #tpu.memory_space<vmem>>, vector<1x8x32xf32>
    %484 = vector.shape_cast %483 : vector<1x8x32xf32> to vector<8x32xf32>
    %485 = vector.shape_cast %479 : vector<8x32xf32> to vector<1x8x32xf32>
    tpu.vector_store %arg14[%c1_220, %c0_221, %c0_222], %485 {strides = array<i32>} : memref<2x8x32xf32, #tpu.memory_space<vmem>>, vector<1x8x32xf32>,
    %c2_i32_223 = arith.constant 2 : i32
    %c1_224 = arith.constant 1 : index
    %c0_225 = arith.constant 0 : index
    %c0_226 = arith.constant 0 : index
    %486 = vector.load %arg14[%c1_224, %c0_225, %c0_226] : memref<2x8x32xf32, #tpu.memory_space<vmem>>, vector<1x8x32xf32>
    %487 = vector.shape_cast %486 : vector<1x8x32xf32> to vector<8x32xf32>
    %488 = arith.index_cast %c2_i32_223 : i32 to index
    %c0_227 = arith.constant 0 : index
    %c0_228 = arith.constant 0 : index
    %489 = vector.load %arg13[%488, %c0_227, %c0_228] : memref<8x8x128xbf16, #tpu.memory_space<vmem>>, vector<1x8x128xbf16>
    %490 = vector.shape_cast %489 : vector<1x8x128xbf16> to vector<8x128xbf16>
    %491 = arith.extf %490 : vector<8x128xbf16> to vector<8x128xf32>
    %492 = arith.truncf %487 : vector<8x32xf32> to vector<8x32xbf16>
    %cst_229 = arith.constant dense<0.000000e+00> : vector<8x128xf32>
    %493 = tpu.matmul %492, %401, %cst_229 {dimension_numbers = #tpu.dot_dimension_numbers<[1], [0], [0], [1], [0, 0, 1, 1], [], []>} : vector<8x32xbf16>, vector<32x128xbf16>, vector<8x128xf32> -> vector<8x128xf32>
    %494 = arith.addf %491, %493 : vector<8x128xf32>
    %495 = vector.extract_strided_slice %494 {offsets = [0, 0], sizes = [8, 32], strides = [1, 1]} : vector<8x128xf32> to vector<8x32xf32>
    %496 = arith.negf %495 : vector<8x32xf32>
    %497 = math.exp %496 : vector<8x32xf32>
    %cst_230 = arith.constant 1.000000e+00 : f32
    %498 = vector.broadcast %cst_230 : f32 to vector<8x32xf32>
    %499 = arith.addf %498, %497 : vector<8x32xf32>
    %500 = arith.divf %498, %499 : vector<8x32xf32>
    %501 = vector.extract_strided_slice %494 {offsets = [0, 32], sizes = [8, 32], strides = [1, 1]} : vector<8x128xf32> to vector<8x32xf32>
    %502 = arith.negf %501 : vector<8x32xf32>
    %503 = math.exp %502 : vector<8x32xf32>
    %cst_231 = arith.constant 1.000000e+00 : f32
    %504 = vector.broadcast %cst_231 : f32 to vector<8x32xf32>
    %505 = arith.addf %504, %503 : vector<8x32xf32>
    %506 = arith.divf %504, %505 : vector<8x32xf32>
    %507 = vector.extract_strided_slice %494 {offsets = [0, 64], sizes = [8, 32], strides = [1, 1]} : vector<8x128xf32> to vector<8x32xf32>
    %508 = math.tanh %507 : vector<8x32xf32>
    %509 = vector.extract_strided_slice %494 {offsets = [0, 96], sizes = [8, 32], strides = [1, 1]} : vector<8x128xf32> to vector<8x32xf32>
    %510 = arith.negf %509 : vector<8x32xf32>
    %511 = math.exp %510 : vector<8x32xf32>
    %cst_232 = arith.constant 1.000000e+00 : f32
    %512 = vector.broadcast %cst_232 : f32 to vector<8x32xf32>
    %513 = arith.addf %512, %511 : vector<8x32xf32>
    %514 = arith.divf %512, %513 : vector<8x32xf32>
    %c1_233 = arith.constant 1 : index
    %c0_234 = arith.constant 0 : index
    %c0_235 = arith.constant 0 : index
    %515 = vector.load %arg15[%c1_233, %c0_234, %c0_235] : memref<2x8x32xf32, #tpu.memory_space<vmem>>, vector<1x8x32xf32>
    %516 = vector.shape_cast %515 : vector<1x8x32xf32> to vector<8x32xf32>
    %517 = arith.mulf %506, %516 : vector<8x32xf32>
    %518 = arith.mulf %500, %508 : vector<8x32xf32>
    %519 = arith.addf %517, %518 : vector<8x32xf32>
    %520 = math.tanh %519 : vector<8x32xf32>
    %521 = arith.mulf %514, %520 : vector<8x32xf32>
    %c1_236 = arith.constant 1 : index
    %c0_237 = arith.constant 0 : index
    %c0_238 = arith.constant 0 : index
    %522 = vector.load %arg15[%c1_236, %c0_237, %c0_238] : memref<2x8x32xf32, #tpu.memory_space<vmem>>, vector<1x8x32xf32>
    %523 = vector.shape_cast %522 : vector<1x8x32xf32> to vector<8x32xf32>
    %524 = vector.shape_cast %519 : vector<8x32xf32> to vector<1x8x32xf32>
    tpu.vector_store %arg15[%c1_236, %c0_237, %c0_238], %524 {strides = array<i32>} : memref<2x8x32xf32, #tpu.memory_space<vmem>>, vector<1x8x32xf32>,
    %c1_239 = arith.constant 1 : index
    %c0_240 = arith.constant 0 : index
    %c0_241 = arith.constant 0 : index
    %525 = vector.load %arg14[%c1_239, %c0_240, %c0_241] : memref<2x8x32xf32, #tpu.memory_space<vmem>>, vector<1x8x32xf32>
    %526 = vector.shape_cast %525 : vector<1x8x32xf32> to vector<8x32xf32>
    %527 = vector.shape_cast %521 : vector<8x32xf32> to vector<1x8x32xf32>
    tpu.vector_store %arg14[%c1_239, %c0_240, %c0_241], %527 {strides = array<i32>} : memref<2x8x32xf32, #tpu.memory_space<vmem>>, vector<1x8x32xf32>,
    %c3_i32_242 = arith.constant 3 : i32
    %c1_243 = arith.constant 1 : index
    %c0_244 = arith.constant 0 : index
    %c0_245 = arith.constant 0 : index
    %528 = vector.load %arg14[%c1_243, %c0_244, %c0_245] : memref<2x8x32xf32, #tpu.memory_space<vmem>>, vector<1x8x32xf32>
    %529 = vector.shape_cast %528 : vector<1x8x32xf32> to vector<8x32xf32>
    %530 = arith.index_cast %c3_i32_242 : i32 to index
    %c0_246 = arith.constant 0 : index
    %c0_247 = arith.constant 0 : index
    %531 = vector.load %arg13[%530, %c0_246, %c0_247] : memref<8x8x128xbf16, #tpu.memory_space<vmem>>, vector<1x8x128xbf16>
    %532 = vector.shape_cast %531 : vector<1x8x128xbf16> to vector<8x128xbf16>
    %533 = arith.extf %532 : vector<8x128xbf16> to vector<8x128xf32>
    %534 = arith.truncf %529 : vector<8x32xf32> to vector<8x32xbf16>
    %cst_248 = arith.constant dense<0.000000e+00> : vector<8x128xf32>
    %535 = tpu.matmul %534, %401, %cst_248 {dimension_numbers = #tpu.dot_dimension_numbers<[1], [0], [0], [1], [0, 0, 1, 1], [], []>} : vector<8x32xbf16>, vector<32x128xbf16>, vector<8x128xf32> -> vector<8x128xf32>
    %536 = arith.addf %533, %535 : vector<8x128xf32>
    %537 = vector.extract_strided_slice %536 {offsets = [0, 0], sizes = [8, 32], strides = [1, 1]} : vector<8x128xf32> to vector<8x32xf32>
    %538 = arith.negf %537 : vector<8x32xf32>
    %539 = math.exp %538 : vector<8x32xf32>
    %cst_249 = arith.constant 1.000000e+00 : f32
    %540 = vector.broadcast %cst_249 : f32 to vector<8x32xf32>
    %541 = arith.addf %540, %539 : vector<8x32xf32>
    %542 = arith.divf %540, %541 : vector<8x32xf32>
    %543 = vector.extract_strided_slice %536 {offsets = [0, 32], sizes = [8, 32], strides = [1, 1]} : vector<8x128xf32> to vector<8x32xf32>
    %544 = arith.negf %543 : vector<8x32xf32>
    %545 = math.exp %544 : vector<8x32xf32>
    %cst_250 = arith.constant 1.000000e+00 : f32
    %546 = vector.broadcast %cst_250 : f32 to vector<8x32xf32>
    %547 = arith.addf %546, %545 : vector<8x32xf32>
    %548 = arith.divf %546, %547 : vector<8x32xf32>
    %549 = vector.extract_strided_slice %536 {offsets = [0, 64], sizes = [8, 32], strides = [1, 1]} : vector<8x128xf32> to vector<8x32xf32>
    %550 = math.tanh %549 : vector<8x32xf32>
    %551 = vector.extract_strided_slice %536 {offsets = [0, 96], sizes = [8, 32], strides = [1, 1]} : vector<8x128xf32> to vector<8x32xf32>
    %552 = arith.negf %551 : vector<8x32xf32>
    %553 = math.exp %552 : vector<8x32xf32>
    %cst_251 = arith.constant 1.000000e+00 : f32
    %554 = vector.broadcast %cst_251 : f32 to vector<8x32xf32>
    %555 = arith.addf %554, %553 : vector<8x32xf32>
    %556 = arith.divf %554, %555 : vector<8x32xf32>
    %c1_252 = arith.constant 1 : index
    %c0_253 = arith.constant 0 : index
    %c0_254 = arith.constant 0 : index
    %557 = vector.load %arg15[%c1_252, %c0_253, %c0_254] : memref<2x8x32xf32, #tpu.memory_space<vmem>>, vector<1x8x32xf32>
    %558 = vector.shape_cast %557 : vector<1x8x32xf32> to vector<8x32xf32>
    %559 = arith.mulf %548, %558 : vector<8x32xf32>
    %560 = arith.mulf %542, %550 : vector<8x32xf32>
    %561 = arith.addf %559, %560 : vector<8x32xf32>
    %562 = math.tanh %561 : vector<8x32xf32>
    %563 = arith.mulf %556, %562 : vector<8x32xf32>
    %c1_255 = arith.constant 1 : index
    %c0_256 = arith.constant 0 : index
    %c0_257 = arith.constant 0 : index
    %564 = vector.load %arg15[%c1_255, %c0_256, %c0_257] : memref<2x8x32xf32, #tpu.memory_space<vmem>>, vector<1x8x32xf32>
    %565 = vector.shape_cast %564 : vector<1x8x32xf32> to vector<8x32xf32>
    %566 = vector.shape_cast %561 : vector<8x32xf32> to vector<1x8x32xf32>
    tpu.vector_store %arg15[%c1_255, %c0_256, %c0_257], %566 {strides = array<i32>} : memref<2x8x32xf32, #tpu.memory_space<vmem>>, vector<1x8x32xf32>,
    %c1_258 = arith.constant 1 : index
    %c0_259 = arith.constant 0 : index
    %c0_260 = arith.constant 0 : index
    %567 = vector.load %arg14[%c1_258, %c0_259, %c0_260] : memref<2x8x32xf32, #tpu.memory_space<vmem>>, vector<1x8x32xf32>
    %568 = vector.shape_cast %567 : vector<1x8x32xf32> to vector<8x32xf32>
    %569 = vector.shape_cast %563 : vector<8x32xf32> to vector<1x8x32xf32>
    tpu.vector_store %arg14[%c1_258, %c0_259, %c0_260], %569 {strides = array<i32>} : memref<2x8x32xf32, #tpu.memory_space<vmem>>, vector<1x8x32xf32>,
    %c4_i32_261 = arith.constant 4 : i32
    %c1_262 = arith.constant 1 : index
    %c0_263 = arith.constant 0 : index
    %c0_264 = arith.constant 0 : index
    %570 = vector.load %arg14[%c1_262, %c0_263, %c0_264] : memref<2x8x32xf32, #tpu.memory_space<vmem>>, vector<1x8x32xf32>
    %571 = vector.shape_cast %570 : vector<1x8x32xf32> to vector<8x32xf32>
    %572 = arith.index_cast %c4_i32_261 : i32 to index
    %c0_265 = arith.constant 0 : index
    %c0_266 = arith.constant 0 : index
    %573 = vector.load %arg13[%572, %c0_265, %c0_266] : memref<8x8x128xbf16, #tpu.memory_space<vmem>>, vector<1x8x128xbf16>
    %574 = vector.shape_cast %573 : vector<1x8x128xbf16> to vector<8x128xbf16>
    %575 = arith.extf %574 : vector<8x128xbf16> to vector<8x128xf32>
    %576 = arith.truncf %571 : vector<8x32xf32> to vector<8x32xbf16>
    %cst_267 = arith.constant dense<0.000000e+00> : vector<8x128xf32>
    %577 = tpu.matmul %576, %401, %cst_267 {dimension_numbers = #tpu.dot_dimension_numbers<[1], [0], [0], [1], [0, 0, 1, 1], [], []>} : vector<8x32xbf16>, vector<32x128xbf16>, vector<8x128xf32> -> vector<8x128xf32>
    %578 = arith.addf %575, %577 : vector<8x128xf32>
    %579 = vector.extract_strided_slice %578 {offsets = [0, 0], sizes = [8, 32], strides = [1, 1]} : vector<8x128xf32> to vector<8x32xf32>
    %580 = arith.negf %579 : vector<8x32xf32>
    %581 = math.exp %580 : vector<8x32xf32>
    %cst_268 = arith.constant 1.000000e+00 : f32
    %582 = vector.broadcast %cst_268 : f32 to vector<8x32xf32>
    %583 = arith.addf %582, %581 : vector<8x32xf32>
    %584 = arith.divf %582, %583 : vector<8x32xf32>
    %585 = vector.extract_strided_slice %578 {offsets = [0, 32], sizes = [8, 32], strides = [1, 1]} : vector<8x128xf32> to vector<8x32xf32>
    %586 = arith.negf %585 : vector<8x32xf32>
    %587 = math.exp %586 : vector<8x32xf32>
    %cst_269 = arith.constant 1.000000e+00 : f32
    %588 = vector.broadcast %cst_269 : f32 to vector<8x32xf32>
    %589 = arith.addf %588, %587 : vector<8x32xf32>
    %590 = arith.divf %588, %589 : vector<8x32xf32>
    %591 = vector.extract_strided_slice %578 {offsets = [0, 64], sizes = [8, 32], strides = [1, 1]} : vector<8x128xf32> to vector<8x32xf32>
    %592 = math.tanh %591 : vector<8x32xf32>
    %593 = vector.extract_strided_slice %578 {offsets = [0, 96], sizes = [8, 32], strides = [1, 1]} : vector<8x128xf32> to vector<8x32xf32>
    %594 = arith.negf %593 : vector<8x32xf32>
    %595 = math.exp %594 : vector<8x32xf32>
    %cst_270 = arith.constant 1.000000e+00 : f32
    %596 = vector.broadcast %cst_270 : f32 to vector<8x32xf32>
    %597 = arith.addf %596, %595 : vector<8x32xf32>
    %598 = arith.divf %596, %597 : vector<8x32xf32>
    %c1_271 = arith.constant 1 : index
    %c0_272 = arith.constant 0 : index
    %c0_273 = arith.constant 0 : index
    %599 = vector.load %arg15[%c1_271, %c0_272, %c0_273] : memref<2x8x32xf32, #tpu.memory_space<vmem>>, vector<1x8x32xf32>
    %600 = vector.shape_cast %599 : vector<1x8x32xf32> to vector<8x32xf32>
    %601 = arith.mulf %590, %600 : vector<8x32xf32>
    %602 = arith.mulf %584, %592 : vector<8x32xf32>
    %603 = arith.addf %601, %602 : vector<8x32xf32>
    %604 = math.tanh %603 : vector<8x32xf32>
    %605 = arith.mulf %598, %604 : vector<8x32xf32>
    %c1_274 = arith.constant 1 : index
    %c0_275 = arith.constant 0 : index
    %c0_276 = arith.constant 0 : index
    %606 = vector.load %arg15[%c1_274, %c0_275, %c0_276] : memref<2x8x32xf32, #tpu.memory_space<vmem>>, vector<1x8x32xf32>
    %607 = vector.shape_cast %606 : vector<1x8x32xf32> to vector<8x32xf32>
    %608 = vector.shape_cast %603 : vector<8x32xf32> to vector<1x8x32xf32>
    tpu.vector_store %arg15[%c1_274, %c0_275, %c0_276], %608 {strides = array<i32>} : memref<2x8x32xf32, #tpu.memory_space<vmem>>, vector<1x8x32xf32>,
    %c1_277 = arith.constant 1 : index
    %c0_278 = arith.constant 0 : index
    %c0_279 = arith.constant 0 : index
    %609 = vector.load %arg14[%c1_277, %c0_278, %c0_279] : memref<2x8x32xf32, #tpu.memory_space<vmem>>, vector<1x8x32xf32>
    %610 = vector.shape_cast %609 : vector<1x8x32xf32> to vector<8x32xf32>
    %611 = vector.shape_cast %605 : vector<8x32xf32> to vector<1x8x32xf32>
    tpu.vector_store %arg14[%c1_277, %c0_278, %c0_279], %611 {strides = array<i32>} : memref<2x8x32xf32, #tpu.memory_space<vmem>>, vector<1x8x32xf32>,
    %c5_i32_280 = arith.constant 5 : i32
    %c1_281 = arith.constant 1 : index
    %c0_282 = arith.constant 0 : index
    %c0_283 = arith.constant 0 : index
    %612 = vector.load %arg14[%c1_281, %c0_282, %c0_283] : memref<2x8x32xf32, #tpu.memory_space<vmem>>, vector<1x8x32xf32>
    %613 = vector.shape_cast %612 : vector<1x8x32xf32> to vector<8x32xf32>
    %614 = arith.index_cast %c5_i32_280 : i32 to index
    %c0_284 = arith.constant 0 : index
    %c0_285 = arith.constant 0 : index
    %615 = vector.load %arg13[%614, %c0_284, %c0_285] : memref<8x8x128xbf16, #tpu.memory_space<vmem>>, vector<1x8x128xbf16>
    %616 = vector.shape_cast %615 : vector<1x8x128xbf16> to vector<8x128xbf16>
    %617 = arith.extf %616 : vector<8x128xbf16> to vector<8x128xf32>
    %618 = arith.truncf %613 : vector<8x32xf32> to vector<8x32xbf16>
    %cst_286 = arith.constant dense<0.000000e+00> : vector<8x128xf32>
    %619 = tpu.matmul %618, %401, %cst_286 {dimension_numbers = #tpu.dot_dimension_numbers<[1], [0], [0], [1], [0, 0, 1, 1], [], []>} : vector<8x32xbf16>, vector<32x128xbf16>, vector<8x128xf32> -> vector<8x128xf32>
    %620 = arith.addf %617, %619 : vector<8x128xf32>
    %621 = vector.extract_strided_slice %620 {offsets = [0, 0], sizes = [8, 32], strides = [1, 1]} : vector<8x128xf32> to vector<8x32xf32>
    %622 = arith.negf %621 : vector<8x32xf32>
    %623 = math.exp %622 : vector<8x32xf32>
    %cst_287 = arith.constant 1.000000e+00 : f32
    %624 = vector.broadcast %cst_287 : f32 to vector<8x32xf32>
    %625 = arith.addf %624, %623 : vector<8x32xf32>
    %626 = arith.divf %624, %625 : vector<8x32xf32>
    %627 = vector.extract_strided_slice %620 {offsets = [0, 32], sizes = [8, 32], strides = [1, 1]} : vector<8x128xf32> to vector<8x32xf32>
    %628 = arith.negf %627 : vector<8x32xf32>
    %629 = math.exp %628 : vector<8x32xf32>
    %cst_288 = arith.constant 1.000000e+00 : f32
    %630 = vector.broadcast %cst_288 : f32 to vector<8x32xf32>
    %631 = arith.addf %630, %629 : vector<8x32xf32>
    %632 = arith.divf %630, %631 : vector<8x32xf32>
    %633 = vector.extract_strided_slice %620 {offsets = [0, 64], sizes = [8, 32], strides = [1, 1]} : vector<8x128xf32> to vector<8x32xf32>
    %634 = math.tanh %633 : vector<8x32xf32>
    %635 = vector.extract_strided_slice %620 {offsets = [0, 96], sizes = [8, 32], strides = [1, 1]} : vector<8x128xf32> to vector<8x32xf32>
    %636 = arith.negf %635 : vector<8x32xf32>
    %637 = math.exp %636 : vector<8x32xf32>
    %cst_289 = arith.constant 1.000000e+00 : f32
    %638 = vector.broadcast %cst_289 : f32 to vector<8x32xf32>
    %639 = arith.addf %638, %637 : vector<8x32xf32>
    %640 = arith.divf %638, %639 : vector<8x32xf32>
    %c1_290 = arith.constant 1 : index
    %c0_291 = arith.constant 0 : index
    %c0_292 = arith.constant 0 : index
    %641 = vector.load %arg15[%c1_290, %c0_291, %c0_292] : memref<2x8x32xf32, #tpu.memory_space<vmem>>, vector<1x8x32xf32>
    %642 = vector.shape_cast %641 : vector<1x8x32xf32> to vector<8x32xf32>
    %643 = arith.mulf %632, %642 : vector<8x32xf32>
    %644 = arith.mulf %626, %634 : vector<8x32xf32>
    %645 = arith.addf %643, %644 : vector<8x32xf32>
    %646 = math.tanh %645 : vector<8x32xf32>
    %647 = arith.mulf %640, %646 : vector<8x32xf32>
    %c1_293 = arith.constant 1 : index
    %c0_294 = arith.constant 0 : index
    %c0_295 = arith.constant 0 : index
    %648 = vector.load %arg15[%c1_293, %c0_294, %c0_295] : memref<2x8x32xf32, #tpu.memory_space<vmem>>, vector<1x8x32xf32>
    %649 = vector.shape_cast %648 : vector<1x8x32xf32> to vector<8x32xf32>
    %650 = vector.shape_cast %645 : vector<8x32xf32> to vector<1x8x32xf32>
    tpu.vector_store %arg15[%c1_293, %c0_294, %c0_295], %650 {strides = array<i32>} : memref<2x8x32xf32, #tpu.memory_space<vmem>>, vector<1x8x32xf32>,
    %c1_296 = arith.constant 1 : index
    %c0_297 = arith.constant 0 : index
    %c0_298 = arith.constant 0 : index
    %651 = vector.load %arg14[%c1_296, %c0_297, %c0_298] : memref<2x8x32xf32, #tpu.memory_space<vmem>>, vector<1x8x32xf32>
    %652 = vector.shape_cast %651 : vector<1x8x32xf32> to vector<8x32xf32>
    %653 = vector.shape_cast %647 : vector<8x32xf32> to vector<1x8x32xf32>
    tpu.vector_store %arg14[%c1_296, %c0_297, %c0_298], %653 {strides = array<i32>} : memref<2x8x32xf32, #tpu.memory_space<vmem>>, vector<1x8x32xf32>,
    %c6_i32_299 = arith.constant 6 : i32
    %c1_300 = arith.constant 1 : index
    %c0_301 = arith.constant 0 : index
    %c0_302 = arith.constant 0 : index
    %654 = vector.load %arg14[%c1_300, %c0_301, %c0_302] : memref<2x8x32xf32, #tpu.memory_space<vmem>>, vector<1x8x32xf32>
    %655 = vector.shape_cast %654 : vector<1x8x32xf32> to vector<8x32xf32>
    %656 = arith.index_cast %c6_i32_299 : i32 to index
    %c0_303 = arith.constant 0 : index
    %c0_304 = arith.constant 0 : index
    %657 = vector.load %arg13[%656, %c0_303, %c0_304] : memref<8x8x128xbf16, #tpu.memory_space<vmem>>, vector<1x8x128xbf16>
    %658 = vector.shape_cast %657 : vector<1x8x128xbf16> to vector<8x128xbf16>
    %659 = arith.extf %658 : vector<8x128xbf16> to vector<8x128xf32>
    %660 = arith.truncf %655 : vector<8x32xf32> to vector<8x32xbf16>
    %cst_305 = arith.constant dense<0.000000e+00> : vector<8x128xf32>
    %661 = tpu.matmul %660, %401, %cst_305 {dimension_numbers = #tpu.dot_dimension_numbers<[1], [0], [0], [1], [0, 0, 1, 1], [], []>} : vector<8x32xbf16>, vector<32x128xbf16>, vector<8x128xf32> -> vector<8x128xf32>
    %662 = arith.addf %659, %661 : vector<8x128xf32>
    %663 = vector.extract_strided_slice %662 {offsets = [0, 0], sizes = [8, 32], strides = [1, 1]} : vector<8x128xf32> to vector<8x32xf32>
    %664 = arith.negf %663 : vector<8x32xf32>
    %665 = math.exp %664 : vector<8x32xf32>
    %cst_306 = arith.constant 1.000000e+00 : f32
    %666 = vector.broadcast %cst_306 : f32 to vector<8x32xf32>
    %667 = arith.addf %666, %665 : vector<8x32xf32>
    %668 = arith.divf %666, %667 : vector<8x32xf32>
    %669 = vector.extract_strided_slice %662 {offsets = [0, 32], sizes = [8, 32], strides = [1, 1]} : vector<8x128xf32> to vector<8x32xf32>
    %670 = arith.negf %669 : vector<8x32xf32>
    %671 = math.exp %670 : vector<8x32xf32>
    %cst_307 = arith.constant 1.000000e+00 : f32
    %672 = vector.broadcast %cst_307 : f32 to vector<8x32xf32>
    %673 = arith.addf %672, %671 : vector<8x32xf32>
    %674 = arith.divf %672, %673 : vector<8x32xf32>
    %675 = vector.extract_strided_slice %662 {offsets = [0, 64], sizes = [8, 32], strides = [1, 1]} : vector<8x128xf32> to vector<8x32xf32>
    %676 = math.tanh %675 : vector<8x32xf32>
    %677 = vector.extract_strided_slice %662 {offsets = [0, 96], sizes = [8, 32], strides = [1, 1]} : vector<8x128xf32> to vector<8x32xf32>
    %678 = arith.negf %677 : vector<8x32xf32>
    %679 = math.exp %678 : vector<8x32xf32>
    %cst_308 = arith.constant 1.000000e+00 : f32
    %680 = vector.broadcast %cst_308 : f32 to vector<8x32xf32>
    %681 = arith.addf %680, %679 : vector<8x32xf32>
    %682 = arith.divf %680, %681 : vector<8x32xf32>
    %c1_309 = arith.constant 1 : index
    %c0_310 = arith.constant 0 : index
    %c0_311 = arith.constant 0 : index
    %683 = vector.load %arg15[%c1_309, %c0_310, %c0_311] : memref<2x8x32xf32, #tpu.memory_space<vmem>>, vector<1x8x32xf32>
    %684 = vector.shape_cast %683 : vector<1x8x32xf32> to vector<8x32xf32>
    %685 = arith.mulf %674, %684 : vector<8x32xf32>
    %686 = arith.mulf %668, %676 : vector<8x32xf32>
    %687 = arith.addf %685, %686 : vector<8x32xf32>
    %688 = math.tanh %687 : vector<8x32xf32>
    %689 = arith.mulf %682, %688 : vector<8x32xf32>
    %c1_312 = arith.constant 1 : index
    %c0_313 = arith.constant 0 : index
    %c0_314 = arith.constant 0 : index
    %690 = vector.load %arg15[%c1_312, %c0_313, %c0_314] : memref<2x8x32xf32, #tpu.memory_space<vmem>>, vector<1x8x32xf32>
    %691 = vector.shape_cast %690 : vector<1x8x32xf32> to vector<8x32xf32>
    %692 = vector.shape_cast %687 : vector<8x32xf32> to vector<1x8x32xf32>
    tpu.vector_store %arg15[%c1_312, %c0_313, %c0_314], %692 {strides = array<i32>} : memref<2x8x32xf32, #tpu.memory_space<vmem>>, vector<1x8x32xf32>,
    %c1_315 = arith.constant 1 : index
    %c0_316 = arith.constant 0 : index
    %c0_317 = arith.constant 0 : index
    %693 = vector.load %arg14[%c1_315, %c0_316, %c0_317] : memref<2x8x32xf32, #tpu.memory_space<vmem>>, vector<1x8x32xf32>
    %694 = vector.shape_cast %693 : vector<1x8x32xf32> to vector<8x32xf32>
    %695 = vector.shape_cast %689 : vector<8x32xf32> to vector<1x8x32xf32>
    tpu.vector_store %arg14[%c1_315, %c0_316, %c0_317], %695 {strides = array<i32>} : memref<2x8x32xf32, #tpu.memory_space<vmem>>, vector<1x8x32xf32>,
    %c7_i32_318 = arith.constant 7 : i32
    %c1_319 = arith.constant 1 : index
    %c0_320 = arith.constant 0 : index
    %c0_321 = arith.constant 0 : index
    %696 = vector.load %arg14[%c1_319, %c0_320, %c0_321] : memref<2x8x32xf32, #tpu.memory_space<vmem>>, vector<1x8x32xf32>
    %697 = vector.shape_cast %696 : vector<1x8x32xf32> to vector<8x32xf32>
    %698 = arith.index_cast %c7_i32_318 : i32 to index
    %c0_322 = arith.constant 0 : index
    %c0_323 = arith.constant 0 : index
    %699 = vector.load %arg13[%698, %c0_322, %c0_323] : memref<8x8x128xbf16, #tpu.memory_space<vmem>>, vector<1x8x128xbf16>
    %700 = vector.shape_cast %699 : vector<1x8x128xbf16> to vector<8x128xbf16>
    %701 = arith.extf %700 : vector<8x128xbf16> to vector<8x128xf32>
    %702 = arith.truncf %697 : vector<8x32xf32> to vector<8x32xbf16>
    %cst_324 = arith.constant dense<0.000000e+00> : vector<8x128xf32>
    %703 = tpu.matmul %702, %401, %cst_324 {dimension_numbers = #tpu.dot_dimension_numbers<[1], [0], [0], [1], [0, 0, 1, 1], [], []>} : vector<8x32xbf16>, vector<32x128xbf16>, vector<8x128xf32> -> vector<8x128xf32>
    %704 = arith.addf %701, %703 : vector<8x128xf32>
    %705 = vector.extract_strided_slice %704 {offsets = [0, 0], sizes = [8, 32], strides = [1, 1]} : vector<8x128xf32> to vector<8x32xf32>
    %706 = arith.negf %705 : vector<8x32xf32>
    %707 = math.exp %706 : vector<8x32xf32>
    %cst_325 = arith.constant 1.000000e+00 : f32
    %708 = vector.broadcast %cst_325 : f32 to vector<8x32xf32>
    %709 = arith.addf %708, %707 : vector<8x32xf32>
    %710 = arith.divf %708, %709 : vector<8x32xf32>
    %711 = vector.extract_strided_slice %704 {offsets = [0, 32], sizes = [8, 32], strides = [1, 1]} : vector<8x128xf32> to vector<8x32xf32>
    %712 = arith.negf %711 : vector<8x32xf32>
    %713 = math.exp %712 : vector<8x32xf32>
    %cst_326 = arith.constant 1.000000e+00 : f32
    %714 = vector.broadcast %cst_326 : f32 to vector<8x32xf32>
    %715 = arith.addf %714, %713 : vector<8x32xf32>
    %716 = arith.divf %714, %715 : vector<8x32xf32>
    %717 = vector.extract_strided_slice %704 {offsets = [0, 64], sizes = [8, 32], strides = [1, 1]} : vector<8x128xf32> to vector<8x32xf32>
    %718 = math.tanh %717 : vector<8x32xf32>
    %719 = vector.extract_strided_slice %704 {offsets = [0, 96], sizes = [8, 32], strides = [1, 1]} : vector<8x128xf32> to vector<8x32xf32>
    %720 = arith.negf %719 : vector<8x32xf32>
    %721 = math.exp %720 : vector<8x32xf32>
    %cst_327 = arith.constant 1.000000e+00 : f32
    %722 = vector.broadcast %cst_327 : f32 to vector<8x32xf32>
    %723 = arith.addf %722, %721 : vector<8x32xf32>
    %724 = arith.divf %722, %723 : vector<8x32xf32>
    %c1_328 = arith.constant 1 : index
    %c0_329 = arith.constant 0 : index
    %c0_330 = arith.constant 0 : index
    %725 = vector.load %arg15[%c1_328, %c0_329, %c0_330] : memref<2x8x32xf32, #tpu.memory_space<vmem>>, vector<1x8x32xf32>
    %726 = vector.shape_cast %725 : vector<1x8x32xf32> to vector<8x32xf32>
    %727 = arith.mulf %716, %726 : vector<8x32xf32>
    %728 = arith.mulf %710, %718 : vector<8x32xf32>
    %729 = arith.addf %727, %728 : vector<8x32xf32>
    %730 = math.tanh %729 : vector<8x32xf32>
    %731 = arith.mulf %724, %730 : vector<8x32xf32>
    %c1_331 = arith.constant 1 : index
    %c0_332 = arith.constant 0 : index
    %c0_333 = arith.constant 0 : index
    %732 = vector.load %arg15[%c1_331, %c0_332, %c0_333] : memref<2x8x32xf32, #tpu.memory_space<vmem>>, vector<1x8x32xf32>
    %733 = vector.shape_cast %732 : vector<1x8x32xf32> to vector<8x32xf32>
    %734 = vector.shape_cast %729 : vector<8x32xf32> to vector<1x8x32xf32>
    tpu.vector_store %arg15[%c1_331, %c0_332, %c0_333], %734 {strides = array<i32>} : memref<2x8x32xf32, #tpu.memory_space<vmem>>, vector<1x8x32xf32>,
    %c1_334 = arith.constant 1 : index
    %c0_335 = arith.constant 0 : index
    %c0_336 = arith.constant 0 : index
    %735 = vector.load %arg14[%c1_334, %c0_335, %c0_336] : memref<2x8x32xf32, #tpu.memory_space<vmem>>, vector<1x8x32xf32>
    %736 = vector.shape_cast %735 : vector<1x8x32xf32> to vector<8x32xf32>
    %737 = vector.shape_cast %731 : vector<8x32xf32> to vector<1x8x32xf32>
    tpu.vector_store %arg14[%c1_334, %c0_335, %c0_336], %737 {strides = array<i32>} : memref<2x8x32xf32, #tpu.memory_space<vmem>>, vector<1x8x32xf32>,
    %c8_i32_337 = arith.constant 8 : i32
    %c0_i32_338 = arith.constant 0 : i32
    %738 = arith.cmpi eq, %arg1, %c0_i32_338 : i32
    %739 = arith.extui %738 : i1 to i32
    %c0_i32_339 = arith.constant 0 : i32
    %740 = arith.cmpi ne, %739, %c0_i32_339 : i32
    scf.if %740 {
      %c0_340 = arith.constant 0 : index
      %c0_341 = arith.constant 0 : index
      %741 = vector.load %arg9[%c0_340, %c0_341] : memref<32x128xbf16, #tpu.memory_space<vmem>>, vector<32x128xbf16>
      %c0_342 = arith.constant 0 : index
      %c0_343 = arith.constant 0 : index
      %742 = vector.load %arg10[%c0_342, %c0_343] : memref<1x128xf32, #tpu.memory_space<vmem>>, vector<1x128xf32>
      %c1_344 = arith.constant 1 : index
      %c0_345 = arith.constant 0 : index
      %c0_346 = arith.constant 0 : index
      %743 = vector.load %arg14[%c1_344, %c0_345, %c0_346] : memref<2x8x32xf32, #tpu.memory_space<vmem>>, vector<1x8x32xf32>
      %744 = vector.shape_cast %743 : vector<1x8x32xf32> to vector<8x32xf32>
      %745 = arith.truncf %744 : vector<8x32xf32> to vector<8x32xbf16>
      %cst_347 = arith.constant dense<0.000000e+00> : vector<8x128xf32>
      %746 = tpu.matmul %745, %741, %cst_347 {dimension_numbers = #tpu.dot_dimension_numbers<[1], [0], [0], [1], [0, 0, 1, 1], [], []>} : vector<8x32xbf16>, vector<32x128xbf16>, vector<8x128xf32> -> vector<8x128xf32>
      %747 = vector.broadcast %742 : vector<1x128xf32> to vector<8x128xf32>
      %748 = arith.addf %746, %747 : vector<8x128xf32>
      %c0_348 = arith.constant 0 : index
      %c0_349 = arith.constant 0 : index
      %749 = vector.load %arg11[%c0_348, %c0_349] : memref<8x128xf32, #tpu.memory_space<vmem>>, vector<8x128xf32>
      tpu.vector_store %arg11[%c0_348, %c0_349], %748 {strides = array<i32>} : memref<8x128xf32, #tpu.memory_space<vmem>>, vector<8x128xf32>,
    } else {
    }
    return
  }
  func.func @transform_0(%arg0: i32, %arg1: i32) -> (i32, i32, i32) {
    %c0_i32 = arith.constant 0 : i32
    %c0_i32_0 = arith.constant 0 : i32
    return %arg1, %arg0, %c0_i32 : i32, i32, i32
  }
  func.func @transform_1(%arg0: i32, %arg1: i32) -> (i32, i32) {
    %c0_i32 = arith.constant 0 : i32
    %c0_i32_0 = arith.constant 0 : i32
    %c0_i32_1 = arith.constant 0 : i32
    return %c0_i32, %c0_i32_0 : i32, i32
  }
  func.func @transform_2(%arg0: i32, %arg1: i32) -> (i32, i32) {
    %c0_i32 = arith.constant 0 : i32
    %c0_i32_0 = arith.constant 0 : i32
    %c0_i32_1 = arith.constant 0 : i32
    return %c0_i32, %c0_i32_0 : i32, i32
  }
  func.func @transform_3(%arg0: i32, %arg1: i32) -> (i32, i32) {
    %c0_i32 = arith.constant 0 : i32
    %c0_i32_0 = arith.constant 0 : i32
    %c0_i32_1 = arith.constant 0 : i32
    return %c0_i32, %c0_i32_0 : i32, i32
  }
  func.func @transform_4(%arg0: i32, %arg1: i32) -> (i32, i32) {
    %c0_i32 = arith.constant 0 : i32
    %c0_i32_0 = arith.constant 0 : i32
    %c0_i32_1 = arith.constant 0 : i32
    return %c0_i32, %c0_i32_0 : i32, i32
  }
  func.func @transform_5(%arg0: i32, %arg1: i32) -> (i32, i32) {
    %c0_i32 = arith.constant 0 : i32
    %c0_i32_0 = arith.constant 0 : i32
    %c0_i32_1 = arith.constant 0 : i32
    return %c0_i32, %c0_i32_0 : i32, i32
  }
  func.func @transform_6(%arg0: i32, %arg1: i32) -> (i32, i32) {
    %c0_i32 = arith.constant 0 : i32
    %c0_i32_0 = arith.constant 0 : i32
    %c0_i32_1 = arith.constant 0 : i32
    return %c0_i32, %c0_i32_0 : i32, i32
  }
  func.func @transform_7(%arg0: i32, %arg1: i32) -> (i32, i32) {
    %c0_i32 = arith.constant 0 : i32
    %c0_i32_0 = arith.constant 0 : i32
    %c0_i32_1 = arith.constant 0 : i32
    return %c0_i32, %c0_i32_0 : i32, i32
  }
  func.func @transform_8(%arg0: i32, %arg1: i32) -> (i32, i32) {
    %c0_i32 = arith.constant 0 : i32
    %c0_i32_0 = arith.constant 0 : i32
    %c0_i32_1 = arith.constant 0 : i32
    return %c0_i32, %c0_i32_0 : i32, i32
  }
  func.func @transform_9(%arg0: i32, %arg1: i32) -> (i32, i32) {
    %c0_i32 = arith.constant 0 : i32
    %c0_i32_0 = arith.constant 0 : i32
    return %arg0, %c0_i32 : i32, i32
  }
}

</mosaic_0001>

<llo_original>
// kernel: tpu_custom_call.1
$region0: #{tpu_custom_call.1}
  #allocation0 [shape = 'u32[]', space=smem, size = 0x4, offset = 0x4, fixed_abs, tag = 'smem constant byte address 0x4 - core index']
  #allocation1 [shape = 'u32[144,128]{1,0:T(1,128)}', space=vmem, size = 0x12000, scoped, tag = 'internal scratch']
  #allocation2 [shape = 'bf16[8,8,32]{2,1,0:T(8,128)(2,1)}', space=vmem, size = 0x4000, scoped, tag = 'scratch operand']
  #allocation3 [shape = 'bf16[8,8,128]{2,1,0:T(8,128)(2,1)}', space=vmem, size = 0x4000, scoped, tag = 'scratch operand']
  #allocation4 [shape = 'f32[2,8,32]{2,1,0:T(8,128)}', space=vmem, size = 0x2000, scoped, tag = 'scratch operand']
  #allocation5 [shape = 'f32[2,8,32]{2,1,0:T(8,128)}', space=vmem, size = 0x2000, scoped, tag = 'scratch operand']
  %s0 = inlined_call_operand.hbm [shape: f32[8,8,128], index: 0, kind: input, shape index: {}]
  %s1 = inlined_call_operand.hbm [shape: bf16[128,128], index: 1, kind: input, shape index: {}]
  %s2 = inlined_call_operand.hbm [shape: bf16[32,128], index: 2, kind: input, shape index: {}]
  %s3 = inlined_call_operand.vmem [shape: f32[1,128], index: 3, kind: input, shape index: {}]
  %s4 = inlined_call_operand.hbm [shape: bf16[32,128], index: 4, kind: input, shape index: {}]
  %s5 = inlined_call_operand.hbm [shape: bf16[32,128], index: 5, kind: input, shape index: {}]
  %s6 = inlined_call_operand.vmem [shape: f32[1,128], index: 6, kind: input, shape index: {}]
  %s7 = inlined_call_operand.hbm [shape: bf16[32,128], index: 7, kind: input, shape index: {}]
  %s8 = inlined_call_operand.vmem [shape: f32[1,128], index: 8, kind: input, shape index: {}]
  %s9 = inlined_call_operand.hbm [shape: f32[8,128], index: 9, kind: output, shape index: {}]
  %s10 = sld [smem:[#allocation0]]
  $region78: #{tpu_custom_call.1} parent=0
    _
  %s12 = ssub.s32 1, %s10
  %s13 = scalar_select 0, %s12, %s10
  $region1: #{tpu_custom_call.1} parent=0
    #allocation6 [shape = 'u8[32768]{0}', space=vmem, size = 0x8000, scoped, tag = 'input window, operand 0, single buffered']
    #allocation7 [shape = 's32[1]{0}', space=sflag, size = 0x4, scoped, tag = 'scoped memory for tpu_custom_call.1']
    #allocation8 [shape = 's32[1]{0}', space=sflag, size = 0x4, scoped, tag = 'scoped memory for tpu_custom_call.1']
    #allocation9 [shape = 'u8[32768]{0}', space=vmem, size = 0x8000, scoped, tag = 'input window, operand 1, single buffered']
    #allocation10 [shape = 's32[1]{0}', space=sflag, size = 0x4, scoped, tag = 'scoped memory for tpu_custom_call.1']
    #allocation11 [shape = 'u8[8192]{0}', space=vmem, size = 0x2000, scoped, tag = 'input window, operand 2, single buffered']
    #allocation12 [shape = 'u8[8192]{0}', space=vmem, size = 0x2000, scoped, tag = 'input window, operand 4, single buffered']
    #allocation13 [shape = 's32[1]{0}', space=sflag, size = 0x4, scoped, tag = 'scoped memory for tpu_custom_call.1']
    #allocation14 [shape = 'u8[8192]{0}', space=vmem, size = 0x2000, scoped, tag = 'input window, operand 5, single buffered']
    #allocation15 [shape = 'u8[8192]{0}', space=vmem, size = 0x2000, scoped, tag = 'input window, operand 7, single buffered']
    #allocation16 [shape = 's32[1]{0}', space=sflag, size = 0x4, scoped, tag = 'scoped memory for tpu_custom_call.1']
    #allocation17 [shape = 'u8[4096]{0}', space=vmem, size = 0x1000, scoped, tag = 'output window, operand 0, single buffered']
    %14 = vsyncpa [#allocation7], 0
    %15 = vsyncpa [#allocation10], 0
    %16 = vsyncpa [#allocation13], 0
    %17 = vsyncpa [#allocation16], 0
    %18 = vsyncpa [#allocation8], 0
    // Predicated region
    $region2: #{tpu_custom_call.1} parent=1 // pred_check
      _
    $region3: #{tpu_custom_call.1} parent=1 // pred_check_branch
      %20 = sbr.rel (0) target = $region5
    $region4: #{tpu_custom_call.1} parent=1 // pred_region
      %s22 = ssub.s32 1024, 1024
      %23 = vsyncadd [#allocation7], %s22
      %s24 = sshll.u32 [#allocation6], 4
      %s25 = int_to_ptr.vmem [resolvable:$true] %s24
      %30 = dma.hbm_to_vmem [thread:$0]  %s0, 1024, %s25, [#allocation7], 128, 128, 8
    $region5: #{tpu_custom_call.1} parent=1 // pred_fallthru
      _
    // Predicated region
    $region6: #{tpu_custom_call.1} parent=1 // pred_check
      _
    $region7: #{tpu_custom_call.1} parent=1 // pred_check_branch
      %32 = sbr.rel (0) target = $region9
    $region8: #{tpu_custom_call.1} parent=1 // pred_region
      %s34 = ssub.s32 1024, 1024
      %35 = vsyncadd [#allocation10], %s34
      %s36 = sshll.u32 [#allocation9], 4
      %s37 = int_to_ptr.vmem [resolvable:$true] %s36
      %42 = dma.hbm_to_vmem [thread:$0]  %s1, 1024, %s37, [#allocation10], 64, 64, 4
    $region9: #{tpu_custom_call.1} parent=1 // pred_fallthru
      _
    // Predicated region
    $region10: #{tpu_custom_call.1} parent=1 // pred_check
      _
    $region11: #{tpu_custom_call.1} parent=1 // pred_check_branch
      %44 = sbr.rel (0) target = $region13
    $region12: #{tpu_custom_call.1} parent=1 // pred_region
      %s46 = ssub.s32 256, 256
      %47 = vsyncadd [#allocation10], %s46
      %s48 = sshll.u32 [#allocation11], 4
      %s49 = int_to_ptr.vmem [resolvable:$true] %s48
      %54 = dma.hbm_to_vmem [thread:$0]  %s2, 256, %s49, [#allocation10], 64, 64, 4
    $region13: #{tpu_custom_call.1} parent=1 // pred_fallthru
      _
    // Predicated region
    $region14: #{tpu_custom_call.1} parent=1 // pred_check
      _
    $region15: #{tpu_custom_call.1} parent=1 // pred_check_branch
      %56 = sbr.rel (0) target = $region17
    $region16: #{tpu_custom_call.1} parent=1 // pred_region
      _
    $region17: #{tpu_custom_call.1} parent=1 // pred_fallthru
      _
    // Predicated region
    $region18: #{tpu_custom_call.1} parent=1 // pred_check
      _
    $region19: #{tpu_custom_call.1} parent=1 // pred_check_branch
      %58 = sbr.rel (0) target = $region21
    $region20: #{tpu_custom_call.1} parent=1 // pred_region
      %s60 = ssub.s32 256, 256
      %61 = vsyncadd [#allocation13], %s60
      %s62 = sshll.u32 [#allocation12], 4
      %s63 = int_to_ptr.vmem [resolvable:$true] %s62
      %68 = dma.hbm_to_vmem [thread:$0]  %s4, 256, %s63, [#allocation13], 64, 64, 4
    $region21: #{tpu_custom_call.1} parent=1 // pred_fallthru
      _
    // Predicated region
    $region22: #{tpu_custom_call.1} parent=1 // pred_check
      _
    $region23: #{tpu_custom_call.1} parent=1 // pred_check_branch
      %70 = sbr.rel (0) target = $region25
    $region24: #{tpu_custom_call.1} parent=1 // pred_region
      %s72 = ssub.s32 256, 256
      %73 = vsyncadd [#allocation13], %s72
      %s74 = sshll.u32 [#allocation14], 4
      %s75 = int_to_ptr.vmem [resolvable:$true] %s74
      %80 = dma.hbm_to_vmem [thread:$0]  %s5, 256, %s75, [#allocation13], 64, 64, 4
    $region25: #{tpu_custom_call.1} parent=1 // pred_fallthru
      _
    // Predicated region
    $region26: #{tpu_custom_call.1} parent=1 // pred_check
      _
    $region27: #{tpu_custom_call.1} parent=1 // pred_check_branch
      %82 = sbr.rel (0) target = $region29
    $region28: #{tpu_custom_call.1} parent=1 // pred_region
      _
    $region29: #{tpu_custom_call.1} parent=1 // pred_fallthru
      _
    // Predicated region
    $region30: #{tpu_custom_call.1} parent=1 // pred_check
      _
    $region31: #{tpu_custom_call.1} parent=1 // pred_check_branch
      %84 = sbr.rel (0) target = $region33
    $region32: #{tpu_custom_call.1} parent=1 // pred_region
      %s86 = ssub.s32 256, 256
      %87 = vsyncadd [#allocation16], %s86
      %s88 = sshll.u32 [#allocation15], 4
      %s89 = int_to_ptr.vmem [resolvable:$true] %s88
      %94 = dma.hbm_to_vmem [thread:$0]  %s7, 256, %s89, [#allocation16], 64, 64, 4
    $region33: #{tpu_custom_call.1} parent=1 // pred_fallthru
      _
    // Predicated region
    $region34: #{tpu_custom_call.1} parent=1 // pred_check
      _
    $region35: #{tpu_custom_call.1} parent=1 // pred_check_branch
      %96 = sbr.rel (0) target = $region37
    $region36: #{tpu_custom_call.1} parent=1 // pred_region
      _
    $region37: #{tpu_custom_call.1} parent=1 // pred_fallthru
      _
    // Predicated region
    $region38: #{tpu_custom_call.1} parent=1 // pred_check
      _
    $region39: #{tpu_custom_call.1} parent=1 // pred_check_branch
      %98 = sbr.rel (0) target = $region41
    $region40: #{tpu_custom_call.1} parent=1 // pred_region
      %99 = dma.done [#allocation7], 1024
    $region41: #{tpu_custom_call.1} parent=1 // pred_fallthru
      _
    // Predicated region
    $region42: #{tpu_custom_call.1} parent=1 // pred_check
      _
    $region43: #{tpu_custom_call.1} parent=1 // pred_check_branch
      %101 = sbr.rel (0) target = $region45
    $region44: #{tpu_custom_call.1} parent=1 // pred_region
      %102 = dma.done [#allocation10], 1024
    $region45: #{tpu_custom_call.1} parent=1 // pred_fallthru
      _
    // Predicated region
    $region46: #{tpu_custom_call.1} parent=1 // pred_check
      _
    $region47: #{tpu_custom_call.1} parent=1 // pred_check_branch
      %104 = sbr.rel (0) target = $region49
    $region48: #{tpu_custom_call.1} parent=1 // pred_region
      %105 = dma.done [#allocation10], 256
    $region49: #{tpu_custom_call.1} parent=1 // pred_fallthru
      _
    // Predicated region
    $region50: #{tpu_custom_call.1} parent=1 // pred_check
      _
    $region51: #{tpu_custom_call.1} parent=1 // pred_check_branch
      %107 = sbr.rel (0) target = $region53
    $region52: #{tpu_custom_call.1} parent=1 // pred_region
      %108 = dma.done [#allocation13], 256
    $region53: #{tpu_custom_call.1} parent=1 // pred_fallthru
      _
    // Predicated region
    $region54: #{tpu_custom_call.1} parent=1 // pred_check
      _
    $region55: #{tpu_custom_call.1} parent=1 // pred_check_branch
      %110 = sbr.rel (0) target = $region57
    $region56: #{tpu_custom_call.1} parent=1 // pred_region
      %111 = dma.done [#allocation13], 256
    $region57: #{tpu_custom_call.1} parent=1 // pred_fallthru
      _
    // Predicated region
    $region58: #{tpu_custom_call.1} parent=1 // pred_check
      _
    $region59: #{tpu_custom_call.1} parent=1 // pred_check_branch
      %113 = sbr.rel (0) target = $region61
    $region60: #{tpu_custom_call.1} parent=1 // pred_region
      %114 = dma.done [#allocation16], 256
    $region61: #{tpu_custom_call.1} parent=1 // pred_fallthru
      _
    %p116 = scmp.eq.s32.totalorder 0, 0
    // Predicated region
    $region62: #{tpu_custom_call.1} parent=1 // pred_check
      %p117 = pneg %p116
    $region63: #{tpu_custom_call.1} parent=1 // pred_check_branch
      %119 = sbr.rel (%p117) target = $region65
    $region64: #{tpu_custom_call.1} parent=1 // pred_region
      %vm120 = vcmask 261120
      %121 = vst.msk [vmem:[#allocation4] sm:$0xff] %vm120, 0.0
      %122 = vst.msk [vmem:[#allocation4 + $0x8] sm:$0xff] %vm120, 0.0
      %123 = vst.msk [vmem:[#allocation5] sm:$0xff] %vm120, 0.0
      %124 = vst.msk [vmem:[#allocation5 + $0x8] sm:$0xff] %vm120, 0.0
    $region65: #{tpu_custom_call.1} parent=1 // pred_fallthru
      _
    %v125 = vld [vmem:[#allocation6] sm:$0xff]
    %v126 = vld [vmem:[#allocation6 + $0x8] sm:$0xff]
    %v127 = vld [vmem:[#allocation6 + $0x10] sm:$0xff]
    %v128 = vld [vmem:[#allocation6 + $0x18] sm:$0xff]
    %v129 = vld [vmem:[#allocation6 + $0x20] sm:$0xff]
    %v130 = vld [vmem:[#allocation6 + $0x28] sm:$0xff]
    %v131 = vld [vmem:[#allocation6 + $0x30] sm:$0xff]
    %v132 = vld [vmem:[#allocation6 + $0x38] sm:$0xff]
    %v133 = vpack.c.bf16 %v125, %v125
    %v134 = vpack.c.bf16 %v126, %v126
    %v135 = vpack.c.bf16 %v127, %v127
    %v136 = vpack.c.bf16 %v128, %v128
    %v137 = vpack.c.bf16 %v129, %v129
    %v138 = vpack.c.bf16 %v130, %v130
    %v139 = vpack.c.bf16 %v131, %v131
    %v140 = vpack.c.bf16 %v132, %v132
    %v141 = vld [vmem:[#allocation9] sm:$0xf]
    %v142 = vld [vmem:[#allocation9 + $0x4] sm:$0xf]
    %v143 = vld [vmem:[#allocation9 + $0x8] sm:$0xf]
    %v144 = vld [vmem:[#allocation9 + $0xc] sm:$0xf]
    %v145 = vld [vmem:[#allocation9 + $0x10] sm:$0xf]
    %v146 = vld [vmem:[#allocation9 + $0x14] sm:$0xf]
    %v147 = vld [vmem:[#allocation9 + $0x18] sm:$0xf]
    %v148 = vld [vmem:[#allocation9 + $0x1c] sm:$0xf]
    %v149 = vld [vmem:[#allocation9 + $0x20] sm:$0xf]
    %v150 = vld [vmem:[#allocation9 + $0x24] sm:$0xf]
    %v151 = vld [vmem:[#allocation9 + $0x28] sm:$0xf]
    %v152 = vld [vmem:[#allocation9 + $0x2c] sm:$0xf]
    %v153 = vld [vmem:[#allocation9 + $0x30] sm:$0xf]
    %v154 = vld [vmem:[#allocation9 + $0x34] sm:$0xf]
    %v155 = vld [vmem:[#allocation9 + $0x38] sm:$0xf]
    %v156 = vld [vmem:[#allocation9 + $0x3c] sm:$0xf]
    %v157 = vld [vmem:[%s3] sm:$0x1]
    %v159 = vlaneseq
    %v160 = vshrl.u32 %v159, 7
    %v161 = vsub.s32 0, %v160
    %v162 = vrot.slane %v157, %v161
    %v172 = vunpack.c.l.b16 %v133
    %v173 = vunpack.c.l.b16 %v134
    %v174 = vunpack.c.l.b16 %v135
    %v175 = vunpack.c.l.b16 %v136
    %v176 = vunpack.c.l.b16 %v137
    %v177 = vunpack.c.l.b16 %v138
    %v178 = vunpack.c.l.b16 %v139
    %v179 = vunpack.c.l.b16 %v140
    %v180 = vpack.c.b16 %v173, %v172
    %v181 = vpack.c.b16 %v175, %v174
    %v182 = vpack.c.b16 %v177, %v176
    %v183 = vpack.c.b16 %v179, %v178
    %v204 = vunpack.c.l.b16 %v141
    %v205 = vunpack.c.l.b16 %v142
    %v206 = vunpack.c.l.b16 %v143
    %v207 = vunpack.c.l.b16 %v144
    %v208 = vunpack.c.l.b16 %v145
    %v209 = vunpack.c.l.b16 %v146
    %v210 = vunpack.c.l.b16 %v147
    %v211 = vunpack.c.l.b16 %v148
    %v212 = vunpack.c.l.b16 %v149
    %v213 = vunpack.c.l.b16 %v150
    %v214 = vunpack.c.l.b16 %v151
    %v215 = vunpack.c.l.b16 %v152
    %v216 = vunpack.c.l.b16 %v153
    %v217 = vunpack.c.l.b16 %v154
    %v218 = vunpack.c.l.b16 %v155
    %v219 = vunpack.c.l.b16 %v156
    %v220 = vpack.c.b16 %v205, %v204
    %v221 = vpack.c.b16 %v207, %v206
    %v222 = vpack.c.b16 %v209, %v208
    %v223 = vpack.c.b16 %v211, %v210
    %v224 = vpack.c.b16 %v213, %v212
    %v225 = vpack.c.b16 %v215, %v214
    %v226 = vpack.c.b16 %v217, %v216
    %v227 = vpack.c.b16 %v219, %v218
    %236 = vmatprep.subr.bf16.mxu0 0
    %237 = vmatpush1.bf16.msra.mxu0 %v227
    %238 = vmatprep.subr.bf16.mxu0 0
    %239 = vmatpush1.bf16.msra.mxu0 %v226
    %240 = vmatprep.subr.bf16.mxu0 0
    %241 = vmatpush1.bf16.msra.mxu0 %v225
    %242 = vmatprep.subr.bf16.mxu0 0
    %243 = vmatpush1.bf16.msra.mxu0 %v224
    %244 = vmatprep.subr.bf16.mxu0 0
    %245 = vmatpush1.bf16.msra.mxu0 %v223
    %246 = vmatprep.subr.bf16.mxu0 0
    %247 = vmatpush1.bf16.msra.mxu0 %v222
    %248 = vmatprep.subr.bf16.mxu0 0
    %249 = vmatpush1.bf16.msra.mxu0 %v221
    %250 = vmatprep.subr.bf16.mxu0 0
    %251 = vmatpush1.bf16.msra.mxu0 %v220
    %252 = vmatprep.subr.bf16.mxu0 0
    %253 = vmatpush2.bf16.msra.mxu0 0
    %254 = vmatprep.subr.bf16.mxu0 0
    %255 = vmatpush2.bf16.msra.mxu0 0
    %256 = vmatprep.subr.bf16.mxu0 0
    %257 = vmatpush2.bf16.msra.mxu0 0
    %258 = vmatprep.subr.bf16.mxu0 0
    %259 = vmatpush2.bf16.msra.mxu0 0
    %260 = vmatprep.subr.bf16.mxu0 0
    %261 = vmatpush2.bf16.msra.mxu0 0
    %262 = vmatprep.subr.bf16.mxu0 0
    %263 = vmatpush2.bf16.msra.mxu0 0
    %264 = vmatprep.subr.bf16.mxu0 0
    %265 = vmatpush2.bf16.msra.mxu0 0
    %266 = vmatprep.subr.bf16.mxu0 0
    %267 = vmatpush2.bf16.msra.mxu0 0
    %268 = vmatprep.mubr.bf16.mxu0 0
    %269 = vmatmul.mubr.bf16.gmra.mxu0 %v180
    %v270 = vpop.f32.mrf.mxu0
    %v271 = vadd.f32 %v162, %v270
    %v272 = vpop.f32.mrf.mxu0
    %v273 = vpop.f32.mrf.mxu0
    %v274 = vadd.f32 %v162, %v273
    %v275 = vpop.f32.mrf.mxu0
    %276 = vmatprep.mubr.bf16.mxu0 0
    %277 = vmatmul.mubr.bf16.gmra.mxu0 %v181
    %v278 = vpop.f32.mrf.mxu0
    %v279 = vadd.f32 %v162, %v278
    %v280 = vpop.f32.mrf.mxu0
    %v281 = vpop.f32.mrf.mxu0
    %v282 = vadd.f32 %v162, %v281
    %v283 = vpop.f32.mrf.mxu0
    %284 = vmatprep.mubr.bf16.mxu0 0
    %285 = vmatmul.mubr.bf16.gmra.mxu0 %v182
    %v286 = vpop.f32.mrf.mxu0
    %v287 = vadd.f32 %v162, %v286
    %v288 = vpop.f32.mrf.mxu0
    %v289 = vpop.f32.mrf.mxu0
    %v290 = vadd.f32 %v162, %v289
    %v291 = vpop.f32.mrf.mxu0
    %292 = vmatprep.mubr.bf16.mxu0 0
    %293 = vmatmul.mubr.bf16.gmra.mxu0 %v183
    %v294 = vpop.f32.mrf.mxu0
    %v295 = vadd.f32 %v162, %v294
    %v296 = vpop.f32.mrf.mxu0
    %v297 = vpop.f32.mrf.mxu0
    %v298 = vadd.f32 %v162, %v297
    %v299 = vpop.f32.mrf.mxu0
    %300 = vdwg.mxu0
    %v301 = vpack.c.bf16 %v271, %v271
    %v302 = vpack.c.bf16 %v274, %v274
    %v303 = vpack.c.bf16 %v279, %v279
    %v304 = vpack.c.bf16 %v282, %v282
    %v305 = vpack.c.bf16 %v287, %v287
    %v306 = vpack.c.bf16 %v290, %v290
    %v307 = vpack.c.bf16 %v295, %v295
    %v308 = vpack.c.bf16 %v298, %v298
    %309 = vst [vmem:[#allocation3] sm:$0xf] %v301
    %310 = vst [vmem:[#allocation3 + $0x4] sm:$0xf] %v302
    %311 = vst [vmem:[#allocation3 + $0x8] sm:$0xf] %v303
    %312 = vst [vmem:[#allocation3 + $0xc] sm:$0xf] %v304
    %313 = vst [vmem:[#allocation3 + $0x10] sm:$0xf] %v305
    %314 = vst [vmem:[#allocation3 + $0x14] sm:$0xf] %v306
    %315 = vst [vmem:[#allocation3 + $0x18] sm:$0xf] %v307
    %316 = vst [vmem:[#allocation3 + $0x1c] sm:$0xf] %v308
    %v317 = vld [vmem:[#allocation11] sm:$0xf]
    %v318 = vld [vmem:[#allocation11 + $0x4] sm:$0xf]
    %v319 = vld [vmem:[#allocation11 + $0x8] sm:$0xf]
    %v320 = vld [vmem:[#allocation11 + $0xc] sm:$0xf]
    %v321 = vld [vmem:[#allocation4] sm:$0xff]
    %v322 = vld [vmem:[#allocation3] sm:$0xf]
    %v323 = vunpack.c.l.bf16 %v322
    %v324 = vpack.c.bf16 %v321, %v321
    %v329 = vunpack.c.l.b16 %v317
    %v330 = vunpack.c.l.b16 %v318
    %v331 = vunpack.c.l.b16 %v319
    %v332 = vunpack.c.l.b16 %v320
    %v333 = vpack.c.b16 %v330, %v329
    %v334 = vpack.c.b16 %v332, %v331
    %vm337 = vcmask 261120
    %v339 = vsel %vm337, %v324, 0
    %341 = vmatprep.subr.bf16.mxu0 0
    %342 = vmatpush1.bf16.msra.mxu0 0
    %343 = vmatprep.subr.bf16.mxu0 0
    %344 = vmatpush1.bf16.msra.mxu0 0
    %345 = vmatprep.subr.bf16.mxu0 0
    %346 = vmatpush1.bf16.msra.mxu0 0
    %347 = vmatprep.subr.bf16.mxu0 0
    %348 = vmatpush1.bf16.msra.mxu0 0
    %349 = vmatprep.subr.bf16.mxu0 0
    %350 = vmatpush1.bf16.msra.mxu0 0
    %351 = vmatprep.subr.bf16.mxu0 0
    %352 = vmatpush1.bf16.msra.mxu0 0
    %353 = vmatprep.subr.bf16.mxu0 0
    %354 = vmatpush1.bf16.msra.mxu0 %v334
    %355 = vmatprep.subr.bf16.mxu0 0
    %356 = vmatpush1.bf16.msra.mxu0 %v333
    %357 = vmatprep.subr.bf16.mxu0 0
    %358 = vmatpush2.bf16.msra.mxu0 0
    %359 = vmatprep.subr.bf16.mxu0 0
    %360 = vmatpush2.bf16.msra.mxu0 0
    %361 = vmatprep.subr.bf16.mxu0 0
    %362 = vmatpush2.bf16.msra.mxu0 0
    %363 = vmatprep.subr.bf16.mxu0 0
    %364 = vmatpush2.bf16.msra.mxu0 0
    %365 = vmatprep.subr.bf16.mxu0 0
    %366 = vmatpush2.bf16.msra.mxu0 0
    %367 = vmatprep.subr.bf16.mxu0 0
    %368 = vmatpush2.bf16.msra.mxu0 0
    %369 = vmatprep.subr.bf16.mxu0 0
    %370 = vmatpush2.bf16.msra.mxu0 0
    %371 = vmatprep.subr.bf16.mxu0 0
    %372 = vmatpush2.bf16.msra.mxu0 0
    %373 = vmatprep.mubr.bf16.mxu0 0
    %374 = vmatmul.mubr.bf16.gmra.mxu0 %v339
    %v375 = vpop.f32.mrf.mxu0
    %v376 = vadd.f32 0.0, %v375
    %v377 = vpop.f32.mrf.mxu0
    %v378 = vpop.f32.mrf.mxu0
    %v379 = vpop.f32.mrf.mxu0
    %380 = vdwg.mxu0
    %v381 = vadd.f32 %v323, %v376
    %v382 = vxor.u32 %v381, 2147483648
    %v383 = vmul.f32 %v382, 1.442695
    %v384 = vpow.pop %v383
    %v385 = vadd.f32 %v384, 1.0
    %v386 = vrcp.pop %v385
    %v387 = vmul.f32 1.0, %v386
    %v388 = vtanh.pop %v381
    %v389 = vld [vmem:[#allocation5] sm:$0xff]
    %391 = vrot.lane.b32.xlu0 %v389, 32
    %v392 = vpop.permute.xlu0 %391
    %v394 = vmul.f32 %v387, %v392
    %396 = vrot.lane.b32.xlu0 %v388, 64
    %v397 = vpop.permute.xlu0 %396
    %v399 = vmul.f32 %v387, %v397
    %401 = vrot.lane.b32.xlu0 %v399, 32
    %v402 = vpop.permute.xlu0 %401
    %v404 = vadd.f32 %v394, %v402
    %v405 = vtanh.pop %v404
    %407 = vrot.lane.b32.xlu0 %v405, 64
    %v408 = vpop.permute.xlu0 %407
    %v410 = vmul.f32 %v387, %v408
    %412 = vrot.lane.b32.xlu0 %v404, 96
    %v413 = vpop.permute.xlu0 %412
    %415 = vst.msk [vmem:[#allocation5] sm:$0xff] %vm337, %v413
    %417 = vrot.lane.b32.xlu0 %v410, 32
    %v418 = vpop.permute.xlu0 %417
    %420 = vst.msk [vmem:[#allocation4] sm:$0xff] %vm337, %v418
    %v421 = vpack.c.bf16 %v410, %v410
    %v423 = vunpack.c.l.b16 %v421
    %v424 = vpack.c.b16 %v423, %v423
    %425 = vrot.lane.b32.xlu0 %v424, 32
    %v426 = vpop.permute.xlu0 %425
    %vm428 = vcmask 257024
    %429 = vst.msk [vmem:[#allocation2] sm:$0xf] %vm428, %v426
    %v430 = vld [vmem:[#allocation4] sm:$0xff]
    %s431 = scalar_lea.vmem [#allocation3], 4
    %v432 = vld [vmem:[%s431] sm:$0xf]
    %v433 = vunpack.c.l.bf16 %v432
    %v434 = vpack.c.bf16 %v430, %v430
    %v436 = vsel %vm337, %v434, 0
    %438 = vmatprep.subr.bf16.mxu0 0
    %439 = vmatpush1.bf16.msra.mxu0 0
    %440 = vmatprep.subr.bf16.mxu0 0
    %441 = vmatpush1.bf16.msra.mxu0 0
    %442 = vmatprep.subr.bf16.mxu0 0
    %443 = vmatpush1.bf16.msra.mxu0 0
    %444 = vmatprep.subr.bf16.mxu0 0
    %445 = vmatpush1.bf16.msra.mxu0 0
    %446 = vmatprep.subr.bf16.mxu0 0
    %447 = vmatpush1.bf16.msra.mxu0 0
    %448 = vmatprep.subr.bf16.mxu0 0
    %449 = vmatpush1.bf16.msra.mxu0 0
    %450 = vmatprep.subr.bf16.mxu0 0
    %451 = vmatpush1.bf16.msra.mxu0 %v334
    %452 = vmatprep.subr.bf16.mxu0 0
    %453 = vmatpush1.bf16.msra.mxu0 %v333
    %454 = vmatprep.subr.bf16.mxu0 0
    %455 = vmatpush2.bf16.msra.mxu0 0
    %456 = vmatprep.subr.bf16.mxu0 0
    %457 = vmatpush2.bf16.msra.mxu0 0
    %458 = vmatprep.subr.bf16.mxu0 0
    %459 = vmatpush2.bf16.msra.mxu0 0
    %460 = vmatprep.subr.bf16.mxu0 0
    %461 = vmatpush2.bf16.msra.mxu0 0
    %462 = vmatprep.subr.bf16.mxu0 0
    %463 = vmatpush2.bf16.msra.mxu0 0
    %464 = vmatprep.subr.bf16.mxu0 0
    %465 = vmatpush2.bf16.msra.mxu0 0
    %466 = vmatprep.subr.bf16.mxu0 0
    %467 = vmatpush2.bf16.msra.mxu0 0
    %468 = vmatprep.subr.bf16.mxu0 0
    %469 = vmatpush2.bf16.msra.mxu0 0
    %470 = vmatprep.mubr.bf16.mxu0 0
    %471 = vmatmul.mubr.bf16.gmra.mxu0 %v436
    %v472 = vpop.f32.mrf.mxu0
    %v473 = vadd.f32 0.0, %v472
    %v474 = vpop.f32.mrf.mxu0
    %v475 = vpop.f32.mrf.mxu0
    %v476 = vpop.f32.mrf.mxu0
    %477 = vdwg.mxu0
    %v478 = vadd.f32 %v433, %v473
    %v479 = vxor.u32 %v478, 2147483648
    %v480 = vmul.f32 %v479, 1.442695
    %v481 = vpow.pop %v480
    %v482 = vadd.f32 %v481, 1.0
    %v483 = vrcp.pop %v482
    %v484 = vmul.f32 1.0, %v483
    %v485 = vtanh.pop %v478
    %v486 = vld [vmem:[#allocation5] sm:$0xff]
    %488 = vrot.lane.b32.xlu0 %v486, 32
    %v489 = vpop.permute.xlu0 %488
    %v491 = vmul.f32 %v484, %v489
    %493 = vrot.lane.b32.xlu0 %v485, 64
    %v494 = vpop.permute.xlu0 %493
    %v496 = vmul.f32 %v484, %v494
    %498 = vrot.lane.b32.xlu0 %v496, 32
    %v499 = vpop.permute.xlu0 %498
    %v501 = vadd.f32 %v491, %v499
    %v502 = vtanh.pop %v501
    %504 = vrot.lane.b32.xlu0 %v502, 64
    %v505 = vpop.permute.xlu0 %504
    %v507 = vmul.f32 %v484, %v505
    %509 = vrot.lane.b32.xlu0 %v501, 96
    %v510 = vpop.permute.xlu0 %509
    %512 = vst.msk [vmem:[#allocation5] sm:$0xff] %vm337, %v510
    %514 = vrot.lane.b32.xlu0 %v507, 32
    %v515 = vpop.permute.xlu0 %514
    %517 = vst.msk [vmem:[#allocation4] sm:$0xff] %vm337, %v515
    %v518 = vpack.c.bf16 %v507, %v507
    %v520 = vunpack.c.l.b16 %v518
    %v521 = vpack.c.b16 %v520, %v520
    %522 = vrot.lane.b32.xlu0 %v521, 32
    %v523 = vpop.permute.xlu0 %522
    %s525 = scalar_lea.vmem [#allocation2], 4
    %526 = vst.msk [vmem:[%s525] sm:$0xf] %vm428, %v523
    %v527 = vld [vmem:[#allocation4] sm:$0xff]
    %s528 = scalar_lea.vmem [#allocation3], 8
    %v529 = vld [vmem:[%s528] sm:$0xf]
    %v530 = vunpack.c.l.bf16 %v529
    %v531 = vpack.c.bf16 %v527, %v527
    %v533 = vsel %vm337, %v531, 0
    %535 = vmatprep.subr.bf16.mxu0 0
    %536 = vmatpush1.bf16.msra.mxu0 0
    %537 = vmatprep.subr.bf16.mxu0 0
    %538 = vmatpush1.bf16.msra.mxu0 0
    %539 = vmatprep.subr.bf16.mxu0 0
    %540 = vmatpush1.bf16.msra.mxu0 0
    %541 = vmatprep.subr.bf16.mxu0 0
    %542 = vmatpush1.bf16.msra.mxu0 0
    %543 = vmatprep.subr.bf16.mxu0 0
    %544 = vmatpush1.bf16.msra.mxu0 0
    %545 = vmatprep.subr.bf16.mxu0 0
    %546 = vmatpush1.bf16.msra.mxu0 0
    %547 = vmatprep.subr.bf16.mxu0 0
    %548 = vmatpush1.bf16.msra.mxu0 %v334
    %549 = vmatprep.subr.bf16.mxu0 0
    %550 = vmatpush1.bf16.msra.mxu0 %v333
    %551 = vmatprep.subr.bf16.mxu0 0
    %552 = vmatpush2.bf16.msra.mxu0 0
    %553 = vmatprep.subr.bf16.mxu0 0
    %554 = vmatpush2.bf16.msra.mxu0 0
    %555 = vmatprep.subr.bf16.mxu0 0
    %556 = vmatpush2.bf16.msra.mxu0 0
    %557 = vmatprep.subr.bf16.mxu0 0
    %558 = vmatpush2.bf16.msra.mxu0 0
    %559 = vmatprep.subr.bf16.mxu0 0
    %560 = vmatpush2.bf16.msra.mxu0 0
    %561 = vmatprep.subr.bf16.mxu0 0
    %562 = vmatpush2.bf16.msra.mxu0 0
    %563 = vmatprep.subr.bf16.mxu0 0
    %564 = vmatpush2.bf16.msra.mxu0 0
    %565 = vmatprep.subr.bf16.mxu0 0
    %566 = vmatpush2.bf16.msra.mxu0 0
    %567 = vmatprep.mubr.bf16.mxu0 0
    %568 = vmatmul.mubr.bf16.gmra.mxu0 %v533
    %v569 = vpop.f32.mrf.mxu0
    %v570 = vadd.f32 0.0, %v569
    %v571 = vpop.f32.mrf.mxu0
    %v572 = vpop.f32.mrf.mxu0
    %v573 = vpop.f32.mrf.mxu0
    %574 = vdwg.mxu0
    %v575 = vadd.f32 %v530, %v570
    %v576 = vxor.u32 %v575, 2147483648
    %v577 = vmul.f32 %v576, 1.442695
    %v578 = vpow.pop %v577
    %v579 = vadd.f32 %v578, 1.0
    %v580 = vrcp.pop %v579
    %v581 = vmul.f32 1.0, %v580
    %v582 = vtanh.pop %v575
    %v583 = vld [vmem:[#allocation5] sm:$0xff]
    %585 = vrot.lane.b32.xlu0 %v583, 32
    %v586 = vpop.permute.xlu0 %585
    %v588 = vmul.f32 %v581, %v586
    %590 = vrot.lane.b32.xlu0 %v582, 64
    %v591 = vpop.permute.xlu0 %590
    %v593 = vmul.f32 %v581, %v591
    %595 = vrot.lane.b32.xlu0 %v593, 32
    %v596 = vpop.permute.xlu0 %595
    %v598 = vadd.f32 %v588, %v596
    %v599 = vtanh.pop %v598
    %601 = vrot.lane.b32.xlu0 %v599, 64
    %v602 = vpop.permute.xlu0 %601
    %v604 = vmul.f32 %v581, %v602
    %606 = vrot.lane.b32.xlu0 %v598, 96
    %v607 = vpop.permute.xlu0 %606
    %609 = vst.msk [vmem:[#allocation5] sm:$0xff] %vm337, %v607
    %611 = vrot.lane.b32.xlu0 %v604, 32
    %v612 = vpop.permute.xlu0 %611
    %614 = vst.msk [vmem:[#allocation4] sm:$0xff] %vm337, %v612
    %v615 = vpack.c.bf16 %v604, %v604
    %v617 = vunpack.c.l.b16 %v615
    %v618 = vpack.c.b16 %v617, %v617
    %619 = vrot.lane.b32.xlu0 %v618, 32
    %v620 = vpop.permute.xlu0 %619
    %s622 = scalar_lea.vmem [#allocation2], 8
    %623 = vst.msk [vmem:[%s622] sm:$0xf] %vm428, %v620
    %v624 = vld [vmem:[#allocation4] sm:$0xff]
    %s625 = scalar_lea.vmem [#allocation3], 12
    %v626 = vld [vmem:[%s625] sm:$0xf]
    %v627 = vunpack.c.l.bf16 %v626
    %v628 = vpack.c.bf16 %v624, %v624
    %v630 = vsel %vm337, %v628, 0
    %632 = vmatprep.subr.bf16.mxu0 0
    %633 = vmatpush1.bf16.msra.mxu0 0
    %634 = vmatprep.subr.bf16.mxu0 0
    %635 = vmatpush1.bf16.msra.mxu0 0
    %636 = vmatprep.subr.bf16.mxu0 0
    %637 = vmatpush1.bf16.msra.mxu0 0
    %638 = vmatprep.subr.bf16.mxu0 0
    %639 = vmatpush1.bf16.msra.mxu0 0
    %640 = vmatprep.subr.bf16.mxu0 0
    %641 = vmatpush1.bf16.msra.mxu0 0
    %642 = vmatprep.subr.bf16.mxu0 0
    %643 = vmatpush1.bf16.msra.mxu0 0
    %644 = vmatprep.subr.bf16.mxu0 0
    %645 = vmatpush1.bf16.msra.mxu0 %v334
    %646 = vmatprep.subr.bf16.mxu0 0
    %647 = vmatpush1.bf16.msra.mxu0 %v333
    %648 = vmatprep.subr.bf16.mxu0 0
    %649 = vmatpush2.bf16.msra.mxu0 0
    %650 = vmatprep.subr.bf16.mxu0 0
    %651 = vmatpush2.bf16.msra.mxu0 0
    %652 = vmatprep.subr.bf16.mxu0 0
    %653 = vmatpush2.bf16.msra.mxu0 0
    %654 = vmatprep.subr.bf16.mxu0 0
    %655 = vmatpush2.bf16.msra.mxu0 0
    %656 = vmatprep.subr.bf16.mxu0 0
    %657 = vmatpush2.bf16.msra.mxu0 0
    %658 = vmatprep.subr.bf16.mxu0 0
    %659 = vmatpush2.bf16.msra.mxu0 0
    %660 = vmatprep.subr.bf16.mxu0 0
    %661 = vmatpush2.bf16.msra.mxu0 0
    %662 = vmatprep.subr.bf16.mxu0 0
    %663 = vmatpush2.bf16.msra.mxu0 0
    %664 = vmatprep.mubr.bf16.mxu0 0
    %665 = vmatmul.mubr.bf16.gmra.mxu0 %v630
    %v666 = vpop.f32.mrf.mxu0
    %v667 = vadd.f32 0.0, %v666
    %v668 = vpop.f32.mrf.mxu0
    %v669 = vpop.f32.mrf.mxu0
    %v670 = vpop.f32.mrf.mxu0
    %671 = vdwg.mxu0
    %v672 = vadd.f32 %v627, %v667
    %v673 = vxor.u32 %v672, 2147483648
    %v674 = vmul.f32 %v673, 1.442695
    %v675 = vpow.pop %v674
    %v676 = vadd.f32 %v675, 1.0
    %v677 = vrcp.pop %v676
    %v678 = vmul.f32 1.0, %v677
    %v679 = vtanh.pop %v672
    %v680 = vld [vmem:[#allocation5] sm:$0xff]
    %682 = vrot.lane.b32.xlu0 %v680, 32
    %v683 = vpop.permute.xlu0 %682
    %v685 = vmul.f32 %v678, %v683
    %687 = vrot.lane.b32.xlu0 %v679, 64
    %v688 = vpop.permute.xlu0 %687
    %v690 = vmul.f32 %v678, %v688
    %692 = vrot.lane.b32.xlu0 %v690, 32
    %v693 = vpop.permute.xlu0 %692
    %v695 = vadd.f32 %v685, %v693
    %v696 = vtanh.pop %v695
    %698 = vrot.lane.b32.xlu0 %v696, 64
    %v699 = vpop.permute.xlu0 %698
    %v701 = vmul.f32 %v678, %v699
    %703 = vrot.lane.b32.xlu0 %v695, 96
    %v704 = vpop.permute.xlu0 %703
    %706 = vst.msk [vmem:[#allocation5] sm:$0xff] %vm337, %v704
    %708 = vrot.lane.b32.xlu0 %v701, 32
    %v709 = vpop.permute.xlu0 %708
    %711 = vst.msk [vmem:[#allocation4] sm:$0xff] %vm337, %v709
    %v712 = vpack.c.bf16 %v701, %v701
    %v714 = vunpack.c.l.b16 %v712
    %v715 = vpack.c.b16 %v714, %v714
    %716 = vrot.lane.b32.xlu0 %v715, 32
    %v717 = vpop.permute.xlu0 %716
    %s719 = scalar_lea.vmem [#allocation2], 12
    %720 = vst.msk [vmem:[%s719] sm:$0xf] %vm428, %v717
    %v721 = vld [vmem:[#allocation4] sm:$0xff]
    %s722 = scalar_lea.vmem [#allocation3], 16
    %v723 = vld [vmem:[%s722] sm:$0xf]
    %v724 = vunpack.c.l.bf16 %v723
    %v725 = vpack.c.bf16 %v721, %v721
    %v727 = vsel %vm337, %v725, 0
    %729 = vmatprep.subr.bf16.mxu0 0
    %730 = vmatpush1.bf16.msra.mxu0 0
    %731 = vmatprep.subr.bf16.mxu0 0
    %732 = vmatpush1.bf16.msra.mxu0 0
    %733 = vmatprep.subr.bf16.mxu0 0
    %734 = vmatpush1.bf16.msra.mxu0 0
    %735 = vmatprep.subr.bf16.mxu0 0
    %736 = vmatpush1.bf16.msra.mxu0 0
    %737 = vmatprep.subr.bf16.mxu0 0
    %738 = vmatpush1.bf16.msra.mxu0 0
    %739 = vmatprep.subr.bf16.mxu0 0
    %740 = vmatpush1.bf16.msra.mxu0 0
    %741 = vmatprep.subr.bf16.mxu0 0
    %742 = vmatpush1.bf16.msra.mxu0 %v334
    %743 = vmatprep.subr.bf16.mxu0 0
    %744 = vmatpush1.bf16.msra.mxu0 %v333
    %745 = vmatprep.subr.bf16.mxu0 0
    %746 = vmatpush2.bf16.msra.mxu0 0
    %747 = vmatprep.subr.bf16.mxu0 0
    %748 = vmatpush2.bf16.msra.mxu0 0
    %749 = vmatprep.subr.bf16.mxu0 0
    %750 = vmatpush2.bf16.msra.mxu0 0
    %751 = vmatprep.subr.bf16.mxu0 0
    %752 = vmatpush2.bf16.msra.mxu0 0
    %753 = vmatprep.subr.bf16.mxu0 0
    %754 = vmatpush2.bf16.msra.mxu0 0
    %755 = vmatprep.subr.bf16.mxu0 0
    %756 = vmatpush2.bf16.msra.mxu0 0
    %757 = vmatprep.subr.bf16.mxu0 0
    %758 = vmatpush2.bf16.msra.mxu0 0
    %759 = vmatprep.subr.bf16.mxu0 0
    %760 = vmatpush2.bf16.msra.mxu0 0
    %761 = vmatprep.mubr.bf16.mxu0 0
    %762 = vmatmul.mubr.bf16.gmra.mxu0 %v727
    %v763 = vpop.f32.mrf.mxu0
    %v764 = vadd.f32 0.0, %v763
    %v765 = vpop.f32.mrf.mxu0
    %v766 = vpop.f32.mrf.mxu0
    %v767 = vpop.f32.mrf.mxu0
    %768 = vdwg.mxu0
    %v769 = vadd.f32 %v724, %v764
    %v770 = vxor.u32 %v769, 2147483648
    %v771 = vmul.f32 %v770, 1.442695
    %v772 = vpow.pop %v771
    %v773 = vadd.f32 %v772, 1.0
    %v774 = vrcp.pop %v773
    %v775 = vmul.f32 1.0, %v774
    %v776 = vtanh.pop %v769
    %v777 = vld [vmem:[#allocation5] sm:$0xff]
    %779 = vrot.lane.b32.xlu0 %v777, 32
    %v780 = vpop.permute.xlu0 %779
    %v782 = vmul.f32 %v775, %v780
    %784 = vrot.lane.b32.xlu0 %v776, 64
    %v785 = vpop.permute.xlu0 %784
    %v787 = vmul.f32 %v775, %v785
    %789 = vrot.lane.b32.xlu0 %v787, 32
    %v790 = vpop.permute.xlu0 %789
    %v792 = vadd.f32 %v782, %v790
    %v793 = vtanh.pop %v792
    %795 = vrot.lane.b32.xlu0 %v793, 64
    %v796 = vpop.permute.xlu0 %795
    %v798 = vmul.f32 %v775, %v796
    %800 = vrot.lane.b32.xlu0 %v792, 96
    %v801 = vpop.permute.xlu0 %800
    %803 = vst.msk [vmem:[#allocation5] sm:$0xff] %vm337, %v801
    %805 = vrot.lane.b32.xlu0 %v798, 32
    %v806 = vpop.permute.xlu0 %805
    %808 = vst.msk [vmem:[#allocation4] sm:$0xff] %vm337, %v806
    %v809 = vpack.c.bf16 %v798, %v798
    %v811 = vunpack.c.l.b16 %v809
    %v812 = vpack.c.b16 %v811, %v811
    %813 = vrot.lane.b32.xlu0 %v812, 32
    %v814 = vpop.permute.xlu0 %813
    %s816 = scalar_lea.vmem [#allocation2], 16
    %817 = vst.msk [vmem:[%s816] sm:$0xf] %vm428, %v814
    %v818 = vld [vmem:[#allocation4] sm:$0xff]
    %s819 = scalar_lea.vmem [#allocation3], 20
    %v820 = vld [vmem:[%s819] sm:$0xf]
    %v821 = vunpack.c.l.bf16 %v820
    %v822 = vpack.c.bf16 %v818, %v818
    %v824 = vsel %vm337, %v822, 0
    %826 = vmatprep.subr.bf16.mxu0 0
    %827 = vmatpush1.bf16.msra.mxu0 0
    %828 = vmatprep.subr.bf16.mxu0 0
    %829 = vmatpush1.bf16.msra.mxu0 0
    %830 = vmatprep.subr.bf16.mxu0 0
    %831 = vmatpush1.bf16.msra.mxu0 0
    %832 = vmatprep.subr.bf16.mxu0 0
    %833 = vmatpush1.bf16.msra.mxu0 0
    %834 = vmatprep.subr.bf16.mxu0 0
    %835 = vmatpush1.bf16.msra.mxu0 0
    %836 = vmatprep.subr.bf16.mxu0 0
    %837 = vmatpush1.bf16.msra.mxu0 0
    %838 = vmatprep.subr.bf16.mxu0 0
    %839 = vmatpush1.bf16.msra.mxu0 %v334
    %840 = vmatprep.subr.bf16.mxu0 0
    %841 = vmatpush1.bf16.msra.mxu0 %v333
    %842 = vmatprep.subr.bf16.mxu0 0
    %843 = vmatpush2.bf16.msra.mxu0 0
    %844 = vmatprep.subr.bf16.mxu0 0
    %845 = vmatpush2.bf16.msra.mxu0 0
    %846 = vmatprep.subr.bf16.mxu0 0
    %847 = vmatpush2.bf16.msra.mxu0 0
    %848 = vmatprep.subr.bf16.mxu0 0
    %849 = vmatpush2.bf16.msra.mxu0 0
    %850 = vmatprep.subr.bf16.mxu0 0
    %851 = vmatpush2.bf16.msra.mxu0 0
    %852 = vmatprep.subr.bf16.mxu0 0
    %853 = vmatpush2.bf16.msra.mxu0 0
    %854 = vmatprep.subr.bf16.mxu0 0
    %855 = vmatpush2.bf16.msra.mxu0 0
    %856 = vmatprep.subr.bf16.mxu0 0
    %857 = vmatpush2.bf16.msra.mxu0 0
    %858 = vmatprep.mubr.bf16.mxu0 0
    %859 = vmatmul.mubr.bf16.gmra.mxu0 %v824
    %v860 = vpop.f32.mrf.mxu0
    %v861 = vadd.f32 0.0, %v860
    %v862 = vpop.f32.mrf.mxu0
    %v863 = vpop.f32.mrf.mxu0
    %v864 = vpop.f32.mrf.mxu0
    %865 = vdwg.mxu0
    %v866 = vadd.f32 %v821, %v861
    %v867 = vxor.u32 %v866, 2147483648
    %v868 = vmul.f32 %v867, 1.442695
    %v869 = vpow.pop %v868
    %v870 = vadd.f32 %v869, 1.0
    %v871 = vrcp.pop %v870
    %v872 = vmul.f32 1.0, %v871
    %v873 = vtanh.pop %v866
    %v874 = vld [vmem:[#allocation5] sm:$0xff]
    %876 = vrot.lane.b32.xlu0 %v874, 32
    %v877 = vpop.permute.xlu0 %876
    %v879 = vmul.f32 %v872, %v877
    %881 = vrot.lane.b32.xlu0 %v873, 64
    %v882 = vpop.permute.xlu0 %881
    %v884 = vmul.f32 %v872, %v882
    %886 = vrot.lane.b32.xlu0 %v884, 32
    %v887 = vpop.permute.xlu0 %886
    %v889 = vadd.f32 %v879, %v887
    %v890 = vtanh.pop %v889
    %892 = vrot.lane.b32.xlu0 %v890, 64
    %v893 = vpop.permute.xlu0 %892
    %v895 = vmul.f32 %v872, %v893
    %897 = vrot.lane.b32.xlu0 %v889, 96
    %v898 = vpop.permute.xlu0 %897
    %900 = vst.msk [vmem:[#allocation5] sm:$0xff] %vm337, %v898
    %902 = vrot.lane.b32.xlu0 %v895, 32
    %v903 = vpop.permute.xlu0 %902
    %905 = vst.msk [vmem:[#allocation4] sm:$0xff] %vm337, %v903
    %v906 = vpack.c.bf16 %v895, %v895
    %v908 = vunpack.c.l.b16 %v906
    %v909 = vpack.c.b16 %v908, %v908
    %910 = vrot.lane.b32.xlu0 %v909, 32
    %v911 = vpop.permute.xlu0 %910
    %s913 = scalar_lea.vmem [#allocation2], 20
    %914 = vst.msk [vmem:[%s913] sm:$0xf] %vm428, %v911
    %v915 = vld [vmem:[#allocation4] sm:$0xff]
    %s916 = scalar_lea.vmem [#allocation3], 24
    %v917 = vld [vmem:[%s916] sm:$0xf]
    %v918 = vunpack.c.l.bf16 %v917
    %v919 = vpack.c.bf16 %v915, %v915
    %v921 = vsel %vm337, %v919, 0
    %923 = vmatprep.subr.bf16.mxu0 0
    %924 = vmatpush1.bf16.msra.mxu0 0
    %925 = vmatprep.subr.bf16.mxu0 0
    %926 = vmatpush1.bf16.msra.mxu0 0
    %927 = vmatprep.subr.bf16.mxu0 0
    %928 = vmatpush1.bf16.msra.mxu0 0
    %929 = vmatprep.subr.bf16.mxu0 0
    %930 = vmatpush1.bf16.msra.mxu0 0
    %931 = vmatprep.subr.bf16.mxu0 0
    %932 = vmatpush1.bf16.msra.mxu0 0
    %933 = vmatprep.subr.bf16.mxu0 0
    %934 = vmatpush1.bf16.msra.mxu0 0
    %935 = vmatprep.subr.bf16.mxu0 0
    %936 = vmatpush1.bf16.msra.mxu0 %v334
    %937 = vmatprep.subr.bf16.mxu0 0
    %938 = vmatpush1.bf16.msra.mxu0 %v333
    %939 = vmatprep.subr.bf16.mxu0 0
    %940 = vmatpush2.bf16.msra.mxu0 0
    %941 = vmatprep.subr.bf16.mxu0 0
    %942 = vmatpush2.bf16.msra.mxu0 0
    %943 = vmatprep.subr.bf16.mxu0 0
    %944 = vmatpush2.bf16.msra.mxu0 0
    %945 = vmatprep.subr.bf16.mxu0 0
    %946 = vmatpush2.bf16.msra.mxu0 0
    %947 = vmatprep.subr.bf16.mxu0 0
    %948 = vmatpush2.bf16.msra.mxu0 0
    %949 = vmatprep.subr.bf16.mxu0 0
    %950 = vmatpush2.bf16.msra.mxu0 0
    %951 = vmatprep.subr.bf16.mxu0 0
    %952 = vmatpush2.bf16.msra.mxu0 0
    %953 = vmatprep.subr.bf16.mxu0 0
    %954 = vmatpush2.bf16.msra.mxu0 0
    %955 = vmatprep.mubr.bf16.mxu0 0
    %956 = vmatmul.mubr.bf16.gmra.mxu0 %v921
    %v957 = vpop.f32.mrf.mxu0
    %v958 = vadd.f32 0.0, %v957
    %v959 = vpop.f32.mrf.mxu0
    %v960 = vpop.f32.mrf.mxu0
    %v961 = vpop.f32.mrf.mxu0
    %962 = vdwg.mxu0
    %v963 = vadd.f32 %v918, %v958
    %v964 = vxor.u32 %v963, 2147483648
    %v965 = vmul.f32 %v964, 1.442695
    %v966 = vpow.pop %v965
    %v967 = vadd.f32 %v966, 1.0
    %v968 = vrcp.pop %v967
    %v969 = vmul.f32 1.0, %v968
    %v970 = vtanh.pop %v963
    %v971 = vld [vmem:[#allocation5] sm:$0xff]
    %973 = vrot.lane.b32.xlu0 %v971, 32
    %v974 = vpop.permute.xlu0 %973
    %v976 = vmul.f32 %v969, %v974
    %978 = vrot.lane.b32.xlu0 %v970, 64
    %v979 = vpop.permute.xlu0 %978
    %v981 = vmul.f32 %v969, %v979
    %983 = vrot.lane.b32.xlu0 %v981, 32
    %v984 = vpop.permute.xlu0 %983
    %v986 = vadd.f32 %v976, %v984
    %v987 = vtanh.pop %v986
    %989 = vrot.lane.b32.xlu0 %v987, 64
    %v990 = vpop.permute.xlu0 %989
    %v992 = vmul.f32 %v969, %v990
    %994 = vrot.lane.b32.xlu0 %v986, 96
    %v995 = vpop.permute.xlu0 %994
    %997 = vst.msk [vmem:[#allocation5] sm:$0xff] %vm337, %v995
    %999 = vrot.lane.b32.xlu0 %v992, 32
    %v1000 = vpop.permute.xlu0 %999
    %1002 = vst.msk [vmem:[#allocation4] sm:$0xff] %vm337, %v1000
    %v1003 = vpack.c.bf16 %v992, %v992
    %v1005 = vunpack.c.l.b16 %v1003
    %v1006 = vpack.c.b16 %v1005, %v1005
    %1007 = vrot.lane.b32.xlu0 %v1006, 32
    %v1008 = vpop.permute.xlu0 %1007
    %s1010 = scalar_lea.vmem [#allocation2], 24
    %1011 = vst.msk [vmem:[%s1010] sm:$0xf] %vm428, %v1008
    %v1012 = vld [vmem:[#allocation4] sm:$0xff]
    %s1013 = scalar_lea.vmem [#allocation3], 28
    %v1014 = vld [vmem:[%s1013] sm:$0xf]
    %v1015 = vunpack.c.l.bf16 %v1014
    %v1016 = vpack.c.bf16 %v1012, %v1012
    %v1018 = vsel %vm337, %v1016, 0
    %1020 = vmatprep.subr.bf16.mxu0 0
    %1021 = vmatpush1.bf16.msra.mxu0 0
    %1022 = vmatprep.subr.bf16.mxu0 0
    %1023 = vmatpush1.bf16.msra.mxu0 0
    %1024 = vmatprep.subr.bf16.mxu0 0
    %1025 = vmatpush1.bf16.msra.mxu0 0
    %1026 = vmatprep.subr.bf16.mxu0 0
    %1027 = vmatpush1.bf16.msra.mxu0 0
    %1028 = vmatprep.subr.bf16.mxu0 0
    %1029 = vmatpush1.bf16.msra.mxu0 0
    %1030 = vmatprep.subr.bf16.mxu0 0
    %1031 = vmatpush1.bf16.msra.mxu0 0
    %1032 = vmatprep.subr.bf16.mxu0 0
    %1033 = vmatpush1.bf16.msra.mxu0 %v334
    %1034 = vmatprep.subr.bf16.mxu0 0
    %1035 = vmatpush1.bf16.msra.mxu0 %v333
    %1036 = vmatprep.subr.bf16.mxu0 0
    %1037 = vmatpush2.bf16.msra.mxu0 0
    %1038 = vmatprep.subr.bf16.mxu0 0
    %1039 = vmatpush2.bf16.msra.mxu0 0
    %1040 = vmatprep.subr.bf16.mxu0 0
    %1041 = vmatpush2.bf16.msra.mxu0 0
    %1042 = vmatprep.subr.bf16.mxu0 0
    %1043 = vmatpush2.bf16.msra.mxu0 0
    %1044 = vmatprep.subr.bf16.mxu0 0
    %1045 = vmatpush2.bf16.msra.mxu0 0
    %1046 = vmatprep.subr.bf16.mxu0 0
    %1047 = vmatpush2.bf16.msra.mxu0 0
    %1048 = vmatprep.subr.bf16.mxu0 0
    %1049 = vmatpush2.bf16.msra.mxu0 0
    %1050 = vmatprep.subr.bf16.mxu0 0
    %1051 = vmatpush2.bf16.msra.mxu0 0
    %1052 = vmatprep.mubr.bf16.mxu0 0
    %1053 = vmatmul.mubr.bf16.gmra.mxu0 %v1018
    %v1054 = vpop.f32.mrf.mxu0
    %v1055 = vadd.f32 0.0, %v1054
    %v1056 = vpop.f32.mrf.mxu0
    %v1057 = vpop.f32.mrf.mxu0
    %v1058 = vpop.f32.mrf.mxu0
    %1059 = vdwg.mxu0
    %v1060 = vadd.f32 %v1015, %v1055
    %v1061 = vxor.u32 %v1060, 2147483648
    %v1062 = vmul.f32 %v1061, 1.442695
    %v1063 = vpow.pop %v1062
    %v1064 = vadd.f32 %v1063, 1.0
    %v1065 = vrcp.pop %v1064
    %v1066 = vmul.f32 1.0, %v1065
    %v1067 = vtanh.pop %v1060
    %v1068 = vld [vmem:[#allocation5] sm:$0xff]
    %1070 = vrot.lane.b32.xlu0 %v1068, 32
    %v1071 = vpop.permute.xlu0 %1070
    %v1073 = vmul.f32 %v1066, %v1071
    %1075 = vrot.lane.b32.xlu0 %v1067, 64
    %v1076 = vpop.permute.xlu0 %1075
    %v1078 = vmul.f32 %v1066, %v1076
    %1080 = vrot.lane.b32.xlu0 %v1078, 32
    %v1081 = vpop.permute.xlu0 %1080
    %v1083 = vadd.f32 %v1073, %v1081
    %v1084 = vtanh.pop %v1083
    %1086 = vrot.lane.b32.xlu0 %v1084, 64
    %v1087 = vpop.permute.xlu0 %1086
    %v1089 = vmul.f32 %v1066, %v1087
    %1091 = vrot.lane.b32.xlu0 %v1083, 96
    %v1092 = vpop.permute.xlu0 %1091
    %1094 = vst.msk [vmem:[#allocation5] sm:$0xff] %vm337, %v1092
    %1096 = vrot.lane.b32.xlu0 %v1089, 32
    %v1097 = vpop.permute.xlu0 %1096
    %1099 = vst.msk [vmem:[#allocation4] sm:$0xff] %vm337, %v1097
    %v1100 = vpack.c.bf16 %v1089, %v1089
    %v1102 = vunpack.c.l.b16 %v1100
    %v1103 = vpack.c.b16 %v1102, %v1102
    %1104 = vrot.lane.b32.xlu0 %v1103, 32
    %v1105 = vpop.permute.xlu0 %1104
    %s1107 = scalar_lea.vmem [#allocation2], 28
    %1108 = vst.msk [vmem:[%s1107] sm:$0xf] %vm428, %v1105
    %v1109 = vld [vmem:[#allocation2] sm:$0xf]
    %v1110 = vld [vmem:[#allocation2 + $0x4] sm:$0xf]
    %v1111 = vld [vmem:[#allocation2 + $0x8] sm:$0xf]
    %v1112 = vld [vmem:[#allocation2 + $0xc] sm:$0xf]
    %v1113 = vld [vmem:[#allocation2 + $0x10] sm:$0xf]
    %v1114 = vld [vmem:[#allocation2 + $0x14] sm:$0xf]
    %v1115 = vld [vmem:[#allocation2 + $0x18] sm:$0xf]
    %v1116 = vld [vmem:[#allocation2 + $0x1c] sm:$0xf]
    %v1117 = vld [vmem:[#allocation12] sm:$0xf]
    %v1118 = vld [vmem:[#allocation12 + $0x4] sm:$0xf]
    %v1119 = vld [vmem:[#allocation12 + $0x8] sm:$0xf]
    %v1120 = vld [vmem:[#allocation12 + $0xc] sm:$0xf]
    %v1121 = vld [vmem:[%s6] sm:$0x1]
    %v1123 = vlaneseq
    %v1124 = vshrl.u32 %v1123, 7
    %v1125 = vsub.s32 0, %v1124
    %v1126 = vrot.slane %v1121, %v1125
    %v1136 = vunpack.c.l.b16 %v1109
    %v1137 = vunpack.c.l.b16 %v1110
    %v1138 = vunpack.c.l.b16 %v1111
    %v1139 = vunpack.c.l.b16 %v1112
    %v1140 = vunpack.c.l.b16 %v1113
    %v1141 = vunpack.c.l.b16 %v1114
    %v1142 = vunpack.c.l.b16 %v1115
    %v1143 = vunpack.c.l.b16 %v1116
    %v1144 = vpack.c.b16 %v1137, %v1136
    %v1145 = vpack.c.b16 %v1139, %v1138
    %v1146 = vpack.c.b16 %v1141, %v1140
    %v1147 = vpack.c.b16 %v1143, %v1142
    %v1152 = vunpack.c.l.b16 %v1117
    %v1153 = vunpack.c.l.b16 %v1118
    %v1154 = vunpack.c.l.b16 %v1119
    %v1155 = vunpack.c.l.b16 %v1120
    %v1156 = vpack.c.b16 %v1153, %v1152
    %v1157 = vpack.c.b16 %v1155, %v1154
    %v1161 = vsel %vm337, %v1144, 0
    %v1164 = vsel %vm337, %v1145, 0
    %v1167 = vsel %vm337, %v1146, 0
    %v1170 = vsel %vm337, %v1147, 0
    %1172 = vmatprep.subr.bf16.mxu0 0
    %1173 = vmatpush1.bf16.msra.mxu0 0
    %1174 = vmatprep.subr.bf16.mxu0 0
    %1175 = vmatpush1.bf16.msra.mxu0 0
    %1176 = vmatprep.subr.bf16.mxu0 0
    %1177 = vmatpush1.bf16.msra.mxu0 0
    %1178 = vmatprep.subr.bf16.mxu0 0
    %1179 = vmatpush1.bf16.msra.mxu0 0
    %1180 = vmatprep.subr.bf16.mxu0 0
    %1181 = vmatpush1.bf16.msra.mxu0 0
    %1182 = vmatprep.subr.bf16.mxu0 0
    %1183 = vmatpush1.bf16.msra.mxu0 0
    %1184 = vmatprep.subr.bf16.mxu0 0
    %1185 = vmatpush1.bf16.msra.mxu0 %v1157
    %1186 = vmatprep.subr.bf16.mxu0 0
    %1187 = vmatpush1.bf16.msra.mxu0 %v1156
    %1188 = vmatprep.subr.bf16.mxu0 0
    %1189 = vmatpush2.bf16.msra.mxu0 0
    %1190 = vmatprep.subr.bf16.mxu0 0
    %1191 = vmatpush2.bf16.msra.mxu0 0
    %1192 = vmatprep.subr.bf16.mxu0 0
    %1193 = vmatpush2.bf16.msra.mxu0 0
    %1194 = vmatprep.subr.bf16.mxu0 0
    %1195 = vmatpush2.bf16.msra.mxu0 0
    %1196 = vmatprep.subr.bf16.mxu0 0
    %1197 = vmatpush2.bf16.msra.mxu0 0
    %1198 = vmatprep.subr.bf16.mxu0 0
    %1199 = vmatpush2.bf16.msra.mxu0 0
    %1200 = vmatprep.subr.bf16.mxu0 0
    %1201 = vmatpush2.bf16.msra.mxu0 0
    %1202 = vmatprep.subr.bf16.mxu0 0
    %1203 = vmatpush2.bf16.msra.mxu0 0
    %1204 = vmatprep.mubr.bf16.mxu0 0
    %1205 = vmatmul.mubr.bf16.gmra.mxu0 %v1161
    %v1206 = vpop.f32.mrf.mxu0
    %v1207 = vadd.f32 %v1126, %v1206
    %v1208 = vpop.f32.mrf.mxu0
    %v1209 = vpop.f32.mrf.mxu0
    %v1210 = vadd.f32 %v1126, %v1209
    %v1211 = vpop.f32.mrf.mxu0
    %1212 = vmatprep.mubr.bf16.mxu0 0
    %1213 = vmatmul.mubr.bf16.gmra.mxu0 %v1164
    %v1214 = vpop.f32.mrf.mxu0
    %v1215 = vadd.f32 %v1126, %v1214
    %v1216 = vpop.f32.mrf.mxu0
    %v1217 = vpop.f32.mrf.mxu0
    %v1218 = vadd.f32 %v1126, %v1217
    %v1219 = vpop.f32.mrf.mxu0
    %1220 = vmatprep.mubr.bf16.mxu0 0
    %1221 = vmatmul.mubr.bf16.gmra.mxu0 %v1167
    %v1222 = vpop.f32.mrf.mxu0
    %v1223 = vadd.f32 %v1126, %v1222
    %v1224 = vpop.f32.mrf.mxu0
    %v1225 = vpop.f32.mrf.mxu0
    %v1226 = vadd.f32 %v1126, %v1225
    %v1227 = vpop.f32.mrf.mxu0
    %1228 = vmatprep.mubr.bf16.mxu0 0
    %1229 = vmatmul.mubr.bf16.gmra.mxu0 %v1170
    %v1230 = vpop.f32.mrf.mxu0
    %v1231 = vadd.f32 %v1126, %v1230
    %v1232 = vpop.f32.mrf.mxu0
    %v1233 = vpop.f32.mrf.mxu0
    %v1234 = vadd.f32 %v1126, %v1233
    %v1235 = vpop.f32.mrf.mxu0
    %1236 = vdwg.mxu0
    %v1237 = vpack.c.bf16 %v1207, %v1207
    %v1238 = vpack.c.bf16 %v1210, %v1210
    %v1239 = vpack.c.bf16 %v1215, %v1215
    %v1240 = vpack.c.bf16 %v1218, %v1218
    %v1241 = vpack.c.bf16 %v1223, %v1223
    %v1242 = vpack.c.bf16 %v1226, %v1226
    %v1243 = vpack.c.bf16 %v1231, %v1231
    %v1244 = vpack.c.bf16 %v1234, %v1234
    %1245 = vst [vmem:[#allocation3] sm:$0xf] %v1237
    %1246 = vst [vmem:[#allocation3 + $0x4] sm:$0xf] %v1238
    %1247 = vst [vmem:[#allocation3 + $0x8] sm:$0xf] %v1239
    %1248 = vst [vmem:[#allocation3 + $0xc] sm:$0xf] %v1240
    %1249 = vst [vmem:[#allocation3 + $0x10] sm:$0xf] %v1241
    %1250 = vst [vmem:[#allocation3 + $0x14] sm:$0xf] %v1242
    %1251 = vst [vmem:[#allocation3 + $0x18] sm:$0xf] %v1243
    %1252 = vst [vmem:[#allocation3 + $0x1c] sm:$0xf] %v1244
    %v1253 = vld [vmem:[#allocation14] sm:$0xf]
    %v1254 = vld [vmem:[#allocation14 + $0x4] sm:$0xf]
    %v1255 = vld [vmem:[#allocation14 + $0x8] sm:$0xf]
    %v1256 = vld [vmem:[#allocation14 + $0xc] sm:$0xf]
    %s1257 = scalar_lea.vmem [#allocation4], 8
    %v1258 = vld [vmem:[%s1257] sm:$0xff]
    %v1259 = vld [vmem:[#allocation3] sm:$0xf]
    %v1260 = vunpack.c.l.bf16 %v1259
    %v1261 = vpack.c.bf16 %v1258, %v1258
    %v1266 = vunpack.c.l.b16 %v1253
    %v1267 = vunpack.c.l.b16 %v1254
    %v1268 = vunpack.c.l.b16 %v1255
    %v1269 = vunpack.c.l.b16 %v1256
    %v1270 = vpack.c.b16 %v1267, %v1266
    %v1271 = vpack.c.b16 %v1269, %v1268
    %v1275 = vsel %vm337, %v1261, 0
    %1277 = vmatprep.subr.bf16.mxu0 0
    %1278 = vmatpush1.bf16.msra.mxu0 0
    %1279 = vmatprep.subr.bf16.mxu0 0
    %1280 = vmatpush1.bf16.msra.mxu0 0
    %1281 = vmatprep.subr.bf16.mxu0 0
    %1282 = vmatpush1.bf16.msra.mxu0 0
    %1283 = vmatprep.subr.bf16.mxu0 0
    %1284 = vmatpush1.bf16.msra.mxu0 0
    %1285 = vmatprep.subr.bf16.mxu0 0
    %1286 = vmatpush1.bf16.msra.mxu0 0
    %1287 = vmatprep.subr.bf16.mxu0 0
    %1288 = vmatpush1.bf16.msra.mxu0 0
    %1289 = vmatprep.subr.bf16.mxu0 0
    %1290 = vmatpush1.bf16.msra.mxu0 %v1271
    %1291 = vmatprep.subr.bf16.mxu0 0
    %1292 = vmatpush1.bf16.msra.mxu0 %v1270
    %1293 = vmatprep.subr.bf16.mxu0 0
    %1294 = vmatpush2.bf16.msra.mxu0 0
    %1295 = vmatprep.subr.bf16.mxu0 0
    %1296 = vmatpush2.bf16.msra.mxu0 0
    %1297 = vmatprep.subr.bf16.mxu0 0
    %1298 = vmatpush2.bf16.msra.mxu0 0
    %1299 = vmatprep.subr.bf16.mxu0 0
    %1300 = vmatpush2.bf16.msra.mxu0 0
    %1301 = vmatprep.subr.bf16.mxu0 0
    %1302 = vmatpush2.bf16.msra.mxu0 0
    %1303 = vmatprep.subr.bf16.mxu0 0
    %1304 = vmatpush2.bf16.msra.mxu0 0
    %1305 = vmatprep.subr.bf16.mxu0 0
    %1306 = vmatpush2.bf16.msra.mxu0 0
    %1307 = vmatprep.subr.bf16.mxu0 0
    %1308 = vmatpush2.bf16.msra.mxu0 0
    %1309 = vmatprep.mubr.bf16.mxu0 0
    %1310 = vmatmul.mubr.bf16.gmra.mxu0 %v1275
    %v1311 = vpop.f32.mrf.mxu0
    %v1312 = vadd.f32 0.0, %v1311
    %v1313 = vpop.f32.mrf.mxu0
    %v1314 = vpop.f32.mrf.mxu0
    %v1315 = vpop.f32.mrf.mxu0
    %1316 = vdwg.mxu0
    %v1317 = vadd.f32 %v1260, %v1312
    %v1318 = vxor.u32 %v1317, 2147483648
    %v1319 = vmul.f32 %v1318, 1.442695
    %v1320 = vpow.pop %v1319
    %v1321 = vadd.f32 %v1320, 1.0
    %v1322 = vrcp.pop %v1321
    %v1323 = vmul.f32 1.0, %v1322
    %v1324 = vtanh.pop %v1317
    %s1325 = scalar_lea.vmem [#allocation5], 8
    %v1326 = vld [vmem:[%s1325] sm:$0xff]
    %1328 = vrot.lane.b32.xlu0 %v1326, 32
    %v1329 = vpop.permute.xlu0 %1328
    %v1331 = vmul.f32 %v1323, %v1329
    %1333 = vrot.lane.b32.xlu0 %v1324, 64
    %v1334 = vpop.permute.xlu0 %1333
    %v1336 = vmul.f32 %v1323, %v1334
    %1338 = vrot.lane.b32.xlu0 %v1336, 32
    %v1339 = vpop.permute.xlu0 %1338
    %v1341 = vadd.f32 %v1331, %v1339
    %v1342 = vtanh.pop %v1341
    %1344 = vrot.lane.b32.xlu0 %v1342, 64
    %v1345 = vpop.permute.xlu0 %1344
    %v1347 = vmul.f32 %v1323, %v1345
    %1349 = vrot.lane.b32.xlu0 %v1341, 96
    %v1350 = vpop.permute.xlu0 %1349
    %1352 = vst.msk [vmem:[%s1325] sm:$0xff] %vm337, %v1350
    %1354 = vrot.lane.b32.xlu0 %v1347, 32
    %v1355 = vpop.permute.xlu0 %1354
    %1357 = vst.msk [vmem:[%s1257] sm:$0xff] %vm337, %v1355
    %v1358 = vld [vmem:[%s1257] sm:$0xff]
    %v1359 = vld [vmem:[%s431] sm:$0xf]
    %v1360 = vunpack.c.l.bf16 %v1359
    %v1361 = vpack.c.bf16 %v1358, %v1358
    %v1363 = vsel %vm337, %v1361, 0
    %1365 = vmatprep.subr.bf16.mxu0 0
    %1366 = vmatpush1.bf16.msra.mxu0 0
    %1367 = vmatprep.subr.bf16.mxu0 0
    %1368 = vmatpush1.bf16.msra.mxu0 0
    %1369 = vmatprep.subr.bf16.mxu0 0
    %1370 = vmatpush1.bf16.msra.mxu0 0
    %1371 = vmatprep.subr.bf16.mxu0 0
    %1372 = vmatpush1.bf16.msra.mxu0 0
    %1373 = vmatprep.subr.bf16.mxu0 0
    %1374 = vmatpush1.bf16.msra.mxu0 0
    %1375 = vmatprep.subr.bf16.mxu0 0
    %1376 = vmatpush1.bf16.msra.mxu0 0
    %1377 = vmatprep.subr.bf16.mxu0 0
    %1378 = vmatpush1.bf16.msra.mxu0 %v1271
    %1379 = vmatprep.subr.bf16.mxu0 0
    %1380 = vmatpush1.bf16.msra.mxu0 %v1270
    %1381 = vmatprep.subr.bf16.mxu0 0
    %1382 = vmatpush2.bf16.msra.mxu0 0
    %1383 = vmatprep.subr.bf16.mxu0 0
    %1384 = vmatpush2.bf16.msra.mxu0 0
    %1385 = vmatprep.subr.bf16.mxu0 0
    %1386 = vmatpush2.bf16.msra.mxu0 0
    %1387 = vmatprep.subr.bf16.mxu0 0
    %1388 = vmatpush2.bf16.msra.mxu0 0
    %1389 = vmatprep.subr.bf16.mxu0 0
    %1390 = vmatpush2.bf16.msra.mxu0 0
    %1391 = vmatprep.subr.bf16.mxu0 0
    %1392 = vmatpush2.bf16.msra.mxu0 0
    %1393 = vmatprep.subr.bf16.mxu0 0
    %1394 = vmatpush2.bf16.msra.mxu0 0
    %1395 = vmatprep.subr.bf16.mxu0 0
    %1396 = vmatpush2.bf16.msra.mxu0 0
    %1397 = vmatprep.mubr.bf16.mxu0 0
    %1398 = vmatmul.mubr.bf16.gmra.mxu0 %v1363
    %v1399 = vpop.f32.mrf.mxu0
    %v1400 = vadd.f32 0.0, %v1399
    %v1401 = vpop.f32.mrf.mxu0
    %v1402 = vpop.f32.mrf.mxu0
    %v1403 = vpop.f32.mrf.mxu0
    %1404 = vdwg.mxu0
    %v1405 = vadd.f32 %v1360, %v1400
    %v1406 = vxor.u32 %v1405, 2147483648
    %v1407 = vmul.f32 %v1406, 1.442695
    %v1408 = vpow.pop %v1407
    %v1409 = vadd.f32 %v1408, 1.0
    %v1410 = vrcp.pop %v1409
    %v1411 = vmul.f32 1.0, %v1410
    %v1412 = vtanh.pop %v1405
    %v1413 = vld [vmem:[%s1325] sm:$0xff]
    %1415 = vrot.lane.b32.xlu0 %v1413, 32
    %v1416 = vpop.permute.xlu0 %1415
    %v1418 = vmul.f32 %v1411, %v1416
    %1420 = vrot.lane.b32.xlu0 %v1412, 64
    %v1421 = vpop.permute.xlu0 %1420
    %v1423 = vmul.f32 %v1411, %v1421
    %1425 = vrot.lane.b32.xlu0 %v1423, 32
    %v1426 = vpop.permute.xlu0 %1425
    %v1428 = vadd.f32 %v1418, %v1426
    %v1429 = vtanh.pop %v1428
    %1431 = vrot.lane.b32.xlu0 %v1429, 64
    %v1432 = vpop.permute.xlu0 %1431
    %v1434 = vmul.f32 %v1411, %v1432
    %1436 = vrot.lane.b32.xlu0 %v1428, 96
    %v1437 = vpop.permute.xlu0 %1436
    %1439 = vst.msk [vmem:[%s1325] sm:$0xff] %vm337, %v1437
    %1441 = vrot.lane.b32.xlu0 %v1434, 32
    %v1442 = vpop.permute.xlu0 %1441
    %1444 = vst.msk [vmem:[%s1257] sm:$0xff] %vm337, %v1442
    %v1445 = vld [vmem:[%s1257] sm:$0xff]
    %v1446 = vld [vmem:[%s528] sm:$0xf]
    %v1447 = vunpack.c.l.bf16 %v1446
    %v1448 = vpack.c.bf16 %v1445, %v1445
    %v1450 = vsel %vm337, %v1448, 0
    %1452 = vmatprep.subr.bf16.mxu0 0
    %1453 = vmatpush1.bf16.msra.mxu0 0
    %1454 = vmatprep.subr.bf16.mxu0 0
    %1455 = vmatpush1.bf16.msra.mxu0 0
    %1456 = vmatprep.subr.bf16.mxu0 0
    %1457 = vmatpush1.bf16.msra.mxu0 0
    %1458 = vmatprep.subr.bf16.mxu0 0
    %1459 = vmatpush1.bf16.msra.mxu0 0
    %1460 = vmatprep.subr.bf16.mxu0 0
    %1461 = vmatpush1.bf16.msra.mxu0 0
    %1462 = vmatprep.subr.bf16.mxu0 0
    %1463 = vmatpush1.bf16.msra.mxu0 0
    %1464 = vmatprep.subr.bf16.mxu0 0
    %1465 = vmatpush1.bf16.msra.mxu0 %v1271
    %1466 = vmatprep.subr.bf16.mxu0 0
    %1467 = vmatpush1.bf16.msra.mxu0 %v1270
    %1468 = vmatprep.subr.bf16.mxu0 0
    %1469 = vmatpush2.bf16.msra.mxu0 0
    %1470 = vmatprep.subr.bf16.mxu0 0
    %1471 = vmatpush2.bf16.msra.mxu0 0
    %1472 = vmatprep.subr.bf16.mxu0 0
    %1473 = vmatpush2.bf16.msra.mxu0 0
    %1474 = vmatprep.subr.bf16.mxu0 0
    %1475 = vmatpush2.bf16.msra.mxu0 0
    %1476 = vmatprep.subr.bf16.mxu0 0
    %1477 = vmatpush2.bf16.msra.mxu0 0
    %1478 = vmatprep.subr.bf16.mxu0 0
    %1479 = vmatpush2.bf16.msra.mxu0 0
    %1480 = vmatprep.subr.bf16.mxu0 0
    %1481 = vmatpush2.bf16.msra.mxu0 0
    %1482 = vmatprep.subr.bf16.mxu0 0
    %1483 = vmatpush2.bf16.msra.mxu0 0
    %1484 = vmatprep.mubr.bf16.mxu0 0
    %1485 = vmatmul.mubr.bf16.gmra.mxu0 %v1450
    %v1486 = vpop.f32.mrf.mxu0
    %v1487 = vadd.f32 0.0, %v1486
    %v1488 = vpop.f32.mrf.mxu0
    %v1489 = vpop.f32.mrf.mxu0
    %v1490 = vpop.f32.mrf.mxu0
    %1491 = vdwg.mxu0
    %v1492 = vadd.f32 %v1447, %v1487
    %v1493 = vxor.u32 %v1492, 2147483648
    %v1494 = vmul.f32 %v1493, 1.442695
    %v1495 = vpow.pop %v1494
    %v1496 = vadd.f32 %v1495, 1.0
    %v1497 = vrcp.pop %v1496
    %v1498 = vmul.f32 1.0, %v1497
    %v1499 = vtanh.pop %v1492
    %v1500 = vld [vmem:[%s1325] sm:$0xff]
    %1502 = vrot.lane.b32.xlu0 %v1500, 32
    %v1503 = vpop.permute.xlu0 %1502
    %v1505 = vmul.f32 %v1498, %v1503
    %1507 = vrot.lane.b32.xlu0 %v1499, 64
    %v1508 = vpop.permute.xlu0 %1507
    %v1510 = vmul.f32 %v1498, %v1508
    %1512 = vrot.lane.b32.xlu0 %v1510, 32
    %v1513 = vpop.permute.xlu0 %1512
    %v1515 = vadd.f32 %v1505, %v1513
    %v1516 = vtanh.pop %v1515
    %1518 = vrot.lane.b32.xlu0 %v1516, 64
    %v1519 = vpop.permute.xlu0 %1518
    %v1521 = vmul.f32 %v1498, %v1519
    %1523 = vrot.lane.b32.xlu0 %v1515, 96
    %v1524 = vpop.permute.xlu0 %1523
    %1526 = vst.msk [vmem:[%s1325] sm:$0xff] %vm337, %v1524
    %1528 = vrot.lane.b32.xlu0 %v1521, 32
    %v1529 = vpop.permute.xlu0 %1528
    %1531 = vst.msk [vmem:[%s1257] sm:$0xff] %vm337, %v1529
    %v1532 = vld [vmem:[%s1257] sm:$0xff]
    %v1533 = vld [vmem:[%s625] sm:$0xf]
    %v1534 = vunpack.c.l.bf16 %v1533
    %v1535 = vpack.c.bf16 %v1532, %v1532
    %v1537 = vsel %vm337, %v1535, 0
    %1539 = vmatprep.subr.bf16.mxu0 0
    %1540 = vmatpush1.bf16.msra.mxu0 0
    %1541 = vmatprep.subr.bf16.mxu0 0
    %1542 = vmatpush1.bf16.msra.mxu0 0
    %1543 = vmatprep.subr.bf16.mxu0 0
    %1544 = vmatpush1.bf16.msra.mxu0 0
    %1545 = vmatprep.subr.bf16.mxu0 0
    %1546 = vmatpush1.bf16.msra.mxu0 0
    %1547 = vmatprep.subr.bf16.mxu0 0
    %1548 = vmatpush1.bf16.msra.mxu0 0
    %1549 = vmatprep.subr.bf16.mxu0 0
    %1550 = vmatpush1.bf16.msra.mxu0 0
    %1551 = vmatprep.subr.bf16.mxu0 0
    %1552 = vmatpush1.bf16.msra.mxu0 %v1271
    %1553 = vmatprep.subr.bf16.mxu0 0
    %1554 = vmatpush1.bf16.msra.mxu0 %v1270
    %1555 = vmatprep.subr.bf16.mxu0 0
    %1556 = vmatpush2.bf16.msra.mxu0 0
    %1557 = vmatprep.subr.bf16.mxu0 0
    %1558 = vmatpush2.bf16.msra.mxu0 0
    %1559 = vmatprep.subr.bf16.mxu0 0
    %1560 = vmatpush2.bf16.msra.mxu0 0
    %1561 = vmatprep.subr.bf16.mxu0 0
    %1562 = vmatpush2.bf16.msra.mxu0 0
    %1563 = vmatprep.subr.bf16.mxu0 0
    %1564 = vmatpush2.bf16.msra.mxu0 0
    %1565 = vmatprep.subr.bf16.mxu0 0
    %1566 = vmatpush2.bf16.msra.mxu0 0
    %1567 = vmatprep.subr.bf16.mxu0 0
    %1568 = vmatpush2.bf16.msra.mxu0 0
    %1569 = vmatprep.subr.bf16.mxu0 0
    %1570 = vmatpush2.bf16.msra.mxu0 0
    %1571 = vmatprep.mubr.bf16.mxu0 0
    %1572 = vmatmul.mubr.bf16.gmra.mxu0 %v1537
    %v1573 = vpop.f32.mrf.mxu0
    %v1574 = vadd.f32 0.0, %v1573
    %v1575 = vpop.f32.mrf.mxu0
    %v1576 = vpop.f32.mrf.mxu0
    %v1577 = vpop.f32.mrf.mxu0
    %1578 = vdwg.mxu0
    %v1579 = vadd.f32 %v1534, %v1574
    %v1580 = vxor.u32 %v1579, 2147483648
    %v1581 = vmul.f32 %v1580, 1.442695
    %v1582 = vpow.pop %v1581
    %v1583 = vadd.f32 %v1582, 1.0
    %v1584 = vrcp.pop %v1583
    %v1585 = vmul.f32 1.0, %v1584
    %v1586 = vtanh.pop %v1579
    %v1587 = vld [vmem:[%s1325] sm:$0xff]
    %1589 = vrot.lane.b32.xlu0 %v1587, 32
    %v1590 = vpop.permute.xlu0 %1589
    %v1592 = vmul.f32 %v1585, %v1590
    %1594 = vrot.lane.b32.xlu0 %v1586, 64
    %v1595 = vpop.permute.xlu0 %1594
    %v1597 = vmul.f32 %v1585, %v1595
    %1599 = vrot.lane.b32.xlu0 %v1597, 32
    %v1600 = vpop.permute.xlu0 %1599
    %v1602 = vadd.f32 %v1592, %v1600
    %v1603 = vtanh.pop %v1602
    %1605 = vrot.lane.b32.xlu0 %v1603, 64
    %v1606 = vpop.permute.xlu0 %1605
    %v1608 = vmul.f32 %v1585, %v1606
    %1610 = vrot.lane.b32.xlu0 %v1602, 96
    %v1611 = vpop.permute.xlu0 %1610
    %1613 = vst.msk [vmem:[%s1325] sm:$0xff] %vm337, %v1611
    %1615 = vrot.lane.b32.xlu0 %v1608, 32
    %v1616 = vpop.permute.xlu0 %1615
    %1618 = vst.msk [vmem:[%s1257] sm:$0xff] %vm337, %v1616
    %v1619 = vld [vmem:[%s1257] sm:$0xff]
    %v1620 = vld [vmem:[%s722] sm:$0xf]
    %v1621 = vunpack.c.l.bf16 %v1620
    %v1622 = vpack.c.bf16 %v1619, %v1619
    %v1624 = vsel %vm337, %v1622, 0
    %1626 = vmatprep.subr.bf16.mxu0 0
    %1627 = vmatpush1.bf16.msra.mxu0 0
    %1628 = vmatprep.subr.bf16.mxu0 0
    %1629 = vmatpush1.bf16.msra.mxu0 0
    %1630 = vmatprep.subr.bf16.mxu0 0
    %1631 = vmatpush1.bf16.msra.mxu0 0
    %1632 = vmatprep.subr.bf16.mxu0 0
    %1633 = vmatpush1.bf16.msra.mxu0 0
    %1634 = vmatprep.subr.bf16.mxu0 0
    %1635 = vmatpush1.bf16.msra.mxu0 0
    %1636 = vmatprep.subr.bf16.mxu0 0
    %1637 = vmatpush1.bf16.msra.mxu0 0
    %1638 = vmatprep.subr.bf16.mxu0 0
    %1639 = vmatpush1.bf16.msra.mxu0 %v1271
    %1640 = vmatprep.subr.bf16.mxu0 0
    %1641 = vmatpush1.bf16.msra.mxu0 %v1270
    %1642 = vmatprep.subr.bf16.mxu0 0
    %1643 = vmatpush2.bf16.msra.mxu0 0
    %1644 = vmatprep.subr.bf16.mxu0 0
    %1645 = vmatpush2.bf16.msra.mxu0 0
    %1646 = vmatprep.subr.bf16.mxu0 0
    %1647 = vmatpush2.bf16.msra.mxu0 0
    %1648 = vmatprep.subr.bf16.mxu0 0
    %1649 = vmatpush2.bf16.msra.mxu0 0
    %1650 = vmatprep.subr.bf16.mxu0 0
    %1651 = vmatpush2.bf16.msra.mxu0 0
    %1652 = vmatprep.subr.bf16.mxu0 0
    %1653 = vmatpush2.bf16.msra.mxu0 0
    %1654 = vmatprep.subr.bf16.mxu0 0
    %1655 = vmatpush2.bf16.msra.mxu0 0
    %1656 = vmatprep.subr.bf16.mxu0 0
    %1657 = vmatpush2.bf16.msra.mxu0 0
    %1658 = vmatprep.mubr.bf16.mxu0 0
    %1659 = vmatmul.mubr.bf16.gmra.mxu0 %v1624
    %v1660 = vpop.f32.mrf.mxu0
    %v1661 = vadd.f32 0.0, %v1660
    %v1662 = vpop.f32.mrf.mxu0
    %v1663 = vpop.f32.mrf.mxu0
    %v1664 = vpop.f32.mrf.mxu0
    %1665 = vdwg.mxu0
    %v1666 = vadd.f32 %v1621, %v1661
    %v1667 = vxor.u32 %v1666, 2147483648
    %v1668 = vmul.f32 %v1667, 1.442695
    %v1669 = vpow.pop %v1668
    %v1670 = vadd.f32 %v1669, 1.0
    %v1671 = vrcp.pop %v1670
    %v1672 = vmul.f32 1.0, %v1671
    %v1673 = vtanh.pop %v1666
    %v1674 = vld [vmem:[%s1325] sm:$0xff]
    %1676 = vrot.lane.b32.xlu0 %v1674, 32
    %v1677 = vpop.permute.xlu0 %1676
    %v1679 = vmul.f32 %v1672, %v1677
    %1681 = vrot.lane.b32.xlu0 %v1673, 64
    %v1682 = vpop.permute.xlu0 %1681
    %v1684 = vmul.f32 %v1672, %v1682
    %1686 = vrot.lane.b32.xlu0 %v1684, 32
    %v1687 = vpop.permute.xlu0 %1686
    %v1689 = vadd.f32 %v1679, %v1687
    %v1690 = vtanh.pop %v1689
    %1692 = vrot.lane.b32.xlu0 %v1690, 64
    %v1693 = vpop.permute.xlu0 %1692
    %v1695 = vmul.f32 %v1672, %v1693
    %1697 = vrot.lane.b32.xlu0 %v1689, 96
    %v1698 = vpop.permute.xlu0 %1697
    %1700 = vst.msk [vmem:[%s1325] sm:$0xff] %vm337, %v1698
    %1702 = vrot.lane.b32.xlu0 %v1695, 32
    %v1703 = vpop.permute.xlu0 %1702
    %1705 = vst.msk [vmem:[%s1257] sm:$0xff] %vm337, %v1703
    %v1706 = vld [vmem:[%s1257] sm:$0xff]
    %v1707 = vld [vmem:[%s819] sm:$0xf]
    %v1708 = vunpack.c.l.bf16 %v1707
    %v1709 = vpack.c.bf16 %v1706, %v1706
    %v1711 = vsel %vm337, %v1709, 0
    %1713 = vmatprep.subr.bf16.mxu0 0
    %1714 = vmatpush1.bf16.msra.mxu0 0
    %1715 = vmatprep.subr.bf16.mxu0 0
    %1716 = vmatpush1.bf16.msra.mxu0 0
    %1717 = vmatprep.subr.bf16.mxu0 0
    %1718 = vmatpush1.bf16.msra.mxu0 0
    %1719 = vmatprep.subr.bf16.mxu0 0
    %1720 = vmatpush1.bf16.msra.mxu0 0
    %1721 = vmatprep.subr.bf16.mxu0 0
    %1722 = vmatpush1.bf16.msra.mxu0 0
    %1723 = vmatprep.subr.bf16.mxu0 0
    %1724 = vmatpush1.bf16.msra.mxu0 0
    %1725 = vmatprep.subr.bf16.mxu0 0
    %1726 = vmatpush1.bf16.msra.mxu0 %v1271
    %1727 = vmatprep.subr.bf16.mxu0 0
    %1728 = vmatpush1.bf16.msra.mxu0 %v1270
    %1729 = vmatprep.subr.bf16.mxu0 0
    %1730 = vmatpush2.bf16.msra.mxu0 0
    %1731 = vmatprep.subr.bf16.mxu0 0
    %1732 = vmatpush2.bf16.msra.mxu0 0
    %1733 = vmatprep.subr.bf16.mxu0 0
    %1734 = vmatpush2.bf16.msra.mxu0 0
    %1735 = vmatprep.subr.bf16.mxu0 0
    %1736 = vmatpush2.bf16.msra.mxu0 0
    %1737 = vmatprep.subr.bf16.mxu0 0
    %1738 = vmatpush2.bf16.msra.mxu0 0
    %1739 = vmatprep.subr.bf16.mxu0 0
    %1740 = vmatpush2.bf16.msra.mxu0 0
    %1741 = vmatprep.subr.bf16.mxu0 0
    %1742 = vmatpush2.bf16.msra.mxu0 0
    %1743 = vmatprep.subr.bf16.mxu0 0
    %1744 = vmatpush2.bf16.msra.mxu0 0
    %1745 = vmatprep.mubr.bf16.mxu0 0
    %1746 = vmatmul.mubr.bf16.gmra.mxu0 %v1711
    %v1747 = vpop.f32.mrf.mxu0
    %v1748 = vadd.f32 0.0, %v1747
    %v1749 = vpop.f32.mrf.mxu0
    %v1750 = vpop.f32.mrf.mxu0
    %v1751 = vpop.f32.mrf.mxu0
    %1752 = vdwg.mxu0
    %v1753 = vadd.f32 %v1708, %v1748
    %v1754 = vxor.u32 %v1753, 2147483648
    %v1755 = vmul.f32 %v1754, 1.442695
    %v1756 = vpow.pop %v1755
    %v1757 = vadd.f32 %v1756, 1.0
    %v1758 = vrcp.pop %v1757
    %v1759 = vmul.f32 1.0, %v1758
    %v1760 = vtanh.pop %v1753
    %v1761 = vld [vmem:[%s1325] sm:$0xff]
    %1763 = vrot.lane.b32.xlu0 %v1761, 32
    %v1764 = vpop.permute.xlu0 %1763
    %v1766 = vmul.f32 %v1759, %v1764
    %1768 = vrot.lane.b32.xlu0 %v1760, 64
    %v1769 = vpop.permute.xlu0 %1768
    %v1771 = vmul.f32 %v1759, %v1769
    %1773 = vrot.lane.b32.xlu0 %v1771, 32
    %v1774 = vpop.permute.xlu0 %1773
    %v1776 = vadd.f32 %v1766, %v1774
    %v1777 = vtanh.pop %v1776
    %1779 = vrot.lane.b32.xlu0 %v1777, 64
    %v1780 = vpop.permute.xlu0 %1779
    %v1782 = vmul.f32 %v1759, %v1780
    %1784 = vrot.lane.b32.xlu0 %v1776, 96
    %v1785 = vpop.permute.xlu0 %1784
    %1787 = vst.msk [vmem:[%s1325] sm:$0xff] %vm337, %v1785
    %1789 = vrot.lane.b32.xlu0 %v1782, 32
    %v1790 = vpop.permute.xlu0 %1789
    %1792 = vst.msk [vmem:[%s1257] sm:$0xff] %vm337, %v1790
    %v1793 = vld [vmem:[%s1257] sm:$0xff]
    %v1794 = vld [vmem:[%s916] sm:$0xf]
    %v1795 = vunpack.c.l.bf16 %v1794
    %v1796 = vpack.c.bf16 %v1793, %v1793
    %v1798 = vsel %vm337, %v1796, 0
    %1800 = vmatprep.subr.bf16.mxu0 0
    %1801 = vmatpush1.bf16.msra.mxu0 0
    %1802 = vmatprep.subr.bf16.mxu0 0
    %1803 = vmatpush1.bf16.msra.mxu0 0
    %1804 = vmatprep.subr.bf16.mxu0 0
    %1805 = vmatpush1.bf16.msra.mxu0 0
    %1806 = vmatprep.subr.bf16.mxu0 0
    %1807 = vmatpush1.bf16.msra.mxu0 0
    %1808 = vmatprep.subr.bf16.mxu0 0
    %1809 = vmatpush1.bf16.msra.mxu0 0
    %1810 = vmatprep.subr.bf16.mxu0 0
    %1811 = vmatpush1.bf16.msra.mxu0 0
    %1812 = vmatprep.subr.bf16.mxu0 0
    %1813 = vmatpush1.bf16.msra.mxu0 %v1271
    %1814 = vmatprep.subr.bf16.mxu0 0
    %1815 = vmatpush1.bf16.msra.mxu0 %v1270
    %1816 = vmatprep.subr.bf16.mxu0 0
    %1817 = vmatpush2.bf16.msra.mxu0 0
    %1818 = vmatprep.subr.bf16.mxu0 0
    %1819 = vmatpush2.bf16.msra.mxu0 0
    %1820 = vmatprep.subr.bf16.mxu0 0
    %1821 = vmatpush2.bf16.msra.mxu0 0
    %1822 = vmatprep.subr.bf16.mxu0 0
    %1823 = vmatpush2.bf16.msra.mxu0 0
    %1824 = vmatprep.subr.bf16.mxu0 0
    %1825 = vmatpush2.bf16.msra.mxu0 0
    %1826 = vmatprep.subr.bf16.mxu0 0
    %1827 = vmatpush2.bf16.msra.mxu0 0
    %1828 = vmatprep.subr.bf16.mxu0 0
    %1829 = vmatpush2.bf16.msra.mxu0 0
    %1830 = vmatprep.subr.bf16.mxu0 0
    %1831 = vmatpush2.bf16.msra.mxu0 0
    %1832 = vmatprep.mubr.bf16.mxu0 0
    %1833 = vmatmul.mubr.bf16.gmra.mxu0 %v1798
    %v1834 = vpop.f32.mrf.mxu0
    %v1835 = vadd.f32 0.0, %v1834
    %v1836 = vpop.f32.mrf.mxu0
    %v1837 = vpop.f32.mrf.mxu0
    %v1838 = vpop.f32.mrf.mxu0
    %1839 = vdwg.mxu0
    %v1840 = vadd.f32 %v1795, %v1835
    %v1841 = vxor.u32 %v1840, 2147483648
    %v1842 = vmul.f32 %v1841, 1.442695
    %v1843 = vpow.pop %v1842
    %v1844 = vadd.f32 %v1843, 1.0
    %v1845 = vrcp.pop %v1844
    %v1846 = vmul.f32 1.0, %v1845
    %v1847 = vtanh.pop %v1840
    %v1848 = vld [vmem:[%s1325] sm:$0xff]
    %1850 = vrot.lane.b32.xlu0 %v1848, 32
    %v1851 = vpop.permute.xlu0 %1850
    %v1853 = vmul.f32 %v1846, %v1851
    %1855 = vrot.lane.b32.xlu0 %v1847, 64
    %v1856 = vpop.permute.xlu0 %1855
    %v1858 = vmul.f32 %v1846, %v1856
    %1860 = vrot.lane.b32.xlu0 %v1858, 32
    %v1861 = vpop.permute.xlu0 %1860
    %v1863 = vadd.f32 %v1853, %v1861
    %v1864 = vtanh.pop %v1863
    %1866 = vrot.lane.b32.xlu0 %v1864, 64
    %v1867 = vpop.permute.xlu0 %1866
    %v1869 = vmul.f32 %v1846, %v1867
    %1871 = vrot.lane.b32.xlu0 %v1863, 96
    %v1872 = vpop.permute.xlu0 %1871
    %1874 = vst.msk [vmem:[%s1325] sm:$0xff] %vm337, %v1872
    %1876 = vrot.lane.b32.xlu0 %v1869, 32
    %v1877 = vpop.permute.xlu0 %1876
    %1879 = vst.msk [vmem:[%s1257] sm:$0xff] %vm337, %v1877
    %v1880 = vld [vmem:[%s1257] sm:$0xff]
    %v1881 = vld [vmem:[%s1013] sm:$0xf]
    %v1882 = vunpack.c.l.bf16 %v1881
    %v1883 = vpack.c.bf16 %v1880, %v1880
    %v1885 = vsel %vm337, %v1883, 0
    %1887 = vmatprep.subr.bf16.mxu0 0
    %1888 = vmatpush1.bf16.msra.mxu0 0
    %1889 = vmatprep.subr.bf16.mxu0 0
    %1890 = vmatpush1.bf16.msra.mxu0 0
    %1891 = vmatprep.subr.bf16.mxu0 0
    %1892 = vmatpush1.bf16.msra.mxu0 0
    %1893 = vmatprep.subr.bf16.mxu0 0
    %1894 = vmatpush1.bf16.msra.mxu0 0
    %1895 = vmatprep.subr.bf16.mxu0 0
    %1896 = vmatpush1.bf16.msra.mxu0 0
    %1897 = vmatprep.subr.bf16.mxu0 0
    %1898 = vmatpush1.bf16.msra.mxu0 0
    %1899 = vmatprep.subr.bf16.mxu0 0
    %1900 = vmatpush1.bf16.msra.mxu0 %v1271
    %1901 = vmatprep.subr.bf16.mxu0 0
    %1902 = vmatpush1.bf16.msra.mxu0 %v1270
    %1903 = vmatprep.subr.bf16.mxu0 0
    %1904 = vmatpush2.bf16.msra.mxu0 0
    %1905 = vmatprep.subr.bf16.mxu0 0
    %1906 = vmatpush2.bf16.msra.mxu0 0
    %1907 = vmatprep.subr.bf16.mxu0 0
    %1908 = vmatpush2.bf16.msra.mxu0 0
    %1909 = vmatprep.subr.bf16.mxu0 0
    %1910 = vmatpush2.bf16.msra.mxu0 0
    %1911 = vmatprep.subr.bf16.mxu0 0
    %1912 = vmatpush2.bf16.msra.mxu0 0
    %1913 = vmatprep.subr.bf16.mxu0 0
    %1914 = vmatpush2.bf16.msra.mxu0 0
    %1915 = vmatprep.subr.bf16.mxu0 0
    %1916 = vmatpush2.bf16.msra.mxu0 0
    %1917 = vmatprep.subr.bf16.mxu0 0
    %1918 = vmatpush2.bf16.msra.mxu0 0
    %1919 = vmatprep.mubr.bf16.mxu0 0
    %1920 = vmatmul.mubr.bf16.gmra.mxu0 %v1885
    %v1921 = vpop.f32.mrf.mxu0
    %v1922 = vadd.f32 0.0, %v1921
    %v1923 = vpop.f32.mrf.mxu0
    %v1924 = vpop.f32.mrf.mxu0
    %v1925 = vpop.f32.mrf.mxu0
    %1926 = vdwg.mxu0
    %v1927 = vadd.f32 %v1882, %v1922
    %v1928 = vxor.u32 %v1927, 2147483648
    %v1929 = vmul.f32 %v1928, 1.442695
    %v1930 = vpow.pop %v1929
    %v1931 = vadd.f32 %v1930, 1.0
    %v1932 = vrcp.pop %v1931
    %v1933 = vmul.f32 1.0, %v1932
    %v1934 = vtanh.pop %v1927
    %v1935 = vld [vmem:[%s1325] sm:$0xff]
    %1937 = vrot.lane.b32.xlu0 %v1935, 32
    %v1938 = vpop.permute.xlu0 %1937
    %v1940 = vmul.f32 %v1933, %v1938
    %1942 = vrot.lane.b32.xlu0 %v1934, 64
    %v1943 = vpop.permute.xlu0 %1942
    %v1945 = vmul.f32 %v1933, %v1943
    %1947 = vrot.lane.b32.xlu0 %v1945, 32
    %v1948 = vpop.permute.xlu0 %1947
    %v1950 = vadd.f32 %v1940, %v1948
    %v1951 = vtanh.pop %v1950
    %1953 = vrot.lane.b32.xlu0 %v1951, 64
    %v1954 = vpop.permute.xlu0 %1953
    %v1956 = vmul.f32 %v1933, %v1954
    %1958 = vrot.lane.b32.xlu0 %v1950, 96
    %v1959 = vpop.permute.xlu0 %1958
    %1961 = vst.msk [vmem:[%s1325] sm:$0xff] %vm337, %v1959
    %1963 = vrot.lane.b32.xlu0 %v1956, 32
    %v1964 = vpop.permute.xlu0 %1963
    %1966 = vst.msk [vmem:[%s1257] sm:$0xff] %vm337, %v1964
    // Predicated region
    $region66: #{tpu_custom_call.1} parent=1 // pred_check
      %p1967 = pneg %p116
    $region67: #{tpu_custom_call.1} parent=1 // pred_check_branch
      %1969 = sbr.rel (%p1967) target = $region69
    $region68: #{tpu_custom_call.1} parent=1 // pred_region
      %v1970 = vld [vmem:[#allocation15] sm:$0xf]
      %v1971 = vld [vmem:[#allocation15 + $0x4] sm:$0xf]
      %v1972 = vld [vmem:[#allocation15 + $0x8] sm:$0xf]
      %v1973 = vld [vmem:[#allocation15 + $0xc] sm:$0xf]
      %v1974 = vld [vmem:[%s8] sm:$0x1]
      %v1975 = vld [vmem:[%s1257] sm:$0xff]
      %v1976 = vpack.c.bf16 %v1975, %v1975
      %v1978 = vlaneseq
      %v1979 = vshrl.u32 %v1978, 7
      %v1980 = vsub.s32 0, %v1979
      %v1981 = vrot.slane %v1974, %v1980
      %v1987 = vunpack.c.l.b16 %v1970
      %v1988 = vunpack.c.l.b16 %v1971
      %v1989 = vunpack.c.l.b16 %v1972
      %v1990 = vunpack.c.l.b16 %v1973
      %v1991 = vpack.c.b16 %v1988, %v1987
      %v1992 = vpack.c.b16 %v1990, %v1989
      %v1996 = vsel %vm337, %v1976, 0
      %1998 = vmatprep.subr.bf16.mxu0 0
      %1999 = vmatpush1.bf16.msra.mxu0 0
      %2000 = vmatprep.subr.bf16.mxu0 0
      %2001 = vmatpush1.bf16.msra.mxu0 0
      %2002 = vmatprep.subr.bf16.mxu0 0
      %2003 = vmatpush1.bf16.msra.mxu0 0
      %2004 = vmatprep.subr.bf16.mxu0 0
      %2005 = vmatpush1.bf16.msra.mxu0 0
      %2006 = vmatprep.subr.bf16.mxu0 0
      %2007 = vmatpush1.bf16.msra.mxu0 0
      %2008 = vmatprep.subr.bf16.mxu0 0
      %2009 = vmatpush1.bf16.msra.mxu0 0
      %2010 = vmatprep.subr.bf16.mxu0 0
      %2011 = vmatpush1.bf16.msra.mxu0 %v1992
      %2012 = vmatprep.subr.bf16.mxu0 0
      %2013 = vmatpush1.bf16.msra.mxu0 %v1991
      %2014 = vmatprep.subr.bf16.mxu0 0
      %2015 = vmatpush2.bf16.msra.mxu0 0
      %2016 = vmatprep.subr.bf16.mxu0 0
      %2017 = vmatpush2.bf16.msra.mxu0 0
      %2018 = vmatprep.subr.bf16.mxu0 0
      %2019 = vmatpush2.bf16.msra.mxu0 0
      %2020 = vmatprep.subr.bf16.mxu0 0
      %2021 = vmatpush2.bf16.msra.mxu0 0
      %2022 = vmatprep.subr.bf16.mxu0 0
      %2023 = vmatpush2.bf16.msra.mxu0 0
      %2024 = vmatprep.subr.bf16.mxu0 0
      %2025 = vmatpush2.bf16.msra.mxu0 0
      %2026 = vmatprep.subr.bf16.mxu0 0
      %2027 = vmatpush2.bf16.msra.mxu0 0
      %2028 = vmatprep.subr.bf16.mxu0 0
      %2029 = vmatpush2.bf16.msra.mxu0 0
      %2030 = vmatprep.mubr.bf16.mxu0 0
      %2031 = vmatmul.mubr.bf16.gmra.mxu0 %v1996
      %v2032 = vpop.f32.mrf.mxu0
      %v2033 = vadd.f32 %v1981, %v2032
      %v2034 = vpop.f32.mrf.mxu0
      %v2035 = vpop.f32.mrf.mxu0
      %v2036 = vpop.f32.mrf.mxu0
      %2037 = vdwg.mxu0
      %2038 = vst [vmem:[#allocation17] sm:$0xff] %v2033
    $region69: #{tpu_custom_call.1} parent=1 // pred_fallthru
      _
    // Predicated region
    $region70: #{tpu_custom_call.1} parent=1 // pred_check
      _
    $region71: #{tpu_custom_call.1} parent=1 // pred_check_branch
      %2040 = sbr.rel (0) target = $region73
    $region72: #{tpu_custom_call.1} parent=1 // pred_region
      %s2042 = ssub.s32 128, 128
      %2043 = vsyncadd [#allocation8], %s2042
      %s2045 = sshll.u32 [#allocation17], 4
      %s2046 = int_to_ptr.vmem [resolvable:$true] %s2045
      %2048 = dma.vmem_to_hbm [thread:$0]  %s2046, 128, %s9, [#allocation8]
    $region73: #{tpu_custom_call.1} parent=1 // pred_fallthru
      _
    // Predicated region
    $region74: #{tpu_custom_call.1} parent=1 // pred_check
      _
    $region75: #{tpu_custom_call.1} parent=1 // pred_check_branch
      %2050 = sbr.rel (0) target = $region77
    $region76: #{tpu_custom_call.1} parent=1 // pred_region
      %2051 = dma.done [#allocation8], 128
    $region77: #{tpu_custom_call.1} parent=1 // pred_fallthru
      _
    %2052 = vsyncpa [#allocation7], 1
    %2053 = vsyncpa [#allocation10], 1
    %2054 = vsyncpa [#allocation13], 1
    %2055 = vsyncpa [#allocation16], 1
    %2056 = vsyncpa [#allocation8], 1

</llo_original>
